<compile_context>
chip_gen: v7x
topology: tpu7x:2x2x1
jax: 0.10.0
libtpu: 0.0.40
codegen_flags: <defaults>
</compile_context>

<pallas_src>
import functools

import numpy as np
import jax
import jax.numpy as jnp
from jax import lax
from jax import image as jax_image
from jax.experimental import pallas as pl
from jax.experimental.pallas import tpu as pltpu


# ----------------------------------------------------------------------------
# Constant-matrix builders (numpy, built once at setup time).
# ----------------------------------------------------------------------------
def _conv_gather_mats(H, W, kh, kw, stride, pad):
    """G[k] of shape (H*W, Ho*Wo): 0/1 matrix such that (C, H*W) @ G[k] is the
    shifted + strided view of the zero-padded input for kernel tap
    k = di*kw + dj (zero rows where the tap falls in the padding)."""
    Ho = (H + 2 * pad - kh) // stride + 1
    Wo = (W + 2 * pad - kw) // stride + 1
    G = np.zeros((kh * kw, H * W, Ho * Wo), dtype=np.float32)
    for di in range(kh):
        for dj in range(kw):
            k = di * kw + dj
            for ho in range(Ho):
                h = ho * stride + di - pad
                if not (0 <= h < H):
                    continue
                for wo in range(Wo):
                    w = wo * stride + dj - pad
                    if 0 <= w < W:
                        G[k, h * W + w, ho * Wo + wo] = 1.0
    return G, Ho, Wo


def _bilinear_matrix(out_size, in_size):
    """1-D interpolation matrix matching F.interpolate(mode='bilinear',
    align_corners=False) along one axis:  out = M @ in."""
    i = np.arange(out_size, dtype=np.float64)
    scale = in_size / out_size
    src = np.clip((i + 0.5) * scale - 0.5, 0.0, None)   # PyTorch clamps <0 to 0
    x0 = np.minimum(np.floor(src).astype(np.int64), in_size - 1)
    x1 = np.minimum(x0 + 1, in_size - 1)
    lam = src - x0
    M = np.zeros((out_size, in_size), dtype=np.float32)
    np.add.at(M, (np.arange(out_size), x0), (1.0 - lam).astype(np.float32))
    np.add.at(M, (np.arange(out_size), x1), lam.astype(np.float32))
    return M


# ----------------------------------------------------------------------------
# Fused Pallas kernel: conv1 -> conv2 -> 1x1 classifier (fg classes only)
# -> bilinear upsample + flatten.  Everything is plain 2-D MXU matmuls.
# ----------------------------------------------------------------------------
def _fcn_kernel(x_ref, g1_ref, w1_ref, g2_ref, w2_ref, wgb_ref, up_ref,
                o_ref, p1_ref, p2_ref, h1_ref, h2_ref, *,
                n, cin, c1, c2, kk1, kk2, np1, np2):
    f32 = jnp.float32
    bf16 = jnp.bfloat16

    # ---- conv1 (3x3, stride 2, pad 1) + bias + ReLU --------------------------
    # one wide lane-dense gather matmul per image, then a single im2col GEMM
    # over all images in the block; bias folded via the trailing ones row.
    p1_ref[kk1 * cin:kk1 * cin + 1, :] = jnp.ones((1, n * np1), f32)
    for b in range(n):
        xb = x_ref[b].astype(bf16)                                     # (cin, HW)
        v = jnp.dot(xb, g1_ref[...], preferred_element_type=f32)       # (cin, kk1*np1)
        for k in range(kk1):
            p1_ref[k * cin:(k + 1) * cin, b * np1:(b + 1) * np1] = (
                v[:, k * np1:(k + 1) * np1])
    h1 = jnp.dot(w1_ref[...], p1_ref[...], preferred_element_type=f32)  # (c1, n*np1)
    h1_ref[...] = jnp.maximum(h1, 0.0).astype(bf16)

    # ---- conv2 (3x3, stride 2, pad 1) + bias + ReLU --------------------------
    p2_ref[kk2 * c1:kk2 * c1 + 1, :] = jnp.ones((1, n * np2), f32)
    for b in range(n):
        hb = h1_ref[:, b * np1:(b + 1) * np1]                           # (c1, np1) bf16
        v = jnp.dot(hb, g2_ref[...], preferred_element_type=f32)        # (c1, kk2*np2)
        for k in range(kk2):
            p2_ref[k * c1:(k + 1) * c1, b * np2:(b + 1) * np2] = (
                v[:, k * np2:(k + 1) * np2])
    h2 = jnp.dot(w2_ref[...], p2_ref[...], preferred_element_type=f32)  # (c2, n*np2)
    h2_ref[0:c2, :] = jnp.maximum(h2, 0.0)
    h2_ref[c2:c2 + 1, :] = jnp.ones((1, n * np2), f32)                  # for bias fold

    # ---- 1x1 classifier (background dropped, bias folded) + bilinear ---------
    # upsample + (c, h, w) flatten: one matmul with kron(Wh, Ww)^T per image.
    for b in range(n):
        logit = jnp.dot(wgb_ref[...], h2_ref[:, b * np2:(b + 1) * np2],
                        preferred_element_type=f32)                     # (K, np2)
        o_ref[b] = jnp.dot(logit, up_ref[...],
                           preferred_element_type=f32).astype(o_ref.dtype)


# ----------------------------------------------------------------------------
# Setup: build all kernel-ready constant operands once.
# ----------------------------------------------------------------------------
def prepare_fcn(params, *, in_hw, img_shape, num_classes):
    H, W = in_hw
    Hout, Wout = img_shape

    w1 = np.asarray(params["w1"], np.float32)          # (C1, Cin, 3, 3)
    b1 = np.asarray(params["b1"], np.float32)
    w2 = np.asarray(params["w2"], np.float32)          # (C2, C1, 3, 3)
    b2 = np.asarray(params["b2"], np.float32)
    wg = np.asarray(params["wg"], np.float32)          # (nc, C2, 1, 1)
    bg = np.asarray(params["bg"], np.float32)
    C1, Cin, kh1, kw1 = w1.shape
    C2, _, kh2, kw2 = w2.shape
    K = num_classes - 1

    G1, Ho1, Wo1 = _conv_gather_mats(H, W, kh1, kw1, stride=2, pad=1)
    G2, Ho2, Wo2 = _conv_gather_mats(Ho1, Wo1, kh2, kw2, stride=2, pad=1)
    P1, P2 = Ho1 * Wo1, Ho2 * Wo2
    kk1, kk2 = kh1 * kw1, kh2 * kw2

    # Taps concatenated along lanes: (x @ Gw)[:, k*P + p] is the tap-k gather.
    G1w = np.transpose(G1, (1, 0, 2)).reshape(H * W, kk1 * P1)
    G2w = np.transpose(G2, (1, 0, 2)).reshape(P1, kk2 * P2)

    # im2col weights; patch-row layout = (k*Cin + cin); bias = last column.
    W1cat = np.concatenate(
        [w1.reshape(C1, Cin, kk1).transpose(0, 2, 1).reshape(C1, kk1 * Cin),
         b1.reshape(C1, 1)], axis=1)
    W2cat = np.concatenate(
        [w2.reshape(C2, C1, kk2).transpose(0, 2, 1).reshape(C2, kk2 * C1),
         b2.reshape(C2, 1)], axis=1)
    # 1x1 classifier with the background class dropped and bias folded.
    WGB = np.concatenate([wg[1:, :, 0, 0], bg[1:].reshape(K, 1)], axis=1)

    Wh = _bilinear_matrix(Hout, Ho2)                    # (Hout, Hf)
    Ww = _bilinear_matrix(Wout, Wo2)                    # (Wout, Wf)
    UpT = np.ascontiguousarray(np.kron(Wh, Ww).T)       # (P2, Hout*Wout)

    return dict(
        g1=jnp.asarray(G1w, jnp.bfloat16),              # exact 0/1 values
        w1=jnp.asarray(W1cat, jnp.float32),
        g2=jnp.asarray(G2w, jnp.bfloat16),
        w2=jnp.asarray(W2cat, jnp.float32),
        wgb=jnp.asarray(WGB, jnp.float32),
        up=jnp.asarray(UpT, jnp.float32),
        dims=dict(cin=Cin, c1=C1, c2=C2, kk1=kk1, kk2=kk2,
                  np1=P1, np2=P2, K=K, hw=H * W, hwout=Hout * Wout),
    )


# ----------------------------------------------------------------------------
# Grid sizing: whole batch per step on 1-core chips, 2 parallel steps on
# 2-TensorCore chips (v7x / megacore).
# ----------------------------------------------------------------------------
def _num_parallel_groups(batch):
    try:
        kind = jax.devices()[0].device_kind.lower()
    except Exception:
        kind = ""
    two_core = any(t in kind for t in ("v7", "7x", "v4", "v5p"))
    if two_core and batch >= 2 and batch % 2 == 0:
        return 2
    return 1


# ----------------------------------------------------------------------------
# Forward: one pallas_call, one free reshape on input and output.
# ----------------------------------------------------------------------------
def fcn_forward(x, consts):
    B, Cin, H, W = x.shape
    d = consts["dims"]
    assert Cin == d["cin"] and H * W == d["hw"]
    kk1, kk2 = d["kk1"], d["kk2"]
    c1, c2, np1, np2 = d["c1"], d["c2"], d["np1"], d["np2"]
    K, HW, HWout = d["K"], d["hw"], d["hwout"]

    groups = _num_parallel_groups(B)
    n = B // groups                                     # images per grid step

    x2 = x.reshape(B, Cin, HW).astype(jnp.float32)      # contiguous, no copy

    kernel = functools.partial(_fcn_kernel, n=n, cin=Cin, c1=c1, c2=c2,
                               kk1=kk1, kk2=kk2, np1=np1, np2=np2)

    def build(buffered_consts):
        def const_spec(arr):
            kwargs = {}
            if buffered_consts:
                # Constants never change across grid steps -> single buffer.
                kwargs["pipeline_mode"] = pl.Buffered(1)
            return pl.BlockSpec(arr.shape, lambda g: (0,) * arr.ndim, **kwargs)

        return pl.pallas_call(
            kernel,
            out_shape=jax.ShapeDtypeStruct((B, K, HWout), jnp.float32),
            grid=(groups,),
            in_specs=[
                pl.BlockSpec((n, Cin, HW), lambda g: (g, 0, 0)),   # per-group input
                const_spec(consts["g1"]),                          # resident constants
                const_spec(consts["w1"]),
                const_spec(consts["g2"]),
                const_spec(consts["w2"]),
                const_spec(consts["wgb"]),
                const_spec(consts["up"]),
            ],
            out_specs=pl.BlockSpec((n, K, HWout), lambda g: (g, 0, 0)),
            scratch_shapes=[
                pltpu.VMEM((kk1 * Cin + 1, n * np1), jnp.float32),  # patches1 + ones
                pltpu.VMEM((kk2 * c1 + 1, n * np2), jnp.float32),   # patches2 + ones
                pltpu.VMEM((c1, n * np1), jnp.bfloat16),            # h1
                pltpu.VMEM((c2 + 1, n * np2), jnp.float32),         # h2 + ones
            ],
            compiler_params=pltpu.CompilerParams(
                dimension_semantics=("parallel",)),
        )

    args = (x2, consts["g1"], consts["w1"], consts["g2"], consts["w2"],
            consts["wgb"], consts["up"])
    try:
        out = jax.block_until_ready(build(True)(*args))
    except Exception:
        # JAX version without (or rejecting) pl.Buffered: plain BlockSpecs.
        out = build(False)(*args)

    return out.reshape(B, -1)                           # (B, K*Hout*Wout)


# ----------------------------------------------------------------------------
# Pure-JAX (XLA) reference of the same module, for a correctness check.
# The upsample uses jax.image.resize (independent of the kernel's matrices).
# ----------------------------------------------------------------------------
def fcn_reference(x, params, img_shape):
    hp = lax.Precision.HIGHEST
    dn = ("NCHW", "OIHW", "NCHW")
    h = lax.conv_general_dilated(x, params["w1"], (2, 2), ((1, 1), (1, 1)),
                                 dimension_numbers=dn, precision=hp)
    h = jnp.maximum(h + params["b1"][None, :, None, None], 0.0)
    h = lax.conv_general_dilated(h, params["w2"], (2, 2), ((1, 1), (1, 1)),
                                 dimension_numbers=dn, precision=hp)
    h = jnp.maximum(h + params["b2"][None, :, None, None], 0.0)
    wg = params["wg"][:, :, 0, 0]
    logits = jnp.einsum("oc,bchw->bohw", wg, h, precision=hp)
    logits = logits + params["bg"][None, :, None, None]
    Hout, Wout = img_shape
    up = jax_image.resize(
        logits, (logits.shape[0], logits.shape[1], Hout, Wout), method="bilinear")
    return up[:, 1:, :, :].reshape(x.shape[0], -1)


# ----------------------------------------------------------------------------
# Deterministic parameter init (shapes implied by the module's __init__).
# ----------------------------------------------------------------------------
def init_params(key, cin, c1, c2, num_classes):
    k1, k2, k3, k4, k5, k6 = jax.random.split(key, 6)
    return {
        "w1": 0.1 * jax.random.normal(k1, (c1, cin, 3, 3), jnp.float32),
        "b1": 0.1 * jax.random.normal(k2, (c1,), jnp.float32),
        "w2": 0.1 * jax.random.normal(k3, (c2, c1, 3, 3), jnp.float32),
        "b2": 0.1 * jax.random.normal(k4, (c2,), jnp.float32),
        "wg": 0.1 * jax.random.normal(k5, (num_classes, c2, 1, 1), jnp.float32),
        "bg": 0.1 * jax.random.normal(k6, (num_classes,), jnp.float32),
    }


if __name__ == "__main__":
    key = jax.random.PRNGKey(0)
    kx, kp = jax.random.split(key)

    B, Cin, H, W = 2, 4, 16, 16
    num_classes = 3
    img_shape = (H, W)

    x = jax.random.normal(kx, (B, Cin, H, W), jnp.float32)
    params = init_params(kp, Cin, 8, 16, num_classes)

    consts = prepare_fcn(params, in_hw=(H, W), img_shape=img_shape,
                         num_classes=num_classes)

    out = fcn_forward(x, consts)
    out = jax.block_until_ready(out)

    expected_shape = (B, (num_classes - 1) * img_shape[0] * img_shape[1])
    assert out.shape == expected_shape, (out.shape, expected_shape)
    assert bool(jnp.all(jnp.isfinite(out)))

    ref = fcn_reference(x, params, img_shape)
    max_err = float(jnp.max(jnp.abs(out - ref)))
    # bf16 gather inputs / MXU-default-precision weight matmuls vs. the f32
    # HIGHEST-precision reference: expected max error ~1e-3; 5e-3 still flags
    # any structural bug (wrong tap / padding / interpolation) immediately.
    assert bool(jnp.allclose(out, ref, rtol=5e-3, atol=5e-3)), ("max abs err", max_err)

    print("KERNEL_OK")
</pallas_src>

<mosaic_0001>
module attributes {stable_mosaic.version = 11 : i64} {
  func.func @_fcn_kernel(%arg0: i32, %arg1: memref<2x4x256xf32, #tpu.memory_space<vmem>>, %arg2: memref<256x576xbf16, #tpu.memory_space<vmem>>, %arg3: memref<8x37xf32, #tpu.memory_space<vmem>>, %arg4: memref<64x144xbf16, #tpu.memory_space<vmem>>, %arg5: memref<16x73xf32, #tpu.memory_space<vmem>>, %arg6: memref<2x17xf32, #tpu.memory_space<vmem>>, %arg7: memref<16x256xf32, #tpu.memory_space<vmem>>, %arg8: memref<2x2x256xf32, #tpu.memory_space<vmem>>, %arg9: memref<37x128xf32, #tpu.memory_space<vmem>>, %arg10: memref<73x32xf32, #tpu.memory_space<vmem>>, %arg11: memref<8x128xbf16, #tpu.memory_space<vmem>>, %arg12: memref<17x32xf32, #tpu.memory_space<vmem>>) attributes {dimension_semantics = [#tpu.dimension_semantics<parallel>], iteration_bounds = array<i64: 1>, scalar_prefetch = 0 : i64, scratch_operands = 4 : i64, tpu.core_type = #tpu.core_type<tc>, window_params = [{transform_indices = @transform_0, window_bounds = array<i64: 2, 4, 256>}, {pipeline_mode = #tpu.pipeline_mode<synchronous>, transform_indices = @transform_1, window_bounds = array<i64: 256, 576>}, {pipeline_mode = #tpu.pipeline_mode<synchronous>, transform_indices = @transform_2, window_bounds = array<i64: 8, 37>}, {pipeline_mode = #tpu.pipeline_mode<synchronous>, transform_indices = @transform_3, window_bounds = array<i64: 64, 144>}, {pipeline_mode = #tpu.pipeline_mode<synchronous>, transform_indices = @transform_4, window_bounds = array<i64: 16, 73>}, {pipeline_mode = #tpu.pipeline_mode<synchronous>, transform_indices = @transform_5, window_bounds = array<i64: 2, 17>}, {pipeline_mode = #tpu.pipeline_mode<synchronous>, transform_indices = @transform_6, window_bounds = array<i64: 16, 256>}, {transform_indices = @transform_7, window_bounds = array<i64: 2, 2, 256>}]} {
    %cst = arith.constant 1.000000e+00 : f32
    %0 = vector.broadcast %cst : f32 to vector<1x128xf32>
    %c36 = arith.constant 36 : index
    %c0 = arith.constant 0 : index
    %1 = vector.load %arg9[%c36, %c0] : memref<37x128xf32, #tpu.memory_space<vmem>>, vector<1x128xf32>
    tpu.vector_store %arg9[%c36, %c0], %0 {strides = array<i32>} : memref<37x128xf32, #tpu.memory_space<vmem>>, vector<1x128xf32>,
    %c0_0 = arith.constant 0 : index
    %c0_1 = arith.constant 0 : index
    %c0_2 = arith.constant 0 : index
    %2 = vector.load %arg1[%c0_0, %c0_1, %c0_2] : memref<2x4x256xf32, #tpu.memory_space<vmem>>, vector<1x4x256xf32>
    %3 = vector.shape_cast %2 : vector<1x4x256xf32> to vector<4x256xf32>
    %4 = arith.truncf %3 : vector<4x256xf32> to vector<4x256xbf16>
    %c0_3 = arith.constant 0 : index
    %c0_4 = arith.constant 0 : index
    %5 = vector.load %arg2[%c0_3, %c0_4] : memref<256x576xbf16, #tpu.memory_space<vmem>>, vector<256x576xbf16>
    %cst_5 = arith.constant dense<0.000000e+00> : vector<4x576xf32>
    %6 = tpu.matmul %4, %5, %cst_5 {dimension_numbers = #tpu.dot_dimension_numbers<[1], [0], [0], [1], [0, 0, 1, 1], [], []>} : vector<4x256xbf16>, vector<256x576xbf16>, vector<4x576xf32> -> vector<4x576xf32>
    %7 = vector.extract_strided_slice %6 {offsets = [0, 0], sizes = [4, 64], strides = [1, 1]} : vector<4x576xf32> to vector<4x64xf32>
    %c0_6 = arith.constant 0 : index
    %c0_7 = arith.constant 0 : index
    %8 = vector.load %arg9[%c0_6, %c0_7] : memref<37x128xf32, #tpu.memory_space<vmem>>, vector<4x64xf32>
    tpu.vector_store %arg9[%c0_6, %c0_7], %7 {strides = array<i32>} : memref<37x128xf32, #tpu.memory_space<vmem>>, vector<4x64xf32>,
    %9 = vector.extract_strided_slice %6 {offsets = [0, 64], sizes = [4, 64], strides = [1, 1]} : vector<4x576xf32> to vector<4x64xf32>
    %c4 = arith.constant 4 : index
    %c0_8 = arith.constant 0 : index
    %10 = vector.load %arg9[%c4, %c0_8] : memref<37x128xf32, #tpu.memory_space<vmem>>, vector<4x64xf32>
    tpu.vector_store %arg9[%c4, %c0_8], %9 {strides = array<i32>} : memref<37x128xf32, #tpu.memory_space<vmem>>, vector<4x64xf32>,
    %11 = vector.extract_strided_slice %6 {offsets = [0, 128], sizes = [4, 64], strides = [1, 1]} : vector<4x576xf32> to vector<4x64xf32>
    %c8 = arith.constant 8 : index
    %c0_9 = arith.constant 0 : index
    %12 = vector.load %arg9[%c8, %c0_9] : memref<37x128xf32, #tpu.memory_space<vmem>>, vector<4x64xf32>
    tpu.vector_store %arg9[%c8, %c0_9], %11 {strides = array<i32>} : memref<37x128xf32, #tpu.memory_space<vmem>>, vector<4x64xf32>,
    %13 = vector.extract_strided_slice %6 {offsets = [0, 192], sizes = [4, 64], strides = [1, 1]} : vector<4x576xf32> to vector<4x64xf32>
    %c12 = arith.constant 12 : index
    %c0_10 = arith.constant 0 : index
    %14 = vector.load %arg9[%c12, %c0_10] : memref<37x128xf32, #tpu.memory_space<vmem>>, vector<4x64xf32>
    tpu.vector_store %arg9[%c12, %c0_10], %13 {strides = array<i32>} : memref<37x128xf32, #tpu.memory_space<vmem>>, vector<4x64xf32>,
    %15 = vector.extract_strided_slice %6 {offsets = [0, 256], sizes = [4, 64], strides = [1, 1]} : vector<4x576xf32> to vector<4x64xf32>
    %c16 = arith.constant 16 : index
    %c0_11 = arith.constant 0 : index
    %16 = vector.load %arg9[%c16, %c0_11] : memref<37x128xf32, #tpu.memory_space<vmem>>, vector<4x64xf32>
    tpu.vector_store %arg9[%c16, %c0_11], %15 {strides = array<i32>} : memref<37x128xf32, #tpu.memory_space<vmem>>, vector<4x64xf32>,
    %17 = vector.extract_strided_slice %6 {offsets = [0, 320], sizes = [4, 64], strides = [1, 1]} : vector<4x576xf32> to vector<4x64xf32>
    %c20 = arith.constant 20 : index
    %c0_12 = arith.constant 0 : index
    %18 = vector.load %arg9[%c20, %c0_12] : memref<37x128xf32, #tpu.memory_space<vmem>>, vector<4x64xf32>
    tpu.vector_store %arg9[%c20, %c0_12], %17 {strides = array<i32>} : memref<37x128xf32, #tpu.memory_space<vmem>>, vector<4x64xf32>,
    %19 = vector.extract_strided_slice %6 {offsets = [0, 384], sizes = [4, 64], strides = [1, 1]} : vector<4x576xf32> to vector<4x64xf32>
    %c24 = arith.constant 24 : index
    %c0_13 = arith.constant 0 : index
    %20 = vector.load %arg9[%c24, %c0_13] : memref<37x128xf32, #tpu.memory_space<vmem>>, vector<4x64xf32>
    tpu.vector_store %arg9[%c24, %c0_13], %19 {strides = array<i32>} : memref<37x128xf32, #tpu.memory_space<vmem>>, vector<4x64xf32>,
    %21 = vector.extract_strided_slice %6 {offsets = [0, 448], sizes = [4, 64], strides = [1, 1]} : vector<4x576xf32> to vector<4x64xf32>
    %c28 = arith.constant 28 : index
    %c0_14 = arith.constant 0 : index
    %22 = vector.load %arg9[%c28, %c0_14] : memref<37x128xf32, #tpu.memory_space<vmem>>, vector<4x64xf32>
    tpu.vector_store %arg9[%c28, %c0_14], %21 {strides = array<i32>} : memref<37x128xf32, #tpu.memory_space<vmem>>, vector<4x64xf32>,
    %23 = vector.extract_strided_slice %6 {offsets = [0, 512], sizes = [4, 64], strides = [1, 1]} : vector<4x576xf32> to vector<4x64xf32>
    %c32 = arith.constant 32 : index
    %c0_15 = arith.constant 0 : index
    %24 = vector.load %arg9[%c32, %c0_15] : memref<37x128xf32, #tpu.memory_space<vmem>>, vector<4x64xf32>
    tpu.vector_store %arg9[%c32, %c0_15], %23 {strides = array<i32>} : memref<37x128xf32, #tpu.memory_space<vmem>>, vector<4x64xf32>,
    %c1 = arith.constant 1 : index
    %c0_16 = arith.constant 0 : index
    %c0_17 = arith.constant 0 : index
    %25 = vector.load %arg1[%c1, %c0_16, %c0_17] : memref<2x4x256xf32, #tpu.memory_space<vmem>>, vector<1x4x256xf32>
    %26 = vector.shape_cast %25 : vector<1x4x256xf32> to vector<4x256xf32>
    %27 = arith.truncf %26 : vector<4x256xf32> to vector<4x256xbf16>
    %c0_18 = arith.constant 0 : index
    %c0_19 = arith.constant 0 : index
    %28 = vector.load %arg2[%c0_18, %c0_19] : memref<256x576xbf16, #tpu.memory_space<vmem>>, vector<256x576xbf16>
    %cst_20 = arith.constant dense<0.000000e+00> : vector<4x576xf32>
    %29 = tpu.matmul %27, %28, %cst_20 {dimension_numbers = #tpu.dot_dimension_numbers<[1], [0], [0], [1], [0, 0, 1, 1], [], []>} : vector<4x256xbf16>, vector<256x576xbf16>, vector<4x576xf32> -> vector<4x576xf32>
    %30 = vector.extract_strided_slice %29 {offsets = [0, 0], sizes = [4, 64], strides = [1, 1]} : vector<4x576xf32> to vector<4x64xf32>
    %c0_21 = arith.constant 0 : index
    %c64 = arith.constant 64 : index
    %31 = vector.load %arg9[%c0_21, %c64] : memref<37x128xf32, #tpu.memory_space<vmem>>, vector<4x64xf32>
    tpu.vector_store %arg9[%c0_21, %c64], %30 {strides = array<i32>} : memref<37x128xf32, #tpu.memory_space<vmem>>, vector<4x64xf32>,
    %32 = vector.extract_strided_slice %29 {offsets = [0, 64], sizes = [4, 64], strides = [1, 1]} : vector<4x576xf32> to vector<4x64xf32>
    %c4_22 = arith.constant 4 : index
    %c64_23 = arith.constant 64 : index
    %33 = vector.load %arg9[%c4_22, %c64_23] : memref<37x128xf32, #tpu.memory_space<vmem>>, vector<4x64xf32>
    tpu.vector_store %arg9[%c4_22, %c64_23], %32 {strides = array<i32>} : memref<37x128xf32, #tpu.memory_space<vmem>>, vector<4x64xf32>,
    %34 = vector.extract_strided_slice %29 {offsets = [0, 128], sizes = [4, 64], strides = [1, 1]} : vector<4x576xf32> to vector<4x64xf32>
    %c8_24 = arith.constant 8 : index
    %c64_25 = arith.constant 64 : index
    %35 = vector.load %arg9[%c8_24, %c64_25] : memref<37x128xf32, #tpu.memory_space<vmem>>, vector<4x64xf32>
    tpu.vector_store %arg9[%c8_24, %c64_25], %34 {strides = array<i32>} : memref<37x128xf32, #tpu.memory_space<vmem>>, vector<4x64xf32>,
    %36 = vector.extract_strided_slice %29 {offsets = [0, 192], sizes = [4, 64], strides = [1, 1]} : vector<4x576xf32> to vector<4x64xf32>
    %c12_26 = arith.constant 12 : index
    %c64_27 = arith.constant 64 : index
    %37 = vector.load %arg9[%c12_26, %c64_27] : memref<37x128xf32, #tpu.memory_space<vmem>>, vector<4x64xf32>
    tpu.vector_store %arg9[%c12_26, %c64_27], %36 {strides = array<i32>} : memref<37x128xf32, #tpu.memory_space<vmem>>, vector<4x64xf32>,
    %38 = vector.extract_strided_slice %29 {offsets = [0, 256], sizes = [4, 64], strides = [1, 1]} : vector<4x576xf32> to vector<4x64xf32>
    %c16_28 = arith.constant 16 : index
    %c64_29 = arith.constant 64 : index
    %39 = vector.load %arg9[%c16_28, %c64_29] : memref<37x128xf32, #tpu.memory_space<vmem>>, vector<4x64xf32>
    tpu.vector_store %arg9[%c16_28, %c64_29], %38 {strides = array<i32>} : memref<37x128xf32, #tpu.memory_space<vmem>>, vector<4x64xf32>,
    %40 = vector.extract_strided_slice %29 {offsets = [0, 320], sizes = [4, 64], strides = [1, 1]} : vector<4x576xf32> to vector<4x64xf32>
    %c20_30 = arith.constant 20 : index
    %c64_31 = arith.constant 64 : index
    %41 = vector.load %arg9[%c20_30, %c64_31] : memref<37x128xf32, #tpu.memory_space<vmem>>, vector<4x64xf32>
    tpu.vector_store %arg9[%c20_30, %c64_31], %40 {strides = array<i32>} : memref<37x128xf32, #tpu.memory_space<vmem>>, vector<4x64xf32>,
    %42 = vector.extract_strided_slice %29 {offsets = [0, 384], sizes = [4, 64], strides = [1, 1]} : vector<4x576xf32> to vector<4x64xf32>
    %c24_32 = arith.constant 24 : index
    %c64_33 = arith.constant 64 : index
    %43 = vector.load %arg9[%c24_32, %c64_33] : memref<37x128xf32, #tpu.memory_space<vmem>>, vector<4x64xf32>
    tpu.vector_store %arg9[%c24_32, %c64_33], %42 {strides = array<i32>} : memref<37x128xf32, #tpu.memory_space<vmem>>, vector<4x64xf32>,
    %44 = vector.extract_strided_slice %29 {offsets = [0, 448], sizes = [4, 64], strides = [1, 1]} : vector<4x576xf32> to vector<4x64xf32>
    %c28_34 = arith.constant 28 : index
    %c64_35 = arith.constant 64 : index
    %45 = vector.load %arg9[%c28_34, %c64_35] : memref<37x128xf32, #tpu.memory_space<vmem>>, vector<4x64xf32>
    tpu.vector_store %arg9[%c28_34, %c64_35], %44 {strides = array<i32>} : memref<37x128xf32, #tpu.memory_space<vmem>>, vector<4x64xf32>,
    %46 = vector.extract_strided_slice %29 {offsets = [0, 512], sizes = [4, 64], strides = [1, 1]} : vector<4x576xf32> to vector<4x64xf32>
    %c32_36 = arith.constant 32 : index
    %c64_37 = arith.constant 64 : index
    %47 = vector.load %arg9[%c32_36, %c64_37] : memref<37x128xf32, #tpu.memory_space<vmem>>, vector<4x64xf32>
    tpu.vector_store %arg9[%c32_36, %c64_37], %46 {strides = array<i32>} : memref<37x128xf32, #tpu.memory_space<vmem>>, vector<4x64xf32>,
    %c0_38 = arith.constant 0 : index
    %c0_39 = arith.constant 0 : index
    %48 = vector.load %arg3[%c0_38, %c0_39] : memref<8x37xf32, #tpu.memory_space<vmem>>, vector<8x37xf32>
    %c0_40 = arith.constant 0 : index
    %c0_41 = arith.constant 0 : index
    %49 = vector.load %arg9[%c0_40, %c0_41] : memref<37x128xf32, #tpu.memory_space<vmem>>, vector<37x128xf32>
    %cst_42 = arith.constant dense<0.000000e+00> : vector<8x128xf32>
    %50 = tpu.matmul %48, %49, %cst_42 {dimension_numbers = #tpu.dot_dimension_numbers<[1], [0], [0], [1], [0, 0, 1, 1], [], []>} : vector<8x37xf32>, vector<37x128xf32>, vector<8x128xf32> -> vector<8x128xf32>
    %cst_43 = arith.constant 0.000000e+00 : f32
    %51 = vector.broadcast %cst_43 : f32 to vector<8x128xf32>
    %52 = arith.maximumf %50, %51 : vector<8x128xf32>
    %53 = arith.truncf %52 : vector<8x128xf32> to vector<8x128xbf16>
    %c0_44 = arith.constant 0 : index
    %c0_45 = arith.constant 0 : index
    %54 = vector.load %arg11[%c0_44, %c0_45] : memref<8x128xbf16, #tpu.memory_space<vmem>>, vector<8x128xbf16>
    tpu.vector_store %arg11[%c0_44, %c0_45], %53 {strides = array<i32>} : memref<8x128xbf16, #tpu.memory_space<vmem>>, vector<8x128xbf16>,
    %cst_46 = arith.constant 1.000000e+00 : f32
    %55 = vector.broadcast %cst_46 : f32 to vector<1x32xf32>
    %c72 = arith.constant 72 : index
    %c0_47 = arith.constant 0 : index
    %56 = vector.load %arg10[%c72, %c0_47] : memref<73x32xf32, #tpu.memory_space<vmem>>, vector<1x32xf32>
    tpu.vector_store %arg10[%c72, %c0_47], %55 {strides = array<i32>} : memref<73x32xf32, #tpu.memory_space<vmem>>, vector<1x32xf32>,
    %c0_48 = arith.constant 0 : index
    %c0_49 = arith.constant 0 : index
    %57 = vector.load %arg11[%c0_48, %c0_49] : memref<8x128xbf16, #tpu.memory_space<vmem>>, vector<8x64xbf16>
    %c0_50 = arith.constant 0 : index
    %c0_51 = arith.constant 0 : index
    %58 = vector.load %arg4[%c0_50, %c0_51] : memref<64x144xbf16, #tpu.memory_space<vmem>>, vector<64x144xbf16>
    %cst_52 = arith.constant dense<0.000000e+00> : vector<8x144xf32>
    %59 = tpu.matmul %57, %58, %cst_52 {dimension_numbers = #tpu.dot_dimension_numbers<[1], [0], [0], [1], [0, 0, 1, 1], [], []>} : vector<8x64xbf16>, vector<64x144xbf16>, vector<8x144xf32> -> vector<8x144xf32>
    %60 = vector.extract_strided_slice %59 {offsets = [0, 0], sizes = [8, 16], strides = [1, 1]} : vector<8x144xf32> to vector<8x16xf32>
    %c0_53 = arith.constant 0 : index
    %c0_54 = arith.constant 0 : index
    %61 = vector.load %arg10[%c0_53, %c0_54] : memref<73x32xf32, #tpu.memory_space<vmem>>, vector<8x16xf32>
    tpu.vector_store %arg10[%c0_53, %c0_54], %60 {strides = array<i32>} : memref<73x32xf32, #tpu.memory_space<vmem>>, vector<8x16xf32>,
    %62 = vector.extract_strided_slice %59 {offsets = [0, 16], sizes = [8, 16], strides = [1, 1]} : vector<8x144xf32> to vector<8x16xf32>
    %c8_55 = arith.constant 8 : index
    %c0_56 = arith.constant 0 : index
    %63 = vector.load %arg10[%c8_55, %c0_56] : memref<73x32xf32, #tpu.memory_space<vmem>>, vector<8x16xf32>
    tpu.vector_store %arg10[%c8_55, %c0_56], %62 {strides = array<i32>} : memref<73x32xf32, #tpu.memory_space<vmem>>, vector<8x16xf32>,
    %64 = vector.extract_strided_slice %59 {offsets = [0, 32], sizes = [8, 16], strides = [1, 1]} : vector<8x144xf32> to vector<8x16xf32>
    %c16_57 = arith.constant 16 : index
    %c0_58 = arith.constant 0 : index
    %65 = vector.load %arg10[%c16_57, %c0_58] : memref<73x32xf32, #tpu.memory_space<vmem>>, vector<8x16xf32>
    tpu.vector_store %arg10[%c16_57, %c0_58], %64 {strides = array<i32>} : memref<73x32xf32, #tpu.memory_space<vmem>>, vector<8x16xf32>,
    %66 = vector.extract_strided_slice %59 {offsets = [0, 48], sizes = [8, 16], strides = [1, 1]} : vector<8x144xf32> to vector<8x16xf32>
    %c24_59 = arith.constant 24 : index
    %c0_60 = arith.constant 0 : index
    %67 = vector.load %arg10[%c24_59, %c0_60] : memref<73x32xf32, #tpu.memory_space<vmem>>, vector<8x16xf32>
    tpu.vector_store %arg10[%c24_59, %c0_60], %66 {strides = array<i32>} : memref<73x32xf32, #tpu.memory_space<vmem>>, vector<8x16xf32>,
    %68 = vector.extract_strided_slice %59 {offsets = [0, 64], sizes = [8, 16], strides = [1, 1]} : vector<8x144xf32> to vector<8x16xf32>
    %c32_61 = arith.constant 32 : index
    %c0_62 = arith.constant 0 : index
    %69 = vector.load %arg10[%c32_61, %c0_62] : memref<73x32xf32, #tpu.memory_space<vmem>>, vector<8x16xf32>
    tpu.vector_store %arg10[%c32_61, %c0_62], %68 {strides = array<i32>} : memref<73x32xf32, #tpu.memory_space<vmem>>, vector<8x16xf32>,
    %70 = vector.extract_strided_slice %59 {offsets = [0, 80], sizes = [8, 16], strides = [1, 1]} : vector<8x144xf32> to vector<8x16xf32>
    %c40 = arith.constant 40 : index
    %c0_63 = arith.constant 0 : index
    %71 = vector.load %arg10[%c40, %c0_63] : memref<73x32xf32, #tpu.memory_space<vmem>>, vector<8x16xf32>
    tpu.vector_store %arg10[%c40, %c0_63], %70 {strides = array<i32>} : memref<73x32xf32, #tpu.memory_space<vmem>>, vector<8x16xf32>,
    %72 = vector.extract_strided_slice %59 {offsets = [0, 96], sizes = [8, 16], strides = [1, 1]} : vector<8x144xf32> to vector<8x16xf32>
    %c48 = arith.constant 48 : index
    %c0_64 = arith.constant 0 : index
    %73 = vector.load %arg10[%c48, %c0_64] : memref<73x32xf32, #tpu.memory_space<vmem>>, vector<8x16xf32>
    tpu.vector_store %arg10[%c48, %c0_64], %72 {strides = array<i32>} : memref<73x32xf32, #tpu.memory_space<vmem>>, vector<8x16xf32>,
    %74 = vector.extract_strided_slice %59 {offsets = [0, 112], sizes = [8, 16], strides = [1, 1]} : vector<8x144xf32> to vector<8x16xf32>
    %c56 = arith.constant 56 : index
    %c0_65 = arith.constant 0 : index
    %75 = vector.load %arg10[%c56, %c0_65] : memref<73x32xf32, #tpu.memory_space<vmem>>, vector<8x16xf32>
    tpu.vector_store %arg10[%c56, %c0_65], %74 {strides = array<i32>} : memref<73x32xf32, #tpu.memory_space<vmem>>, vector<8x16xf32>,
    %76 = vector.extract_strided_slice %59 {offsets = [0, 128], sizes = [8, 16], strides = [1, 1]} : vector<8x144xf32> to vector<8x16xf32>
    %c64_66 = arith.constant 64 : index
    %c0_67 = arith.constant 0 : index
    %77 = vector.load %arg10[%c64_66, %c0_67] : memref<73x32xf32, #tpu.memory_space<vmem>>, vector<8x16xf32>
    tpu.vector_store %arg10[%c64_66, %c0_67], %76 {strides = array<i32>} : memref<73x32xf32, #tpu.memory_space<vmem>>, vector<8x16xf32>,
    %c0_68 = arith.constant 0 : index
    %c64_69 = arith.constant 64 : index
    %78 = vector.load %arg11[%c0_68, %c64_69] : memref<8x128xbf16, #tpu.memory_space<vmem>>, vector<8x64xbf16>
    %c0_70 = arith.constant 0 : index
    %c0_71 = arith.constant 0 : index
    %79 = vector.load %arg4[%c0_70, %c0_71] : memref<64x144xbf16, #tpu.memory_space<vmem>>, vector<64x144xbf16>
    %cst_72 = arith.constant dense<0.000000e+00> : vector<8x144xf32>
    %80 = tpu.matmul %78, %79, %cst_72 {dimension_numbers = #tpu.dot_dimension_numbers<[1], [0], [0], [1], [0, 0, 1, 1], [], []>} : vector<8x64xbf16>, vector<64x144xbf16>, vector<8x144xf32> -> vector<8x144xf32>
    %81 = vector.extract_strided_slice %80 {offsets = [0, 0], sizes = [8, 16], strides = [1, 1]} : vector<8x144xf32> to vector<8x16xf32>
    %c0_73 = arith.constant 0 : index
    %c16_74 = arith.constant 16 : index
    %82 = vector.load %arg10[%c0_73, %c16_74] : memref<73x32xf32, #tpu.memory_space<vmem>>, vector<8x16xf32>
    tpu.vector_store %arg10[%c0_73, %c16_74], %81 {strides = array<i32>} : memref<73x32xf32, #tpu.memory_space<vmem>>, vector<8x16xf32>,
    %83 = vector.extract_strided_slice %80 {offsets = [0, 16], sizes = [8, 16], strides = [1, 1]} : vector<8x144xf32> to vector<8x16xf32>
    %c8_75 = arith.constant 8 : index
    %c16_76 = arith.constant 16 : index
    %84 = vector.load %arg10[%c8_75, %c16_76] : memref<73x32xf32, #tpu.memory_space<vmem>>, vector<8x16xf32>
    tpu.vector_store %arg10[%c8_75, %c16_76], %83 {strides = array<i32>} : memref<73x32xf32, #tpu.memory_space<vmem>>, vector<8x16xf32>,
    %85 = vector.extract_strided_slice %80 {offsets = [0, 32], sizes = [8, 16], strides = [1, 1]} : vector<8x144xf32> to vector<8x16xf32>
    %c16_77 = arith.constant 16 : index
    %c16_78 = arith.constant 16 : index
    %86 = vector.load %arg10[%c16_77, %c16_78] : memref<73x32xf32, #tpu.memory_space<vmem>>, vector<8x16xf32>
    tpu.vector_store %arg10[%c16_77, %c16_78], %85 {strides = array<i32>} : memref<73x32xf32, #tpu.memory_space<vmem>>, vector<8x16xf32>,
    %87 = vector.extract_strided_slice %80 {offsets = [0, 48], sizes = [8, 16], strides = [1, 1]} : vector<8x144xf32> to vector<8x16xf32>
    %c24_79 = arith.constant 24 : index
    %c16_80 = arith.constant 16 : index
    %88 = vector.load %arg10[%c24_79, %c16_80] : memref<73x32xf32, #tpu.memory_space<vmem>>, vector<8x16xf32>
    tpu.vector_store %arg10[%c24_79, %c16_80], %87 {strides = array<i32>} : memref<73x32xf32, #tpu.memory_space<vmem>>, vector<8x16xf32>,
    %89 = vector.extract_strided_slice %80 {offsets = [0, 64], sizes = [8, 16], strides = [1, 1]} : vector<8x144xf32> to vector<8x16xf32>
    %c32_81 = arith.constant 32 : index
    %c16_82 = arith.constant 16 : index
    %90 = vector.load %arg10[%c32_81, %c16_82] : memref<73x32xf32, #tpu.memory_space<vmem>>, vector<8x16xf32>
    tpu.vector_store %arg10[%c32_81, %c16_82], %89 {strides = array<i32>} : memref<73x32xf32, #tpu.memory_space<vmem>>, vector<8x16xf32>,
    %91 = vector.extract_strided_slice %80 {offsets = [0, 80], sizes = [8, 16], strides = [1, 1]} : vector<8x144xf32> to vector<8x16xf32>
    %c40_83 = arith.constant 40 : index
    %c16_84 = arith.constant 16 : index
    %92 = vector.load %arg10[%c40_83, %c16_84] : memref<73x32xf32, #tpu.memory_space<vmem>>, vector<8x16xf32>
    tpu.vector_store %arg10[%c40_83, %c16_84], %91 {strides = array<i32>} : memref<73x32xf32, #tpu.memory_space<vmem>>, vector<8x16xf32>,
    %93 = vector.extract_strided_slice %80 {offsets = [0, 96], sizes = [8, 16], strides = [1, 1]} : vector<8x144xf32> to vector<8x16xf32>
    %c48_85 = arith.constant 48 : index
    %c16_86 = arith.constant 16 : index
    %94 = vector.load %arg10[%c48_85, %c16_86] : memref<73x32xf32, #tpu.memory_space<vmem>>, vector<8x16xf32>
    tpu.vector_store %arg10[%c48_85, %c16_86], %93 {strides = array<i32>} : memref<73x32xf32, #tpu.memory_space<vmem>>, vector<8x16xf32>,
    %95 = vector.extract_strided_slice %80 {offsets = [0, 112], sizes = [8, 16], strides = [1, 1]} : vector<8x144xf32> to vector<8x16xf32>
    %c56_87 = arith.constant 56 : index
    %c16_88 = arith.constant 16 : index
    %96 = vector.load %arg10[%c56_87, %c16_88] : memref<73x32xf32, #tpu.memory_space<vmem>>, vector<8x16xf32>
    tpu.vector_store %arg10[%c56_87, %c16_88], %95 {strides = array<i32>} : memref<73x32xf32, #tpu.memory_space<vmem>>, vector<8x16xf32>,
    %97 = vector.extract_strided_slice %80 {offsets = [0, 128], sizes = [8, 16], strides = [1, 1]} : vector<8x144xf32> to vector<8x16xf32>
    %c64_89 = arith.constant 64 : index
    %c16_90 = arith.constant 16 : index
    %98 = vector.load %arg10[%c64_89, %c16_90] : memref<73x32xf32, #tpu.memory_space<vmem>>, vector<8x16xf32>
    tpu.vector_store %arg10[%c64_89, %c16_90], %97 {strides = array<i32>} : memref<73x32xf32, #tpu.memory_space<vmem>>, vector<8x16xf32>,
    %c0_91 = arith.constant 0 : index
    %c0_92 = arith.constant 0 : index
    %99 = vector.load %arg5[%c0_91, %c0_92] : memref<16x73xf32, #tpu.memory_space<vmem>>, vector<16x73xf32>
    %c0_93 = arith.constant 0 : index
    %c0_94 = arith.constant 0 : index
    %100 = vector.load %arg10[%c0_93, %c0_94] : memref<73x32xf32, #tpu.memory_space<vmem>>, vector<73x32xf32>
    %cst_95 = arith.constant dense<0.000000e+00> : vector<16x32xf32>
    %101 = tpu.matmul %99, %100, %cst_95 {dimension_numbers = #tpu.dot_dimension_numbers<[1], [0], [0], [1], [0, 0, 1, 1], [], []>} : vector<16x73xf32>, vector<73x32xf32>, vector<16x32xf32> -> vector<16x32xf32>
    %cst_96 = arith.constant 0.000000e+00 : f32
    %102 = vector.broadcast %cst_96 : f32 to vector<16x32xf32>
    %103 = arith.maximumf %101, %102 : vector<16x32xf32>
    %c0_97 = arith.constant 0 : index
    %c0_98 = arith.constant 0 : index
    %104 = vector.load %arg12[%c0_97, %c0_98] : memref<17x32xf32, #tpu.memory_space<vmem>>, vector<16x32xf32>
    tpu.vector_store %arg12[%c0_97, %c0_98], %103 {strides = array<i32>} : memref<17x32xf32, #tpu.memory_space<vmem>>, vector<16x32xf32>,
    %cst_99 = arith.constant 1.000000e+00 : f32
    %105 = vector.broadcast %cst_99 : f32 to vector<1x32xf32>
    %c16_100 = arith.constant 16 : index
    %c0_101 = arith.constant 0 : index
    %106 = vector.load %arg12[%c16_100, %c0_101] : memref<17x32xf32, #tpu.memory_space<vmem>>, vector<1x32xf32>
    tpu.vector_store %arg12[%c16_100, %c0_101], %105 {strides = array<i32>} : memref<17x32xf32, #tpu.memory_space<vmem>>, vector<1x32xf32>,
    %c0_102 = arith.constant 0 : index
    %c0_103 = arith.constant 0 : index
    %107 = vector.load %arg6[%c0_102, %c0_103] : memref<2x17xf32, #tpu.memory_space<vmem>>, vector<2x17xf32>
    %c0_104 = arith.constant 0 : index
    %c0_105 = arith.constant 0 : index
    %108 = vector.load %arg12[%c0_104, %c0_105] : memref<17x32xf32, #tpu.memory_space<vmem>>, vector<17x16xf32>
    %cst_106 = arith.constant dense<0.000000e+00> : vector<2x16xf32>
    %109 = tpu.matmul %107, %108, %cst_106 {dimension_numbers = #tpu.dot_dimension_numbers<[1], [0], [0], [1], [0, 0, 1, 1], [], []>} : vector<2x17xf32>, vector<17x16xf32>, vector<2x16xf32> -> vector<2x16xf32>
    %c0_107 = arith.constant 0 : index
    %c0_108 = arith.constant 0 : index
    %110 = vector.load %arg7[%c0_107, %c0_108] : memref<16x256xf32, #tpu.memory_space<vmem>>, vector<16x256xf32>
    %cst_109 = arith.constant dense<0.000000e+00> : vector<2x256xf32>
    %111 = tpu.matmul %109, %110, %cst_109 {dimension_numbers = #tpu.dot_dimension_numbers<[1], [0], [0], [1], [0, 0, 1, 1], [], []>} : vector<2x16xf32>, vector<16x256xf32>, vector<2x256xf32> -> vector<2x256xf32>
    %c0_110 = arith.constant 0 : index
    %c0_111 = arith.constant 0 : index
    %c0_112 = arith.constant 0 : index
    %112 = vector.load %arg8[%c0_110, %c0_111, %c0_112] : memref<2x2x256xf32, #tpu.memory_space<vmem>>, vector<1x2x256xf32>
    %113 = vector.shape_cast %112 : vector<1x2x256xf32> to vector<2x256xf32>
    %114 = vector.shape_cast %111 : vector<2x256xf32> to vector<1x2x256xf32>
    tpu.vector_store %arg8[%c0_110, %c0_111, %c0_112], %114 {strides = array<i32>} : memref<2x2x256xf32, #tpu.memory_space<vmem>>, vector<1x2x256xf32>,
    %c0_113 = arith.constant 0 : index
    %c0_114 = arith.constant 0 : index
    %115 = vector.load %arg6[%c0_113, %c0_114] : memref<2x17xf32, #tpu.memory_space<vmem>>, vector<2x17xf32>
    %c0_115 = arith.constant 0 : index
    %c16_116 = arith.constant 16 : index
    %116 = vector.load %arg12[%c0_115, %c16_116] : memref<17x32xf32, #tpu.memory_space<vmem>>, vector<17x16xf32>
    %cst_117 = arith.constant dense<0.000000e+00> : vector<2x16xf32>
    %117 = tpu.matmul %115, %116, %cst_117 {dimension_numbers = #tpu.dot_dimension_numbers<[1], [0], [0], [1], [0, 0, 1, 1], [], []>} : vector<2x17xf32>, vector<17x16xf32>, vector<2x16xf32> -> vector<2x16xf32>
    %c0_118 = arith.constant 0 : index
    %c0_119 = arith.constant 0 : index
    %118 = vector.load %arg7[%c0_118, %c0_119] : memref<16x256xf32, #tpu.memory_space<vmem>>, vector<16x256xf32>
    %cst_120 = arith.constant dense<0.000000e+00> : vector<2x256xf32>
    %119 = tpu.matmul %117, %118, %cst_120 {dimension_numbers = #tpu.dot_dimension_numbers<[1], [0], [0], [1], [0, 0, 1, 1], [], []>} : vector<2x16xf32>, vector<16x256xf32>, vector<2x256xf32> -> vector<2x256xf32>
    %c1_121 = arith.constant 1 : index
    %c0_122 = arith.constant 0 : index
    %c0_123 = arith.constant 0 : index
    %120 = vector.load %arg8[%c1_121, %c0_122, %c0_123] : memref<2x2x256xf32, #tpu.memory_space<vmem>>, vector<1x2x256xf32>
    %121 = vector.shape_cast %120 : vector<1x2x256xf32> to vector<2x256xf32>
    %122 = vector.shape_cast %119 : vector<2x256xf32> to vector<1x2x256xf32>
    tpu.vector_store %arg8[%c1_121, %c0_122, %c0_123], %122 {strides = array<i32>} : memref<2x2x256xf32, #tpu.memory_space<vmem>>, vector<1x2x256xf32>,
    return
  }
  func.func @transform_0(%arg0: i32) -> (i32, i32, i32) {
    %c0_i32 = arith.constant 0 : i32
    %c0_i32_0 = arith.constant 0 : i32
    %c0_i32_1 = arith.constant 0 : i32
    return %arg0, %c0_i32, %c0_i32_0 : i32, i32, i32
  }
  func.func @transform_1(%arg0: i32) -> (i32, i32) {
    %c0_i32 = arith.constant 0 : i32
    %c0_i32_0 = arith.constant 0 : i32
    %c0_i32_1 = arith.constant 0 : i32
    return %c0_i32, %c0_i32_0 : i32, i32
  }
  func.func @transform_2(%arg0: i32) -> (i32, i32) {
    %c0_i32 = arith.constant 0 : i32
    %c0_i32_0 = arith.constant 0 : i32
    %c0_i32_1 = arith.constant 0 : i32
    return %c0_i32, %c0_i32_0 : i32, i32
  }
  func.func @transform_3(%arg0: i32) -> (i32, i32) {
    %c0_i32 = arith.constant 0 : i32
    %c0_i32_0 = arith.constant 0 : i32
    %c0_i32_1 = arith.constant 0 : i32
    return %c0_i32, %c0_i32_0 : i32, i32
  }
  func.func @transform_4(%arg0: i32) -> (i32, i32) {
    %c0_i32 = arith.constant 0 : i32
    %c0_i32_0 = arith.constant 0 : i32
    %c0_i32_1 = arith.constant 0 : i32
    return %c0_i32, %c0_i32_0 : i32, i32
  }
  func.func @transform_5(%arg0: i32) -> (i32, i32) {
    %c0_i32 = arith.constant 0 : i32
    %c0_i32_0 = arith.constant 0 : i32
    %c0_i32_1 = arith.constant 0 : i32
    return %c0_i32, %c0_i32_0 : i32, i32
  }
  func.func @transform_6(%arg0: i32) -> (i32, i32) {
    %c0_i32 = arith.constant 0 : i32
    %c0_i32_0 = arith.constant 0 : i32
    %c0_i32_1 = arith.constant 0 : i32
    return %c0_i32, %c0_i32_0 : i32, i32
  }
  func.func @transform_7(%arg0: i32) -> (i32, i32, i32) {
    %c0_i32 = arith.constant 0 : i32
    %c0_i32_0 = arith.constant 0 : i32
    %c0_i32_1 = arith.constant 0 : i32
    return %arg0, %c0_i32, %c0_i32_0 : i32, i32, i32
  }
}

module attributes {stable_mosaic.version = 11 : i64} {
  func.func @_fcn_kernel(%arg0: i32, %arg1: memref<2x4x256xf32, #tpu.memory_space<vmem>>, %arg2: memref<256x576xbf16, #tpu.memory_space<vmem>>, %arg3: memref<8x37xf32, #tpu.memory_space<vmem>>, %arg4: memref<64x144xbf16, #tpu.memory_space<vmem>>, %arg5: memref<16x73xf32, #tpu.memory_space<vmem>>, %arg6: memref<2x17xf32, #tpu.memory_space<vmem>>, %arg7: memref<16x256xf32, #tpu.memory_space<vmem>>, %arg8: memref<2x2x256xf32, #tpu.memory_space<vmem>>, %arg9: memref<37x128xf32, #tpu.memory_space<vmem>>, %arg10: memref<73x32xf32, #tpu.memory_space<vmem>>, %arg11: memref<8x128xbf16, #tpu.memory_space<vmem>>, %arg12: memref<17x32xf32, #tpu.memory_space<vmem>>) attributes {dimension_semantics = [#tpu.dimension_semantics<parallel>], iteration_bounds = array<i64: 1>, scalar_prefetch = 0 : i64, scratch_operands = 4 : i64, tpu.core_type = #tpu.core_type<tc>, window_params = [{transform_indices = @transform_0, window_bounds = array<i64: 2, 4, 256>}, {pipeline_mode = #tpu.pipeline_mode<synchronous>, transform_indices = @transform_1, window_bounds = array<i64: 256, 576>}, {pipeline_mode = #tpu.pipeline_mode<synchronous>, transform_indices = @transform_2, window_bounds = array<i64: 8, 37>}, {pipeline_mode = #tpu.pipeline_mode<synchronous>, transform_indices = @transform_3, window_bounds = array<i64: 64, 144>}, {pipeline_mode = #tpu.pipeline_mode<synchronous>, transform_indices = @transform_4, window_bounds = array<i64: 16, 73>}, {pipeline_mode = #tpu.pipeline_mode<synchronous>, transform_indices = @transform_5, window_bounds = array<i64: 2, 17>}, {pipeline_mode = #tpu.pipeline_mode<synchronous>, transform_indices = @transform_6, window_bounds = array<i64: 16, 256>}, {transform_indices = @transform_7, window_bounds = array<i64: 2, 2, 256>}]} {
    %cst = arith.constant 1.000000e+00 : f32
    %0 = vector.broadcast %cst : f32 to vector<1x128xf32>
    %c36 = arith.constant 36 : index
    %c0 = arith.constant 0 : index
    %1 = vector.load %arg9[%c36, %c0] : memref<37x128xf32, #tpu.memory_space<vmem>>, vector<1x128xf32>
    tpu.vector_store %arg9[%c36, %c0], %0 {strides = array<i32>} : memref<37x128xf32, #tpu.memory_space<vmem>>, vector<1x128xf32>,
    %c0_0 = arith.constant 0 : index
    %c0_1 = arith.constant 0 : index
    %c0_2 = arith.constant 0 : index
    %2 = vector.load %arg1[%c0_0, %c0_1, %c0_2] : memref<2x4x256xf32, #tpu.memory_space<vmem>>, vector<1x4x256xf32>
    %3 = vector.shape_cast %2 : vector<1x4x256xf32> to vector<4x256xf32>
    %4 = arith.truncf %3 : vector<4x256xf32> to vector<4x256xbf16>
    %c0_3 = arith.constant 0 : index
    %c0_4 = arith.constant 0 : index
    %5 = vector.load %arg2[%c0_3, %c0_4] : memref<256x576xbf16, #tpu.memory_space<vmem>>, vector<256x576xbf16>
    %cst_5 = arith.constant dense<0.000000e+00> : vector<4x576xf32>
    %6 = tpu.matmul %4, %5, %cst_5 {dimension_numbers = #tpu.dot_dimension_numbers<[1], [0], [0], [1], [0, 0, 1, 1], [], []>} : vector<4x256xbf16>, vector<256x576xbf16>, vector<4x576xf32> -> vector<4x576xf32>
    %7 = vector.extract_strided_slice %6 {offsets = [0, 0], sizes = [4, 64], strides = [1, 1]} : vector<4x576xf32> to vector<4x64xf32>
    %c0_6 = arith.constant 0 : index
    %c0_7 = arith.constant 0 : index
    %8 = vector.load %arg9[%c0_6, %c0_7] : memref<37x128xf32, #tpu.memory_space<vmem>>, vector<4x64xf32>
    tpu.vector_store %arg9[%c0_6, %c0_7], %7 {strides = array<i32>} : memref<37x128xf32, #tpu.memory_space<vmem>>, vector<4x64xf32>,
    %9 = vector.extract_strided_slice %6 {offsets = [0, 64], sizes = [4, 64], strides = [1, 1]} : vector<4x576xf32> to vector<4x64xf32>
    %c4 = arith.constant 4 : index
    %c0_8 = arith.constant 0 : index
    %10 = vector.load %arg9[%c4, %c0_8] : memref<37x128xf32, #tpu.memory_space<vmem>>, vector<4x64xf32>
    tpu.vector_store %arg9[%c4, %c0_8], %9 {strides = array<i32>} : memref<37x128xf32, #tpu.memory_space<vmem>>, vector<4x64xf32>,
    %11 = vector.extract_strided_slice %6 {offsets = [0, 128], sizes = [4, 64], strides = [1, 1]} : vector<4x576xf32> to vector<4x64xf32>
    %c8 = arith.constant 8 : index
    %c0_9 = arith.constant 0 : index
    %12 = vector.load %arg9[%c8, %c0_9] : memref<37x128xf32, #tpu.memory_space<vmem>>, vector<4x64xf32>
    tpu.vector_store %arg9[%c8, %c0_9], %11 {strides = array<i32>} : memref<37x128xf32, #tpu.memory_space<vmem>>, vector<4x64xf32>,
    %13 = vector.extract_strided_slice %6 {offsets = [0, 192], sizes = [4, 64], strides = [1, 1]} : vector<4x576xf32> to vector<4x64xf32>
    %c12 = arith.constant 12 : index
    %c0_10 = arith.constant 0 : index
    %14 = vector.load %arg9[%c12, %c0_10] : memref<37x128xf32, #tpu.memory_space<vmem>>, vector<4x64xf32>
    tpu.vector_store %arg9[%c12, %c0_10], %13 {strides = array<i32>} : memref<37x128xf32, #tpu.memory_space<vmem>>, vector<4x64xf32>,
    %15 = vector.extract_strided_slice %6 {offsets = [0, 256], sizes = [4, 64], strides = [1, 1]} : vector<4x576xf32> to vector<4x64xf32>
    %c16 = arith.constant 16 : index
    %c0_11 = arith.constant 0 : index
    %16 = vector.load %arg9[%c16, %c0_11] : memref<37x128xf32, #tpu.memory_space<vmem>>, vector<4x64xf32>
    tpu.vector_store %arg9[%c16, %c0_11], %15 {strides = array<i32>} : memref<37x128xf32, #tpu.memory_space<vmem>>, vector<4x64xf32>,
    %17 = vector.extract_strided_slice %6 {offsets = [0, 320], sizes = [4, 64], strides = [1, 1]} : vector<4x576xf32> to vector<4x64xf32>
    %c20 = arith.constant 20 : index
    %c0_12 = arith.constant 0 : index
    %18 = vector.load %arg9[%c20, %c0_12] : memref<37x128xf32, #tpu.memory_space<vmem>>, vector<4x64xf32>
    tpu.vector_store %arg9[%c20, %c0_12], %17 {strides = array<i32>} : memref<37x128xf32, #tpu.memory_space<vmem>>, vector<4x64xf32>,
    %19 = vector.extract_strided_slice %6 {offsets = [0, 384], sizes = [4, 64], strides = [1, 1]} : vector<4x576xf32> to vector<4x64xf32>
    %c24 = arith.constant 24 : index
    %c0_13 = arith.constant 0 : index
    %20 = vector.load %arg9[%c24, %c0_13] : memref<37x128xf32, #tpu.memory_space<vmem>>, vector<4x64xf32>
    tpu.vector_store %arg9[%c24, %c0_13], %19 {strides = array<i32>} : memref<37x128xf32, #tpu.memory_space<vmem>>, vector<4x64xf32>,
    %21 = vector.extract_strided_slice %6 {offsets = [0, 448], sizes = [4, 64], strides = [1, 1]} : vector<4x576xf32> to vector<4x64xf32>
    %c28 = arith.constant 28 : index
    %c0_14 = arith.constant 0 : index
    %22 = vector.load %arg9[%c28, %c0_14] : memref<37x128xf32, #tpu.memory_space<vmem>>, vector<4x64xf32>
    tpu.vector_store %arg9[%c28, %c0_14], %21 {strides = array<i32>} : memref<37x128xf32, #tpu.memory_space<vmem>>, vector<4x64xf32>,
    %23 = vector.extract_strided_slice %6 {offsets = [0, 512], sizes = [4, 64], strides = [1, 1]} : vector<4x576xf32> to vector<4x64xf32>
    %c32 = arith.constant 32 : index
    %c0_15 = arith.constant 0 : index
    %24 = vector.load %arg9[%c32, %c0_15] : memref<37x128xf32, #tpu.memory_space<vmem>>, vector<4x64xf32>
    tpu.vector_store %arg9[%c32, %c0_15], %23 {strides = array<i32>} : memref<37x128xf32, #tpu.memory_space<vmem>>, vector<4x64xf32>,
    %c1 = arith.constant 1 : index
    %c0_16 = arith.constant 0 : index
    %c0_17 = arith.constant 0 : index
    %25 = vector.load %arg1[%c1, %c0_16, %c0_17] : memref<2x4x256xf32, #tpu.memory_space<vmem>>, vector<1x4x256xf32>
    %26 = vector.shape_cast %25 : vector<1x4x256xf32> to vector<4x256xf32>
    %27 = arith.truncf %26 : vector<4x256xf32> to vector<4x256xbf16>
    %c0_18 = arith.constant 0 : index
    %c0_19 = arith.constant 0 : index
    %28 = vector.load %arg2[%c0_18, %c0_19] : memref<256x576xbf16, #tpu.memory_space<vmem>>, vector<256x576xbf16>
    %cst_20 = arith.constant dense<0.000000e+00> : vector<4x576xf32>
    %29 = tpu.matmul %27, %28, %cst_20 {dimension_numbers = #tpu.dot_dimension_numbers<[1], [0], [0], [1], [0, 0, 1, 1], [], []>} : vector<4x256xbf16>, vector<256x576xbf16>, vector<4x576xf32> -> vector<4x576xf32>
    %30 = vector.extract_strided_slice %29 {offsets = [0, 0], sizes = [4, 64], strides = [1, 1]} : vector<4x576xf32> to vector<4x64xf32>
    %c0_21 = arith.constant 0 : index
    %c64 = arith.constant 64 : index
    %31 = vector.load %arg9[%c0_21, %c64] : memref<37x128xf32, #tpu.memory_space<vmem>>, vector<4x64xf32>
    tpu.vector_store %arg9[%c0_21, %c64], %30 {strides = array<i32>} : memref<37x128xf32, #tpu.memory_space<vmem>>, vector<4x64xf32>,
    %32 = vector.extract_strided_slice %29 {offsets = [0, 64], sizes = [4, 64], strides = [1, 1]} : vector<4x576xf32> to vector<4x64xf32>
    %c4_22 = arith.constant 4 : index
    %c64_23 = arith.constant 64 : index
    %33 = vector.load %arg9[%c4_22, %c64_23] : memref<37x128xf32, #tpu.memory_space<vmem>>, vector<4x64xf32>
    tpu.vector_store %arg9[%c4_22, %c64_23], %32 {strides = array<i32>} : memref<37x128xf32, #tpu.memory_space<vmem>>, vector<4x64xf32>,
    %34 = vector.extract_strided_slice %29 {offsets = [0, 128], sizes = [4, 64], strides = [1, 1]} : vector<4x576xf32> to vector<4x64xf32>
    %c8_24 = arith.constant 8 : index
    %c64_25 = arith.constant 64 : index
    %35 = vector.load %arg9[%c8_24, %c64_25] : memref<37x128xf32, #tpu.memory_space<vmem>>, vector<4x64xf32>
    tpu.vector_store %arg9[%c8_24, %c64_25], %34 {strides = array<i32>} : memref<37x128xf32, #tpu.memory_space<vmem>>, vector<4x64xf32>,
    %36 = vector.extract_strided_slice %29 {offsets = [0, 192], sizes = [4, 64], strides = [1, 1]} : vector<4x576xf32> to vector<4x64xf32>
    %c12_26 = arith.constant 12 : index
    %c64_27 = arith.constant 64 : index
    %37 = vector.load %arg9[%c12_26, %c64_27] : memref<37x128xf32, #tpu.memory_space<vmem>>, vector<4x64xf32>
    tpu.vector_store %arg9[%c12_26, %c64_27], %36 {strides = array<i32>} : memref<37x128xf32, #tpu.memory_space<vmem>>, vector<4x64xf32>,
    %38 = vector.extract_strided_slice %29 {offsets = [0, 256], sizes = [4, 64], strides = [1, 1]} : vector<4x576xf32> to vector<4x64xf32>
    %c16_28 = arith.constant 16 : index
    %c64_29 = arith.constant 64 : index
    %39 = vector.load %arg9[%c16_28, %c64_29] : memref<37x128xf32, #tpu.memory_space<vmem>>, vector<4x64xf32>
    tpu.vector_store %arg9[%c16_28, %c64_29], %38 {strides = array<i32>} : memref<37x128xf32, #tpu.memory_space<vmem>>, vector<4x64xf32>,
    %40 = vector.extract_strided_slice %29 {offsets = [0, 320], sizes = [4, 64], strides = [1, 1]} : vector<4x576xf32> to vector<4x64xf32>
    %c20_30 = arith.constant 20 : index
    %c64_31 = arith.constant 64 : index
    %41 = vector.load %arg9[%c20_30, %c64_31] : memref<37x128xf32, #tpu.memory_space<vmem>>, vector<4x64xf32>
    tpu.vector_store %arg9[%c20_30, %c64_31], %40 {strides = array<i32>} : memref<37x128xf32, #tpu.memory_space<vmem>>, vector<4x64xf32>,
    %42 = vector.extract_strided_slice %29 {offsets = [0, 384], sizes = [4, 64], strides = [1, 1]} : vector<4x576xf32> to vector<4x64xf32>
    %c24_32 = arith.constant 24 : index
    %c64_33 = arith.constant 64 : index
    %43 = vector.load %arg9[%c24_32, %c64_33] : memref<37x128xf32, #tpu.memory_space<vmem>>, vector<4x64xf32>
    tpu.vector_store %arg9[%c24_32, %c64_33], %42 {strides = array<i32>} : memref<37x128xf32, #tpu.memory_space<vmem>>, vector<4x64xf32>,
    %44 = vector.extract_strided_slice %29 {offsets = [0, 448], sizes = [4, 64], strides = [1, 1]} : vector<4x576xf32> to vector<4x64xf32>
    %c28_34 = arith.constant 28 : index
    %c64_35 = arith.constant 64 : index
    %45 = vector.load %arg9[%c28_34, %c64_35] : memref<37x128xf32, #tpu.memory_space<vmem>>, vector<4x64xf32>
    tpu.vector_store %arg9[%c28_34, %c64_35], %44 {strides = array<i32>} : memref<37x128xf32, #tpu.memory_space<vmem>>, vector<4x64xf32>,
    %46 = vector.extract_strided_slice %29 {offsets = [0, 512], sizes = [4, 64], strides = [1, 1]} : vector<4x576xf32> to vector<4x64xf32>
    %c32_36 = arith.constant 32 : index
    %c64_37 = arith.constant 64 : index
    %47 = vector.load %arg9[%c32_36, %c64_37] : memref<37x128xf32, #tpu.memory_space<vmem>>, vector<4x64xf32>
    tpu.vector_store %arg9[%c32_36, %c64_37], %46 {strides = array<i32>} : memref<37x128xf32, #tpu.memory_space<vmem>>, vector<4x64xf32>,
    %c0_38 = arith.constant 0 : index
    %c0_39 = arith.constant 0 : index
    %48 = vector.load %arg3[%c0_38, %c0_39] : memref<8x37xf32, #tpu.memory_space<vmem>>, vector<8x37xf32>
    %c0_40 = arith.constant 0 : index
    %c0_41 = arith.constant 0 : index
    %49 = vector.load %arg9[%c0_40, %c0_41] : memref<37x128xf32, #tpu.memory_space<vmem>>, vector<37x128xf32>
    %cst_42 = arith.constant dense<0.000000e+00> : vector<8x128xf32>
    %50 = tpu.matmul %48, %49, %cst_42 {dimension_numbers = #tpu.dot_dimension_numbers<[1], [0], [0], [1], [0, 0, 1, 1], [], []>} : vector<8x37xf32>, vector<37x128xf32>, vector<8x128xf32> -> vector<8x128xf32>
    %cst_43 = arith.constant 0.000000e+00 : f32
    %51 = vector.broadcast %cst_43 : f32 to vector<8x128xf32>
    %52 = arith.maximumf %50, %51 : vector<8x128xf32>
    %53 = arith.truncf %52 : vector<8x128xf32> to vector<8x128xbf16>
    %c0_44 = arith.constant 0 : index
    %c0_45 = arith.constant 0 : index
    %54 = vector.load %arg11[%c0_44, %c0_45] : memref<8x128xbf16, #tpu.memory_space<vmem>>, vector<8x128xbf16>
    tpu.vector_store %arg11[%c0_44, %c0_45], %53 {strides = array<i32>} : memref<8x128xbf16, #tpu.memory_space<vmem>>, vector<8x128xbf16>,
    %cst_46 = arith.constant 1.000000e+00 : f32
    %55 = vector.broadcast %cst_46 : f32 to vector<1x32xf32>
    %c72 = arith.constant 72 : index
    %c0_47 = arith.constant 0 : index
    %56 = vector.load %arg10[%c72, %c0_47] : memref<73x32xf32, #tpu.memory_space<vmem>>, vector<1x32xf32>
    tpu.vector_store %arg10[%c72, %c0_47], %55 {strides = array<i32>} : memref<73x32xf32, #tpu.memory_space<vmem>>, vector<1x32xf32>,
    %c0_48 = arith.constant 0 : index
    %c0_49 = arith.constant 0 : index
    %57 = vector.load %arg11[%c0_48, %c0_49] : memref<8x128xbf16, #tpu.memory_space<vmem>>, vector<8x64xbf16>
    %c0_50 = arith.constant 0 : index
    %c0_51 = arith.constant 0 : index
    %58 = vector.load %arg4[%c0_50, %c0_51] : memref<64x144xbf16, #tpu.memory_space<vmem>>, vector<64x144xbf16>
    %cst_52 = arith.constant dense<0.000000e+00> : vector<8x144xf32>
    %59 = tpu.matmul %57, %58, %cst_52 {dimension_numbers = #tpu.dot_dimension_numbers<[1], [0], [0], [1], [0, 0, 1, 1], [], []>} : vector<8x64xbf16>, vector<64x144xbf16>, vector<8x144xf32> -> vector<8x144xf32>
    %60 = vector.extract_strided_slice %59 {offsets = [0, 0], sizes = [8, 16], strides = [1, 1]} : vector<8x144xf32> to vector<8x16xf32>
    %c0_53 = arith.constant 0 : index
    %c0_54 = arith.constant 0 : index
    %61 = vector.load %arg10[%c0_53, %c0_54] : memref<73x32xf32, #tpu.memory_space<vmem>>, vector<8x16xf32>
    tpu.vector_store %arg10[%c0_53, %c0_54], %60 {strides = array<i32>} : memref<73x32xf32, #tpu.memory_space<vmem>>, vector<8x16xf32>,
    %62 = vector.extract_strided_slice %59 {offsets = [0, 16], sizes = [8, 16], strides = [1, 1]} : vector<8x144xf32> to vector<8x16xf32>
    %c8_55 = arith.constant 8 : index
    %c0_56 = arith.constant 0 : index
    %63 = vector.load %arg10[%c8_55, %c0_56] : memref<73x32xf32, #tpu.memory_space<vmem>>, vector<8x16xf32>
    tpu.vector_store %arg10[%c8_55, %c0_56], %62 {strides = array<i32>} : memref<73x32xf32, #tpu.memory_space<vmem>>, vector<8x16xf32>,
    %64 = vector.extract_strided_slice %59 {offsets = [0, 32], sizes = [8, 16], strides = [1, 1]} : vector<8x144xf32> to vector<8x16xf32>
    %c16_57 = arith.constant 16 : index
    %c0_58 = arith.constant 0 : index
    %65 = vector.load %arg10[%c16_57, %c0_58] : memref<73x32xf32, #tpu.memory_space<vmem>>, vector<8x16xf32>
    tpu.vector_store %arg10[%c16_57, %c0_58], %64 {strides = array<i32>} : memref<73x32xf32, #tpu.memory_space<vmem>>, vector<8x16xf32>,
    %66 = vector.extract_strided_slice %59 {offsets = [0, 48], sizes = [8, 16], strides = [1, 1]} : vector<8x144xf32> to vector<8x16xf32>
    %c24_59 = arith.constant 24 : index
    %c0_60 = arith.constant 0 : index
    %67 = vector.load %arg10[%c24_59, %c0_60] : memref<73x32xf32, #tpu.memory_space<vmem>>, vector<8x16xf32>
    tpu.vector_store %arg10[%c24_59, %c0_60], %66 {strides = array<i32>} : memref<73x32xf32, #tpu.memory_space<vmem>>, vector<8x16xf32>,
    %68 = vector.extract_strided_slice %59 {offsets = [0, 64], sizes = [8, 16], strides = [1, 1]} : vector<8x144xf32> to vector<8x16xf32>
    %c32_61 = arith.constant 32 : index
    %c0_62 = arith.constant 0 : index
    %69 = vector.load %arg10[%c32_61, %c0_62] : memref<73x32xf32, #tpu.memory_space<vmem>>, vector<8x16xf32>
    tpu.vector_store %arg10[%c32_61, %c0_62], %68 {strides = array<i32>} : memref<73x32xf32, #tpu.memory_space<vmem>>, vector<8x16xf32>,
    %70 = vector.extract_strided_slice %59 {offsets = [0, 80], sizes = [8, 16], strides = [1, 1]} : vector<8x144xf32> to vector<8x16xf32>
    %c40 = arith.constant 40 : index
    %c0_63 = arith.constant 0 : index
    %71 = vector.load %arg10[%c40, %c0_63] : memref<73x32xf32, #tpu.memory_space<vmem>>, vector<8x16xf32>
    tpu.vector_store %arg10[%c40, %c0_63], %70 {strides = array<i32>} : memref<73x32xf32, #tpu.memory_space<vmem>>, vector<8x16xf32>,
    %72 = vector.extract_strided_slice %59 {offsets = [0, 96], sizes = [8, 16], strides = [1, 1]} : vector<8x144xf32> to vector<8x16xf32>
    %c48 = arith.constant 48 : index
    %c0_64 = arith.constant 0 : index
    %73 = vector.load %arg10[%c48, %c0_64] : memref<73x32xf32, #tpu.memory_space<vmem>>, vector<8x16xf32>
    tpu.vector_store %arg10[%c48, %c0_64], %72 {strides = array<i32>} : memref<73x32xf32, #tpu.memory_space<vmem>>, vector<8x16xf32>,
    %74 = vector.extract_strided_slice %59 {offsets = [0, 112], sizes = [8, 16], strides = [1, 1]} : vector<8x144xf32> to vector<8x16xf32>
    %c56 = arith.constant 56 : index
    %c0_65 = arith.constant 0 : index
    %75 = vector.load %arg10[%c56, %c0_65] : memref<73x32xf32, #tpu.memory_space<vmem>>, vector<8x16xf32>
    tpu.vector_store %arg10[%c56, %c0_65], %74 {strides = array<i32>} : memref<73x32xf32, #tpu.memory_space<vmem>>, vector<8x16xf32>,
    %76 = vector.extract_strided_slice %59 {offsets = [0, 128], sizes = [8, 16], strides = [1, 1]} : vector<8x144xf32> to vector<8x16xf32>
    %c64_66 = arith.constant 64 : index
    %c0_67 = arith.constant 0 : index
    %77 = vector.load %arg10[%c64_66, %c0_67] : memref<73x32xf32, #tpu.memory_space<vmem>>, vector<8x16xf32>
    tpu.vector_store %arg10[%c64_66, %c0_67], %76 {strides = array<i32>} : memref<73x32xf32, #tpu.memory_space<vmem>>, vector<8x16xf32>,
    %c0_68 = arith.constant 0 : index
    %c64_69 = arith.constant 64 : index
    %78 = vector.load %arg11[%c0_68, %c64_69] : memref<8x128xbf16, #tpu.memory_space<vmem>>, vector<8x64xbf16>
    %c0_70 = arith.constant 0 : index
    %c0_71 = arith.constant 0 : index
    %79 = vector.load %arg4[%c0_70, %c0_71] : memref<64x144xbf16, #tpu.memory_space<vmem>>, vector<64x144xbf16>
    %cst_72 = arith.constant dense<0.000000e+00> : vector<8x144xf32>
    %80 = tpu.matmul %78, %79, %cst_72 {dimension_numbers = #tpu.dot_dimension_numbers<[1], [0], [0], [1], [0, 0, 1, 1], [], []>} : vector<8x64xbf16>, vector<64x144xbf16>, vector<8x144xf32> -> vector<8x144xf32>
    %81 = vector.extract_strided_slice %80 {offsets = [0, 0], sizes = [8, 16], strides = [1, 1]} : vector<8x144xf32> to vector<8x16xf32>
    %c0_73 = arith.constant 0 : index
    %c16_74 = arith.constant 16 : index
    %82 = vector.load %arg10[%c0_73, %c16_74] : memref<73x32xf32, #tpu.memory_space<vmem>>, vector<8x16xf32>
    tpu.vector_store %arg10[%c0_73, %c16_74], %81 {strides = array<i32>} : memref<73x32xf32, #tpu.memory_space<vmem>>, vector<8x16xf32>,
    %83 = vector.extract_strided_slice %80 {offsets = [0, 16], sizes = [8, 16], strides = [1, 1]} : vector<8x144xf32> to vector<8x16xf32>
    %c8_75 = arith.constant 8 : index
    %c16_76 = arith.constant 16 : index
    %84 = vector.load %arg10[%c8_75, %c16_76] : memref<73x32xf32, #tpu.memory_space<vmem>>, vector<8x16xf32>
    tpu.vector_store %arg10[%c8_75, %c16_76], %83 {strides = array<i32>} : memref<73x32xf32, #tpu.memory_space<vmem>>, vector<8x16xf32>,
    %85 = vector.extract_strided_slice %80 {offsets = [0, 32], sizes = [8, 16], strides = [1, 1]} : vector<8x144xf32> to vector<8x16xf32>
    %c16_77 = arith.constant 16 : index
    %c16_78 = arith.constant 16 : index
    %86 = vector.load %arg10[%c16_77, %c16_78] : memref<73x32xf32, #tpu.memory_space<vmem>>, vector<8x16xf32>
    tpu.vector_store %arg10[%c16_77, %c16_78], %85 {strides = array<i32>} : memref<73x32xf32, #tpu.memory_space<vmem>>, vector<8x16xf32>,
    %87 = vector.extract_strided_slice %80 {offsets = [0, 48], sizes = [8, 16], strides = [1, 1]} : vector<8x144xf32> to vector<8x16xf32>
    %c24_79 = arith.constant 24 : index
    %c16_80 = arith.constant 16 : index
    %88 = vector.load %arg10[%c24_79, %c16_80] : memref<73x32xf32, #tpu.memory_space<vmem>>, vector<8x16xf32>
    tpu.vector_store %arg10[%c24_79, %c16_80], %87 {strides = array<i32>} : memref<73x32xf32, #tpu.memory_space<vmem>>, vector<8x16xf32>,
    %89 = vector.extract_strided_slice %80 {offsets = [0, 64], sizes = [8, 16], strides = [1, 1]} : vector<8x144xf32> to vector<8x16xf32>
    %c32_81 = arith.constant 32 : index
    %c16_82 = arith.constant 16 : index
    %90 = vector.load %arg10[%c32_81, %c16_82] : memref<73x32xf32, #tpu.memory_space<vmem>>, vector<8x16xf32>
    tpu.vector_store %arg10[%c32_81, %c16_82], %89 {strides = array<i32>} : memref<73x32xf32, #tpu.memory_space<vmem>>, vector<8x16xf32>,
    %91 = vector.extract_strided_slice %80 {offsets = [0, 80], sizes = [8, 16], strides = [1, 1]} : vector<8x144xf32> to vector<8x16xf32>
    %c40_83 = arith.constant 40 : index
    %c16_84 = arith.constant 16 : index
    %92 = vector.load %arg10[%c40_83, %c16_84] : memref<73x32xf32, #tpu.memory_space<vmem>>, vector<8x16xf32>
    tpu.vector_store %arg10[%c40_83, %c16_84], %91 {strides = array<i32>} : memref<73x32xf32, #tpu.memory_space<vmem>>, vector<8x16xf32>,
    %93 = vector.extract_strided_slice %80 {offsets = [0, 96], sizes = [8, 16], strides = [1, 1]} : vector<8x144xf32> to vector<8x16xf32>
    %c48_85 = arith.constant 48 : index
    %c16_86 = arith.constant 16 : index
    %94 = vector.load %arg10[%c48_85, %c16_86] : memref<73x32xf32, #tpu.memory_space<vmem>>, vector<8x16xf32>
    tpu.vector_store %arg10[%c48_85, %c16_86], %93 {strides = array<i32>} : memref<73x32xf32, #tpu.memory_space<vmem>>, vector<8x16xf32>,
    %95 = vector.extract_strided_slice %80 {offsets = [0, 112], sizes = [8, 16], strides = [1, 1]} : vector<8x144xf32> to vector<8x16xf32>
    %c56_87 = arith.constant 56 : index
    %c16_88 = arith.constant 16 : index
    %96 = vector.load %arg10[%c56_87, %c16_88] : memref<73x32xf32, #tpu.memory_space<vmem>>, vector<8x16xf32>
    tpu.vector_store %arg10[%c56_87, %c16_88], %95 {strides = array<i32>} : memref<73x32xf32, #tpu.memory_space<vmem>>, vector<8x16xf32>,
    %97 = vector.extract_strided_slice %80 {offsets = [0, 128], sizes = [8, 16], strides = [1, 1]} : vector<8x144xf32> to vector<8x16xf32>
    %c64_89 = arith.constant 64 : index
    %c16_90 = arith.constant 16 : index
    %98 = vector.load %arg10[%c64_89, %c16_90] : memref<73x32xf32, #tpu.memory_space<vmem>>, vector<8x16xf32>
    tpu.vector_store %arg10[%c64_89, %c16_90], %97 {strides = array<i32>} : memref<73x32xf32, #tpu.memory_space<vmem>>, vector<8x16xf32>,
    %c0_91 = arith.constant 0 : index
    %c0_92 = arith.constant 0 : index
    %99 = vector.load %arg5[%c0_91, %c0_92] : memref<16x73xf32, #tpu.memory_space<vmem>>, vector<16x73xf32>
    %c0_93 = arith.constant 0 : index
    %c0_94 = arith.constant 0 : index
    %100 = vector.load %arg10[%c0_93, %c0_94] : memref<73x32xf32, #tpu.memory_space<vmem>>, vector<73x32xf32>
    %cst_95 = arith.constant dense<0.000000e+00> : vector<16x32xf32>
    %101 = tpu.matmul %99, %100, %cst_95 {dimension_numbers = #tpu.dot_dimension_numbers<[1], [0], [0], [1], [0, 0, 1, 1], [], []>} : vector<16x73xf32>, vector<73x32xf32>, vector<16x32xf32> -> vector<16x32xf32>
    %cst_96 = arith.constant 0.000000e+00 : f32
    %102 = vector.broadcast %cst_96 : f32 to vector<16x32xf32>
    %103 = arith.maximumf %101, %102 : vector<16x32xf32>
    %c0_97 = arith.constant 0 : index
    %c0_98 = arith.constant 0 : index
    %104 = vector.load %arg12[%c0_97, %c0_98] : memref<17x32xf32, #tpu.memory_space<vmem>>, vector<16x32xf32>
    tpu.vector_store %arg12[%c0_97, %c0_98], %103 {strides = array<i32>} : memref<17x32xf32, #tpu.memory_space<vmem>>, vector<16x32xf32>,
    %cst_99 = arith.constant 1.000000e+00 : f32
    %105 = vector.broadcast %cst_99 : f32 to vector<1x32xf32>
    %c16_100 = arith.constant 16 : index
    %c0_101 = arith.constant 0 : index
    %106 = vector.load %arg12[%c16_100, %c0_101] : memref<17x32xf32, #tpu.memory_space<vmem>>, vector<1x32xf32>
    tpu.vector_store %arg12[%c16_100, %c0_101], %105 {strides = array<i32>} : memref<17x32xf32, #tpu.memory_space<vmem>>, vector<1x32xf32>,
    %c0_102 = arith.constant 0 : index
    %c0_103 = arith.constant 0 : index
    %107 = vector.load %arg6[%c0_102, %c0_103] : memref<2x17xf32, #tpu.memory_space<vmem>>, vector<2x17xf32>
    %c0_104 = arith.constant 0 : index
    %c0_105 = arith.constant 0 : index
    %108 = vector.load %arg12[%c0_104, %c0_105] : memref<17x32xf32, #tpu.memory_space<vmem>>, vector<17x16xf32>
    %cst_106 = arith.constant dense<0.000000e+00> : vector<2x16xf32>
    %109 = tpu.matmul %107, %108, %cst_106 {dimension_numbers = #tpu.dot_dimension_numbers<[1], [0], [0], [1], [0, 0, 1, 1], [], []>} : vector<2x17xf32>, vector<17x16xf32>, vector<2x16xf32> -> vector<2x16xf32>
    %c0_107 = arith.constant 0 : index
    %c0_108 = arith.constant 0 : index
    %110 = vector.load %arg7[%c0_107, %c0_108] : memref<16x256xf32, #tpu.memory_space<vmem>>, vector<16x256xf32>
    %cst_109 = arith.constant dense<0.000000e+00> : vector<2x256xf32>
    %111 = tpu.matmul %109, %110, %cst_109 {dimension_numbers = #tpu.dot_dimension_numbers<[1], [0], [0], [1], [0, 0, 1, 1], [], []>} : vector<2x16xf32>, vector<16x256xf32>, vector<2x256xf32> -> vector<2x256xf32>
    %c0_110 = arith.constant 0 : index
    %c0_111 = arith.constant 0 : index
    %c0_112 = arith.constant 0 : index
    %112 = vector.load %arg8[%c0_110, %c0_111, %c0_112] : memref<2x2x256xf32, #tpu.memory_space<vmem>>, vector<1x2x256xf32>
    %113 = vector.shape_cast %112 : vector<1x2x256xf32> to vector<2x256xf32>
    %114 = vector.shape_cast %111 : vector<2x256xf32> to vector<1x2x256xf32>
    tpu.vector_store %arg8[%c0_110, %c0_111, %c0_112], %114 {strides = array<i32>} : memref<2x2x256xf32, #tpu.memory_space<vmem>>, vector<1x2x256xf32>,
    %c0_113 = arith.constant 0 : index
    %c0_114 = arith.constant 0 : index
    %115 = vector.load %arg6[%c0_113, %c0_114] : memref<2x17xf32, #tpu.memory_space<vmem>>, vector<2x17xf32>
    %c0_115 = arith.constant 0 : index
    %c16_116 = arith.constant 16 : index
    %116 = vector.load %arg12[%c0_115, %c16_116] : memref<17x32xf32, #tpu.memory_space<vmem>>, vector<17x16xf32>
    %cst_117 = arith.constant dense<0.000000e+00> : vector<2x16xf32>
    %117 = tpu.matmul %115, %116, %cst_117 {dimension_numbers = #tpu.dot_dimension_numbers<[1], [0], [0], [1], [0, 0, 1, 1], [], []>} : vector<2x17xf32>, vector<17x16xf32>, vector<2x16xf32> -> vector<2x16xf32>
    %c0_118 = arith.constant 0 : index
    %c0_119 = arith.constant 0 : index
    %118 = vector.load %arg7[%c0_118, %c0_119] : memref<16x256xf32, #tpu.memory_space<vmem>>, vector<16x256xf32>
    %cst_120 = arith.constant dense<0.000000e+00> : vector<2x256xf32>
    %119 = tpu.matmul %117, %118, %cst_120 {dimension_numbers = #tpu.dot_dimension_numbers<[1], [0], [0], [1], [0, 0, 1, 1], [], []>} : vector<2x16xf32>, vector<16x256xf32>, vector<2x256xf32> -> vector<2x256xf32>
    %c1_121 = arith.constant 1 : index
    %c0_122 = arith.constant 0 : index
    %c0_123 = arith.constant 0 : index
    %120 = vector.load %arg8[%c1_121, %c0_122, %c0_123] : memref<2x2x256xf32, #tpu.memory_space<vmem>>, vector<1x2x256xf32>
    %121 = vector.shape_cast %120 : vector<1x2x256xf32> to vector<2x256xf32>
    %122 = vector.shape_cast %119 : vector<2x256xf32> to vector<1x2x256xf32>
    tpu.vector_store %arg8[%c1_121, %c0_122, %c0_123], %122 {strides = array<i32>} : memref<2x2x256xf32, #tpu.memory_space<vmem>>, vector<1x2x256xf32>,
    return
  }
  func.func @transform_0(%arg0: i32) -> (i32, i32, i32) {
    %c0_i32 = arith.constant 0 : i32
    %c0_i32_0 = arith.constant 0 : i32
    %c0_i32_1 = arith.constant 0 : i32
    return %arg0, %c0_i32, %c0_i32_0 : i32, i32, i32
  }
  func.func @transform_1(%arg0: i32) -> (i32, i32) {
    %c0_i32 = arith.constant 0 : i32
    %c0_i32_0 = arith.constant 0 : i32
    %c0_i32_1 = arith.constant 0 : i32
    return %c0_i32, %c0_i32_0 : i32, i32
  }
  func.func @transform_2(%arg0: i32) -> (i32, i32) {
    %c0_i32 = arith.constant 0 : i32
    %c0_i32_0 = arith.constant 0 : i32
    %c0_i32_1 = arith.constant 0 : i32
    return %c0_i32, %c0_i32_0 : i32, i32
  }
  func.func @transform_3(%arg0: i32) -> (i32, i32) {
    %c0_i32 = arith.constant 0 : i32
    %c0_i32_0 = arith.constant 0 : i32
    %c0_i32_1 = arith.constant 0 : i32
    return %c0_i32, %c0_i32_0 : i32, i32
  }
  func.func @transform_4(%arg0: i32) -> (i32, i32) {
    %c0_i32 = arith.constant 0 : i32
    %c0_i32_0 = arith.constant 0 : i32
    %c0_i32_1 = arith.constant 0 : i32
    return %c0_i32, %c0_i32_0 : i32, i32
  }
  func.func @transform_5(%arg0: i32) -> (i32, i32) {
    %c0_i32 = arith.constant 0 : i32
    %c0_i32_0 = arith.constant 0 : i32
    %c0_i32_1 = arith.constant 0 : i32
    return %c0_i32, %c0_i32_0 : i32, i32
  }
  func.func @transform_6(%arg0: i32) -> (i32, i32) {
    %c0_i32 = arith.constant 0 : i32
    %c0_i32_0 = arith.constant 0 : i32
    %c0_i32_1 = arith.constant 0 : i32
    return %c0_i32, %c0_i32_0 : i32, i32
  }
  func.func @transform_7(%arg0: i32) -> (i32, i32, i32) {
    %c0_i32 = arith.constant 0 : i32
    %c0_i32_0 = arith.constant 0 : i32
    %c0_i32_1 = arith.constant 0 : i32
    return %arg0, %c0_i32, %c0_i32_0 : i32, i32, i32
  }
}

</mosaic_0001>

<llo_original>
// kernel: tpu_custom_call.1
$region0: #{tpu_custom_call.1}
  #allocation0 [shape = 'u32[]', space=smem, size = 0x4, offset = 0x4, fixed_abs, tag = 'smem constant byte address 0x4 - core index']
  #allocation1 [shape = 'u32[144,128]{1,0:T(1,128)}', space=vmem, size = 0x12000, scoped, tag = 'internal scratch']
  #allocation2 [shape = 'f32[37,128]{1,0:T(8,128)}', space=vmem, size = 0x5000, scoped, tag = 'scratch operand']
  #allocation3 [shape = 'f32[73,32]{1,0:T(8,128)}', space=vmem, size = 0xa000, scoped, tag = 'scratch operand']
  #allocation4 [shape = 'bf16[8,128]{1,0:T(8,128)(2,1)}', space=vmem, size = 0x800, scoped, tag = 'scratch operand']
  #allocation5 [shape = 'f32[17,32]{1,0:T(8,128)}', space=vmem, size = 0x3000, scoped, tag = 'scratch operand']
  %s0 = inlined_call_operand.vmem [shape: f32[2,4,256], index: 0, kind: input, shape index: {}]
  %s1 = inlined_call_operand.vmem [shape: bf16[256,576], index: 1, kind: input, shape index: {}]
  %s2 = inlined_call_operand.vmem [shape: f32[8,37], index: 2, kind: input, shape index: {}]
  %s3 = inlined_call_operand.vmem [shape: bf16[64,144], index: 3, kind: input, shape index: {}]
  %s4 = inlined_call_operand.vmem [shape: f32[16,73], index: 4, kind: input, shape index: {}]
  %s5 = inlined_call_operand.vmem [shape: f32[2,17], index: 5, kind: input, shape index: {}]
  %s6 = inlined_call_operand.vmem [shape: f32[16,256], index: 6, kind: input, shape index: {}]
  %s7 = inlined_call_operand.hbm [shape: f32[2,2,256], index: 7, kind: output, shape index: {}]
  %s8 = sld [smem:[#allocation0]]
  $region38: #{tpu_custom_call.1} parent=0
    _
  %s10 = ssub.s32 1, %s8
  %s11 = scalar_select 0, %s10, %s8
  $region1: #{tpu_custom_call.1} parent=0
    #allocation6 [shape = 'u8[4096]{0}', space=vmem, size = 0x1000, scoped, tag = 'output window, operand 0, single buffered']
    #allocation7 [shape = 's32[1]{0}', space=sflag, size = 0x4, scoped, tag = 'scoped memory for tpu_custom_call.1']
    %12 = vsyncpa [#allocation7], 0
    // Predicated region
    $region2: #{tpu_custom_call.1} parent=1 // pred_check
      _
    $region3: #{tpu_custom_call.1} parent=1 // pred_check_branch
      %14 = sbr.rel (0) target = $region5
    $region4: #{tpu_custom_call.1} parent=1 // pred_region
      _
    $region5: #{tpu_custom_call.1} parent=1 // pred_fallthru
      _
    // Predicated region
    $region6: #{tpu_custom_call.1} parent=1 // pred_check
      _
    $region7: #{tpu_custom_call.1} parent=1 // pred_check_branch
      %16 = sbr.rel (0) target = $region9
    $region8: #{tpu_custom_call.1} parent=1 // pred_region
      _
    $region9: #{tpu_custom_call.1} parent=1 // pred_fallthru
      _
    // Predicated region
    $region10: #{tpu_custom_call.1} parent=1 // pred_check
      _
    $region11: #{tpu_custom_call.1} parent=1 // pred_check_branch
      %18 = sbr.rel (0) target = $region13
    $region12: #{tpu_custom_call.1} parent=1 // pred_region
      _
    $region13: #{tpu_custom_call.1} parent=1 // pred_fallthru
      _
    // Predicated region
    $region14: #{tpu_custom_call.1} parent=1 // pred_check
      _
    $region15: #{tpu_custom_call.1} parent=1 // pred_check_branch
      %20 = sbr.rel (0) target = $region17
    $region16: #{tpu_custom_call.1} parent=1 // pred_region
      _
    $region17: #{tpu_custom_call.1} parent=1 // pred_fallthru
      _
    // Predicated region
    $region18: #{tpu_custom_call.1} parent=1 // pred_check
      _
    $region19: #{tpu_custom_call.1} parent=1 // pred_check_branch
      %22 = sbr.rel (0) target = $region21
    $region20: #{tpu_custom_call.1} parent=1 // pred_region
      _
    $region21: #{tpu_custom_call.1} parent=1 // pred_fallthru
      _
    // Predicated region
    $region22: #{tpu_custom_call.1} parent=1 // pred_check
      _
    $region23: #{tpu_custom_call.1} parent=1 // pred_check_branch
      %24 = sbr.rel (0) target = $region25
    $region24: #{tpu_custom_call.1} parent=1 // pred_region
      _
    $region25: #{tpu_custom_call.1} parent=1 // pred_fallthru
      _
    // Predicated region
    $region26: #{tpu_custom_call.1} parent=1 // pred_check
      _
    $region27: #{tpu_custom_call.1} parent=1 // pred_check_branch
      %26 = sbr.rel (0) target = $region29
    $region28: #{tpu_custom_call.1} parent=1 // pred_region
      _
    $region29: #{tpu_custom_call.1} parent=1 // pred_fallthru
      _
    %28 = vst [vmem:[#allocation2 + $0x24] sm:$0x1] 1.0
    %v29 = vld [vmem:[%s0] sm:$0xff]
    %v31 = vcombine.high %v29, %v29
    %v33 = vpack.c.bf16 %v29, %v29
    %v34 = vpack.c.bf16 %v31, %v31
    %v35 = vld [vmem:[%s1] sm:$0xff]
    %v36 = vld [vmem:[%s1 + $0x8] sm:$0xff]
    %v37 = vld [vmem:[%s1 + $0x10] sm:$0xf]
    %v38 = vld [vmem:[%s1 + $0x14] sm:$0xff]
    %v39 = vld [vmem:[%s1 + $0x1c] sm:$0xff]
    %v40 = vld [vmem:[%s1 + $0x24] sm:$0xf]
    %v41 = vld [vmem:[%s1 + $0x28] sm:$0xff]
    %v42 = vld [vmem:[%s1 + $0x30] sm:$0xff]
    %v43 = vld [vmem:[%s1 + $0x38] sm:$0xf]
    %v44 = vld [vmem:[%s1 + $0x3c] sm:$0xff]
    %v45 = vld [vmem:[%s1 + $0x44] sm:$0xff]
    %v46 = vld [vmem:[%s1 + $0x4c] sm:$0xf]
    %v47 = vld [vmem:[%s1 + $0x50] sm:$0xff]
    %v48 = vld [vmem:[%s1 + $0x58] sm:$0xff]
    %v49 = vld [vmem:[%s1 + $0x60] sm:$0xf]
    %v50 = vld [vmem:[%s1 + $0x64] sm:$0xff]
    %v51 = vld [vmem:[%s1 + $0x6c] sm:$0xff]
    %v52 = vld [vmem:[%s1 + $0x74] sm:$0xf]
    %v53 = vld [vmem:[%s1 + $0x78] sm:$0xff]
    %v54 = vld [vmem:[%s1 + $0x80] sm:$0xff]
    %v55 = vld [vmem:[%s1 + $0x88] sm:$0xf]
    %v56 = vld [vmem:[%s1 + $0x8c] sm:$0xff]
    %v57 = vld [vmem:[%s1 + $0x94] sm:$0xff]
    %v58 = vld [vmem:[%s1 + $0x9c] sm:$0xf]
    %v59 = vld [vmem:[%s1 + $0xa0] sm:$0xff]
    %v60 = vld [vmem:[%s1 + $0xa8] sm:$0xff]
    %v61 = vld [vmem:[%s1 + $0xb0] sm:$0xf]
    %v62 = vld [vmem:[%s1 + $0xb4] sm:$0xff]
    %v63 = vld [vmem:[%s1 + $0xbc] sm:$0xff]
    %v64 = vld [vmem:[%s1 + $0xc4] sm:$0xf]
    %v65 = vld [vmem:[%s1 + $0xc8] sm:$0xff]
    %v66 = vld [vmem:[%s1 + $0xd0] sm:$0xff]
    %v67 = vld [vmem:[%s1 + $0xd8] sm:$0xf]
    %v68 = vld [vmem:[%s1 + $0xdc] sm:$0xff]
    %v69 = vld [vmem:[%s1 + $0xe4] sm:$0xff]
    %v70 = vld [vmem:[%s1 + $0xec] sm:$0xf]
    %v71 = vld [vmem:[%s1 + $0xf0] sm:$0xff]
    %v72 = vld [vmem:[%s1 + $0xf8] sm:$0xff]
    %v73 = vld [vmem:[%s1 + $0x100] sm:$0xf]
    %v74 = vld [vmem:[%s1 + $0x104] sm:$0xff]
    %v75 = vld [vmem:[%s1 + $0x10c] sm:$0xff]
    %v76 = vld [vmem:[%s1 + $0x114] sm:$0xf]
    %v77 = vld [vmem:[%s1 + $0x118] sm:$0xff]
    %v78 = vld [vmem:[%s1 + $0x120] sm:$0xff]
    %v79 = vld [vmem:[%s1 + $0x128] sm:$0xf]
    %v80 = vld [vmem:[%s1 + $0x12c] sm:$0xff]
    %v81 = vld [vmem:[%s1 + $0x134] sm:$0xff]
    %v82 = vld [vmem:[%s1 + $0x13c] sm:$0xf]
    %v83 = vld [vmem:[%s1 + $0x140] sm:$0xff]
    %v84 = vld [vmem:[%s1 + $0x148] sm:$0xff]
    %v85 = vld [vmem:[%s1 + $0x150] sm:$0xf]
    %v86 = vld [vmem:[%s1 + $0x154] sm:$0xff]
    %v87 = vld [vmem:[%s1 + $0x15c] sm:$0xff]
    %v88 = vld [vmem:[%s1 + $0x164] sm:$0xf]
    %v89 = vld [vmem:[%s1 + $0x168] sm:$0xff]
    %v90 = vld [vmem:[%s1 + $0x170] sm:$0xff]
    %v91 = vld [vmem:[%s1 + $0x178] sm:$0xf]
    %v92 = vld [vmem:[%s1 + $0x17c] sm:$0xff]
    %v93 = vld [vmem:[%s1 + $0x184] sm:$0xff]
    %v94 = vld [vmem:[%s1 + $0x18c] sm:$0xf]
    %v95 = vld [vmem:[%s1 + $0x190] sm:$0xff]
    %v96 = vld [vmem:[%s1 + $0x198] sm:$0xff]
    %v97 = vld [vmem:[%s1 + $0x1a0] sm:$0xf]
    %v98 = vld [vmem:[%s1 + $0x1a4] sm:$0xff]
    %v99 = vld [vmem:[%s1 + $0x1ac] sm:$0xff]
    %v100 = vld [vmem:[%s1 + $0x1b4] sm:$0xf]
    %v101 = vld [vmem:[%s1 + $0x1b8] sm:$0xff]
    %v102 = vld [vmem:[%s1 + $0x1c0] sm:$0xff]
    %v103 = vld [vmem:[%s1 + $0x1c8] sm:$0xf]
    %v104 = vld [vmem:[%s1 + $0x1cc] sm:$0xff]
    %v105 = vld [vmem:[%s1 + $0x1d4] sm:$0xff]
    %v106 = vld [vmem:[%s1 + $0x1dc] sm:$0xf]
    %v107 = vld [vmem:[%s1 + $0x1e0] sm:$0xff]
    %v108 = vld [vmem:[%s1 + $0x1e8] sm:$0xff]
    %v109 = vld [vmem:[%s1 + $0x1f0] sm:$0xf]
    %v110 = vld [vmem:[%s1 + $0x1f4] sm:$0xff]
    %v111 = vld [vmem:[%s1 + $0x1fc] sm:$0xff]
    %v112 = vld [vmem:[%s1 + $0x204] sm:$0xf]
    %v113 = vld [vmem:[%s1 + $0x208] sm:$0xff]
    %v114 = vld [vmem:[%s1 + $0x210] sm:$0xff]
    %v115 = vld [vmem:[%s1 + $0x218] sm:$0xf]
    %v116 = vld [vmem:[%s1 + $0x21c] sm:$0xff]
    %v117 = vld [vmem:[%s1 + $0x224] sm:$0xff]
    %v118 = vld [vmem:[%s1 + $0x22c] sm:$0xf]
    %v119 = vld [vmem:[%s1 + $0x230] sm:$0xff]
    %v120 = vld [vmem:[%s1 + $0x238] sm:$0xff]
    %v121 = vld [vmem:[%s1 + $0x240] sm:$0xf]
    %v122 = vld [vmem:[%s1 + $0x244] sm:$0xff]
    %v123 = vld [vmem:[%s1 + $0x24c] sm:$0xff]
    %v124 = vld [vmem:[%s1 + $0x254] sm:$0xf]
    %v125 = vld [vmem:[%s1 + $0x258] sm:$0xff]
    %v126 = vld [vmem:[%s1 + $0x260] sm:$0xff]
    %v127 = vld [vmem:[%s1 + $0x268] sm:$0xf]
    %v128 = vld [vmem:[%s1 + $0x26c] sm:$0xff]
    %v129 = vld [vmem:[%s1 + $0x274] sm:$0xff]
    %v130 = vld [vmem:[%s1 + $0x27c] sm:$0xf]
    %v227 = vunpack.c.l.b16 %v35
    %v228 = vunpack.c.h.b16 %v35
    %v229 = vunpack.c.l.b16 %v36
    %v230 = vunpack.c.h.b16 %v36
    %v231 = vunpack.c.l.b16 %v37
    %v232 = vunpack.c.l.b16 %v38
    %v233 = vunpack.c.h.b16 %v38
    %v234 = vunpack.c.l.b16 %v39
    %v235 = vunpack.c.h.b16 %v39
    %v236 = vunpack.c.l.b16 %v40
    %v237 = vunpack.c.l.b16 %v41
    %v238 = vunpack.c.h.b16 %v41
    %v239 = vunpack.c.l.b16 %v42
    %v240 = vunpack.c.h.b16 %v42
    %v241 = vunpack.c.l.b16 %v43
    %v242 = vunpack.c.l.b16 %v44
    %v243 = vunpack.c.h.b16 %v44
    %v244 = vunpack.c.l.b16 %v45
    %v245 = vunpack.c.h.b16 %v45
    %v246 = vunpack.c.l.b16 %v46
    %v247 = vunpack.c.l.b16 %v47
    %v248 = vunpack.c.h.b16 %v47
    %v249 = vunpack.c.l.b16 %v48
    %v250 = vunpack.c.h.b16 %v48
    %v251 = vunpack.c.l.b16 %v49
    %v252 = vunpack.c.l.b16 %v50
    %v253 = vunpack.c.h.b16 %v50
    %v254 = vunpack.c.l.b16 %v51
    %v255 = vunpack.c.h.b16 %v51
    %v256 = vunpack.c.l.b16 %v52
    %v257 = vunpack.c.l.b16 %v53
    %v258 = vunpack.c.h.b16 %v53
    %v259 = vunpack.c.l.b16 %v54
    %v260 = vunpack.c.h.b16 %v54
    %v261 = vunpack.c.l.b16 %v55
    %v262 = vunpack.c.l.b16 %v56
    %v263 = vunpack.c.h.b16 %v56
    %v264 = vunpack.c.l.b16 %v57
    %v265 = vunpack.c.h.b16 %v57
    %v266 = vunpack.c.l.b16 %v58
    %v267 = vunpack.c.l.b16 %v59
    %v268 = vunpack.c.h.b16 %v59
    %v269 = vunpack.c.l.b16 %v60
    %v270 = vunpack.c.h.b16 %v60
    %v271 = vunpack.c.l.b16 %v61
    %v272 = vunpack.c.l.b16 %v62
    %v273 = vunpack.c.h.b16 %v62
    %v274 = vunpack.c.l.b16 %v63
    %v275 = vunpack.c.h.b16 %v63
    %v276 = vunpack.c.l.b16 %v64
    %v277 = vunpack.c.l.b16 %v65
    %v278 = vunpack.c.h.b16 %v65
    %v279 = vunpack.c.l.b16 %v66
    %v280 = vunpack.c.h.b16 %v66
    %v281 = vunpack.c.l.b16 %v67
    %v282 = vunpack.c.l.b16 %v68
    %v283 = vunpack.c.h.b16 %v68
    %v284 = vunpack.c.l.b16 %v69
    %v285 = vunpack.c.h.b16 %v69
    %v286 = vunpack.c.l.b16 %v70
    %v287 = vunpack.c.l.b16 %v71
    %v288 = vunpack.c.h.b16 %v71
    %v289 = vunpack.c.l.b16 %v72
    %v290 = vunpack.c.h.b16 %v72
    %v291 = vunpack.c.l.b16 %v73
    %v292 = vunpack.c.l.b16 %v74
    %v293 = vunpack.c.h.b16 %v74
    %v294 = vunpack.c.l.b16 %v75
    %v295 = vunpack.c.h.b16 %v75
    %v296 = vunpack.c.l.b16 %v76
    %v297 = vunpack.c.l.b16 %v77
    %v298 = vunpack.c.h.b16 %v77
    %v299 = vunpack.c.l.b16 %v78
    %v300 = vunpack.c.h.b16 %v78
    %v301 = vunpack.c.l.b16 %v79
    %v302 = vunpack.c.l.b16 %v80
    %v303 = vunpack.c.h.b16 %v80
    %v304 = vunpack.c.l.b16 %v81
    %v305 = vunpack.c.h.b16 %v81
    %v306 = vunpack.c.l.b16 %v82
    %v307 = vunpack.c.l.b16 %v83
    %v308 = vunpack.c.h.b16 %v83
    %v309 = vunpack.c.l.b16 %v84
    %v310 = vunpack.c.h.b16 %v84
    %v311 = vunpack.c.l.b16 %v85
    %v312 = vunpack.c.l.b16 %v86
    %v313 = vunpack.c.h.b16 %v86
    %v314 = vunpack.c.l.b16 %v87
    %v315 = vunpack.c.h.b16 %v87
    %v316 = vunpack.c.l.b16 %v88
    %v317 = vunpack.c.l.b16 %v89
    %v318 = vunpack.c.h.b16 %v89
    %v319 = vunpack.c.l.b16 %v90
    %v320 = vunpack.c.h.b16 %v90
    %v321 = vunpack.c.l.b16 %v91
    %v322 = vunpack.c.l.b16 %v92
    %v323 = vunpack.c.h.b16 %v92
    %v324 = vunpack.c.l.b16 %v93
    %v325 = vunpack.c.h.b16 %v93
    %v326 = vunpack.c.l.b16 %v94
    %v327 = vunpack.c.l.b16 %v95
    %v328 = vunpack.c.h.b16 %v95
    %v329 = vunpack.c.l.b16 %v96
    %v330 = vunpack.c.h.b16 %v96
    %v331 = vunpack.c.l.b16 %v97
    %v332 = vunpack.c.l.b16 %v98
    %v333 = vunpack.c.h.b16 %v98
    %v334 = vunpack.c.l.b16 %v99
    %v335 = vunpack.c.h.b16 %v99
    %v336 = vunpack.c.l.b16 %v100
    %v337 = vunpack.c.l.b16 %v101
    %v338 = vunpack.c.h.b16 %v101
    %v339 = vunpack.c.l.b16 %v102
    %v340 = vunpack.c.h.b16 %v102
    %v341 = vunpack.c.l.b16 %v103
    %v342 = vunpack.c.l.b16 %v104
    %v343 = vunpack.c.h.b16 %v104
    %v344 = vunpack.c.l.b16 %v105
    %v345 = vunpack.c.h.b16 %v105
    %v346 = vunpack.c.l.b16 %v106
    %v347 = vunpack.c.l.b16 %v107
    %v348 = vunpack.c.h.b16 %v107
    %v349 = vunpack.c.l.b16 %v108
    %v350 = vunpack.c.h.b16 %v108
    %v351 = vunpack.c.l.b16 %v109
    %v352 = vunpack.c.l.b16 %v110
    %v353 = vunpack.c.h.b16 %v110
    %v354 = vunpack.c.l.b16 %v111
    %v355 = vunpack.c.h.b16 %v111
    %v356 = vunpack.c.l.b16 %v112
    %v357 = vunpack.c.l.b16 %v113
    %v358 = vunpack.c.h.b16 %v113
    %v359 = vunpack.c.l.b16 %v114
    %v360 = vunpack.c.h.b16 %v114
    %v361 = vunpack.c.l.b16 %v115
    %v362 = vunpack.c.l.b16 %v116
    %v363 = vunpack.c.h.b16 %v116
    %v364 = vunpack.c.l.b16 %v117
    %v365 = vunpack.c.h.b16 %v117
    %v366 = vunpack.c.l.b16 %v118
    %v367 = vunpack.c.l.b16 %v119
    %v368 = vunpack.c.h.b16 %v119
    %v369 = vunpack.c.l.b16 %v120
    %v370 = vunpack.c.h.b16 %v120
    %v371 = vunpack.c.l.b16 %v121
    %v372 = vunpack.c.l.b16 %v122
    %v373 = vunpack.c.h.b16 %v122
    %v374 = vunpack.c.l.b16 %v123
    %v375 = vunpack.c.h.b16 %v123
    %v376 = vunpack.c.l.b16 %v124
    %v377 = vunpack.c.l.b16 %v125
    %v378 = vunpack.c.h.b16 %v125
    %v379 = vunpack.c.l.b16 %v126
    %v380 = vunpack.c.h.b16 %v126
    %v381 = vunpack.c.l.b16 %v127
    %v382 = vunpack.c.l.b16 %v128
    %v383 = vunpack.c.h.b16 %v128
    %v384 = vunpack.c.l.b16 %v129
    %v385 = vunpack.c.h.b16 %v129
    %v386 = vunpack.c.l.b16 %v130
    %v387 = vpack.c.b16 %v232, %v227
    %v388 = vpack.c.b16 %v233, %v228
    %v389 = vpack.c.b16 %v234, %v229
    %v390 = vpack.c.b16 %v235, %v230
    %v391 = vpack.c.b16 %v236, %v231
    %v392 = vpack.c.b16 %v242, %v237
    %v393 = vpack.c.b16 %v243, %v238
    %v394 = vpack.c.b16 %v244, %v239
    %v395 = vpack.c.b16 %v245, %v240
    %v396 = vpack.c.b16 %v246, %v241
    %v397 = vpack.c.b16 %v252, %v247
    %v398 = vpack.c.b16 %v253, %v248
    %v399 = vpack.c.b16 %v254, %v249
    %v400 = vpack.c.b16 %v255, %v250
    %v401 = vpack.c.b16 %v256, %v251
    %v402 = vpack.c.b16 %v262, %v257
    %v403 = vpack.c.b16 %v263, %v258
    %v404 = vpack.c.b16 %v264, %v259
    %v405 = vpack.c.b16 %v265, %v260
    %v406 = vpack.c.b16 %v266, %v261
    %v407 = vpack.c.b16 %v272, %v267
    %v408 = vpack.c.b16 %v273, %v268
    %v409 = vpack.c.b16 %v274, %v269
    %v410 = vpack.c.b16 %v275, %v270
    %v411 = vpack.c.b16 %v276, %v271
    %v412 = vpack.c.b16 %v282, %v277
    %v413 = vpack.c.b16 %v283, %v278
    %v414 = vpack.c.b16 %v284, %v279
    %v415 = vpack.c.b16 %v285, %v280
    %v416 = vpack.c.b16 %v286, %v281
    %v417 = vpack.c.b16 %v292, %v287
    %v418 = vpack.c.b16 %v293, %v288
    %v419 = vpack.c.b16 %v294, %v289
    %v420 = vpack.c.b16 %v295, %v290
    %v421 = vpack.c.b16 %v296, %v291
    %v422 = vpack.c.b16 %v302, %v297
    %v423 = vpack.c.b16 %v303, %v298
    %v424 = vpack.c.b16 %v304, %v299
    %v425 = vpack.c.b16 %v305, %v300
    %v426 = vpack.c.b16 %v306, %v301
    %v427 = vpack.c.b16 %v312, %v307
    %v428 = vpack.c.b16 %v313, %v308
    %v429 = vpack.c.b16 %v314, %v309
    %v430 = vpack.c.b16 %v315, %v310
    %v431 = vpack.c.b16 %v316, %v311
    %v432 = vpack.c.b16 %v322, %v317
    %v433 = vpack.c.b16 %v323, %v318
    %v434 = vpack.c.b16 %v324, %v319
    %v435 = vpack.c.b16 %v325, %v320
    %v436 = vpack.c.b16 %v326, %v321
    %v437 = vpack.c.b16 %v332, %v327
    %v438 = vpack.c.b16 %v333, %v328
    %v439 = vpack.c.b16 %v334, %v329
    %v440 = vpack.c.b16 %v335, %v330
    %v441 = vpack.c.b16 %v336, %v331
    %v442 = vpack.c.b16 %v342, %v337
    %v443 = vpack.c.b16 %v343, %v338
    %v444 = vpack.c.b16 %v344, %v339
    %v445 = vpack.c.b16 %v345, %v340
    %v446 = vpack.c.b16 %v346, %v341
    %v447 = vpack.c.b16 %v352, %v347
    %v448 = vpack.c.b16 %v353, %v348
    %v449 = vpack.c.b16 %v354, %v349
    %v450 = vpack.c.b16 %v355, %v350
    %v451 = vpack.c.b16 %v356, %v351
    %v452 = vpack.c.b16 %v362, %v357
    %v453 = vpack.c.b16 %v363, %v358
    %v454 = vpack.c.b16 %v364, %v359
    %v455 = vpack.c.b16 %v365, %v360
    %v456 = vpack.c.b16 %v366, %v361
    %v457 = vpack.c.b16 %v372, %v367
    %v458 = vpack.c.b16 %v373, %v368
    %v459 = vpack.c.b16 %v374, %v369
    %v460 = vpack.c.b16 %v375, %v370
    %v461 = vpack.c.b16 %v376, %v371
    %v462 = vpack.c.b16 %v382, %v377
    %v463 = vpack.c.b16 %v383, %v378
    %v464 = vpack.c.b16 %v384, %v379
    %v465 = vpack.c.b16 %v385, %v380
    %v466 = vpack.c.b16 %v386, %v381
    %547 = vmatprep.subr.bf16.mxu0 %v388
    %548 = vmatpush1.bf16.msra.mxu0 %v387
    %549 = vmatprep.subr.bf16.mxu0 %v393
    %550 = vmatpush1.bf16.msra.mxu0 %v392
    %551 = vmatprep.subr.bf16.mxu0 %v398
    %552 = vmatpush1.bf16.msra.mxu0 %v397
    %553 = vmatprep.subr.bf16.mxu0 %v403
    %554 = vmatpush1.bf16.msra.mxu0 %v402
    %555 = vmatprep.subr.bf16.mxu0 %v408
    %556 = vmatpush1.bf16.msra.mxu0 %v407
    %557 = vmatprep.subr.bf16.mxu0 %v413
    %558 = vmatpush1.bf16.msra.mxu0 %v412
    %559 = vmatprep.subr.bf16.mxu0 %v418
    %560 = vmatpush1.bf16.msra.mxu0 %v417
    %561 = vmatprep.subr.bf16.mxu0 %v423
    %562 = vmatpush1.bf16.msra.mxu0 %v422
    %563 = vmatprep.subr.bf16.mxu0 %v428
    %564 = vmatpush1.bf16.msra.mxu0 %v427
    %565 = vmatprep.subr.bf16.mxu0 %v433
    %566 = vmatpush1.bf16.msra.mxu0 %v432
    %567 = vmatprep.subr.bf16.mxu0 %v438
    %568 = vmatpush1.bf16.msra.mxu0 %v437
    %569 = vmatprep.subr.bf16.mxu0 %v443
    %570 = vmatpush1.bf16.msra.mxu0 %v442
    %571 = vmatprep.subr.bf16.mxu0 %v448
    %572 = vmatpush1.bf16.msra.mxu0 %v447
    %573 = vmatprep.subr.bf16.mxu0 %v453
    %574 = vmatpush1.bf16.msra.mxu0 %v452
    %575 = vmatprep.subr.bf16.mxu0 %v458
    %576 = vmatpush1.bf16.msra.mxu0 %v457
    %577 = vmatprep.subr.bf16.mxu0 %v463
    %578 = vmatpush1.bf16.msra.mxu0 %v462
    %579 = vmatprep.mubr.bf16.mxu0 %v34
    %580 = vmatmul.mubr.bf16.gmra.mrb[0].mxu0 %v33
    %v581 = vpop.f32.mrb[0].mxu0
    %v582 = vadd.f32 0.0, %v581
    %v583 = vpop.f32.mrb[0].mxu0
    %v584 = vadd.f32 0.0, %v583
    %v585 = vpop.f32.mrb[0].mxu0
    %v586 = vpop.f32.mrb[0].mxu0
    %587 = vdwg.mxu0
    %588 = vmatprep.subr.bf16.mxu0 %v390
    %589 = vmatpush1.bf16.msra.mxu0 %v389
    %590 = vmatprep.subr.bf16.mxu0 %v395
    %591 = vmatpush1.bf16.msra.mxu0 %v394
    %592 = vmatprep.subr.bf16.mxu0 %v400
    %593 = vmatpush1.bf16.msra.mxu0 %v399
    %594 = vmatprep.subr.bf16.mxu0 %v405
    %595 = vmatpush1.bf16.msra.mxu0 %v404
    %596 = vmatprep.subr.bf16.mxu0 %v410
    %597 = vmatpush1.bf16.msra.mxu0 %v409
    %598 = vmatprep.subr.bf16.mxu0 %v415
    %599 = vmatpush1.bf16.msra.mxu0 %v414
    %600 = vmatprep.subr.bf16.mxu0 %v420
    %601 = vmatpush1.bf16.msra.mxu0 %v419
    %602 = vmatprep.subr.bf16.mxu0 %v425
    %603 = vmatpush1.bf16.msra.mxu0 %v424
    %604 = vmatprep.subr.bf16.mxu0 %v430
    %605 = vmatpush1.bf16.msra.mxu0 %v429
    %606 = vmatprep.subr.bf16.mxu0 %v435
    %607 = vmatpush1.bf16.msra.mxu0 %v434
    %608 = vmatprep.subr.bf16.mxu0 %v440
    %609 = vmatpush1.bf16.msra.mxu0 %v439
    %610 = vmatprep.subr.bf16.mxu0 %v445
    %611 = vmatpush1.bf16.msra.mxu0 %v444
    %612 = vmatprep.subr.bf16.mxu0 %v450
    %613 = vmatpush1.bf16.msra.mxu0 %v449
    %614 = vmatprep.subr.bf16.mxu0 %v455
    %615 = vmatpush1.bf16.msra.mxu0 %v454
    %616 = vmatprep.subr.bf16.mxu0 %v460
    %617 = vmatpush1.bf16.msra.mxu0 %v459
    %618 = vmatprep.subr.bf16.mxu0 %v465
    %619 = vmatpush1.bf16.msra.mxu0 %v464
    %620 = vmatprep.mubr.bf16.mxu0 %v34
    %621 = vmatmul.mubr.bf16.gmra.mrb[0].mxu0 %v33
    %v622 = vpop.f32.mrb[0].mxu0
    %v623 = vadd.f32 0.0, %v622
    %v624 = vpop.f32.mrb[0].mxu0
    %v625 = vadd.f32 0.0, %v624
    %v626 = vpop.f32.mrb[0].mxu0
    %v627 = vpop.f32.mrb[0].mxu0
    %628 = vdwg.mxu0
    %629 = vmatprep.subr.bf16.mxu0 0
    %630 = vmatpush1.bf16.msra.mxu0 %v391
    %631 = vmatprep.subr.bf16.mxu0 0
    %632 = vmatpush1.bf16.msra.mxu0 %v396
    %633 = vmatprep.subr.bf16.mxu0 0
    %634 = vmatpush1.bf16.msra.mxu0 %v401
    %635 = vmatprep.subr.bf16.mxu0 0
    %636 = vmatpush1.bf16.msra.mxu0 %v406
    %637 = vmatprep.subr.bf16.mxu0 0
    %638 = vmatpush1.bf16.msra.mxu0 %v411
    %639 = vmatprep.subr.bf16.mxu0 0
    %640 = vmatpush1.bf16.msra.mxu0 %v416
    %641 = vmatprep.subr.bf16.mxu0 0
    %642 = vmatpush1.bf16.msra.mxu0 %v421
    %643 = vmatprep.subr.bf16.mxu0 0
    %644 = vmatpush1.bf16.msra.mxu0 %v426
    %645 = vmatprep.subr.bf16.mxu0 0
    %646 = vmatpush1.bf16.msra.mxu0 %v431
    %647 = vmatprep.subr.bf16.mxu0 0
    %648 = vmatpush1.bf16.msra.mxu0 %v436
    %649 = vmatprep.subr.bf16.mxu0 0
    %650 = vmatpush1.bf16.msra.mxu0 %v441
    %651 = vmatprep.subr.bf16.mxu0 0
    %652 = vmatpush1.bf16.msra.mxu0 %v446
    %653 = vmatprep.subr.bf16.mxu0 0
    %654 = vmatpush1.bf16.msra.mxu0 %v451
    %655 = vmatprep.subr.bf16.mxu0 0
    %656 = vmatpush1.bf16.msra.mxu0 %v456
    %657 = vmatprep.subr.bf16.mxu0 0
    %658 = vmatpush1.bf16.msra.mxu0 %v461
    %659 = vmatprep.subr.bf16.mxu0 0
    %660 = vmatpush1.bf16.msra.mxu0 %v466
    %661 = vmatprep.mubr.bf16.mxu0 %v34
    %662 = vmatmul.mubr.bf16.gmra.mrb[0].mxu0 %v33
    %v663 = vpop.f32.mrb[0].mxu0
    %v664 = vadd.f32 0.0, %v663
    %v665 = vpop.f32.mrb[0].mxu0
    %v666 = vpop.f32.mrb[0].mxu0
    %v667 = vpop.f32.mrb[0].mxu0
    %668 = vdwg.mxu0
    %vm669 = vcmask 519168
    %670 = vst.msk [vmem:[#allocation2] sm:$0xf] %vm669, %v582
    %672 = vrot.lane.b32.xlu0 %v582, 64
    %v673 = vpop.permute.xlu0 %672
    %675 = vst.msk [vmem:[#allocation2 + $0x4] sm:$0xf] %vm669, %v673
    %676 = vst.msk [vmem:[#allocation2 + $0x8] sm:$0xf] %vm669, %v584
    %678 = vrot.lane.b32.xlu0 %v584, 64
    %v679 = vpop.permute.xlu0 %678
    %681 = vst.msk [vmem:[#allocation2 + $0xc] sm:$0xf] %vm669, %v679
    %682 = vst.msk [vmem:[#allocation2 + $0x10] sm:$0xf] %vm669, %v623
    %684 = vrot.lane.b32.xlu0 %v623, 64
    %v685 = vpop.permute.xlu0 %684
    %687 = vst.msk [vmem:[#allocation2 + $0x14] sm:$0xf] %vm669, %v685
    %688 = vst.msk [vmem:[#allocation2 + $0x18] sm:$0xf] %vm669, %v625
    %690 = vrot.lane.b32.xlu0 %v625, 64
    %v691 = vpop.permute.xlu0 %690
    %693 = vst.msk [vmem:[#allocation2 + $0x1c] sm:$0xf] %vm669, %v691
    %694 = vst.msk [vmem:[#allocation2 + $0x20] sm:$0xf] %vm669, %v664
    %s695 = scalar_lea.vmem %s0, 8
    %v696 = vld [vmem:[%s695] sm:$0xff]
    %v698 = vcombine.high %v696, %v696
    %v700 = vpack.c.bf16 %v696, %v696
    %v701 = vpack.c.bf16 %v698, %v698
    %v702 = vld [vmem:[%s1] sm:$0xff]
    %v703 = vld [vmem:[%s1 + $0x8] sm:$0xff]
    %v704 = vld [vmem:[%s1 + $0x10] sm:$0xf]
    %v705 = vld [vmem:[%s1 + $0x14] sm:$0xff]
    %v706 = vld [vmem:[%s1 + $0x1c] sm:$0xff]
    %v707 = vld [vmem:[%s1 + $0x24] sm:$0xf]
    %v708 = vld [vmem:[%s1 + $0x28] sm:$0xff]
    %v709 = vld [vmem:[%s1 + $0x30] sm:$0xff]
    %v710 = vld [vmem:[%s1 + $0x38] sm:$0xf]
    %v711 = vld [vmem:[%s1 + $0x3c] sm:$0xff]
    %v712 = vld [vmem:[%s1 + $0x44] sm:$0xff]
    %v713 = vld [vmem:[%s1 + $0x4c] sm:$0xf]
    %v714 = vld [vmem:[%s1 + $0x50] sm:$0xff]
    %v715 = vld [vmem:[%s1 + $0x58] sm:$0xff]
    %v716 = vld [vmem:[%s1 + $0x60] sm:$0xf]
    %v717 = vld [vmem:[%s1 + $0x64] sm:$0xff]
    %v718 = vld [vmem:[%s1 + $0x6c] sm:$0xff]
    %v719 = vld [vmem:[%s1 + $0x74] sm:$0xf]
    %v720 = vld [vmem:[%s1 + $0x78] sm:$0xff]
    %v721 = vld [vmem:[%s1 + $0x80] sm:$0xff]
    %v722 = vld [vmem:[%s1 + $0x88] sm:$0xf]
    %v723 = vld [vmem:[%s1 + $0x8c] sm:$0xff]
    %v724 = vld [vmem:[%s1 + $0x94] sm:$0xff]
    %v725 = vld [vmem:[%s1 + $0x9c] sm:$0xf]
    %v726 = vld [vmem:[%s1 + $0xa0] sm:$0xff]
    %v727 = vld [vmem:[%s1 + $0xa8] sm:$0xff]
    %v728 = vld [vmem:[%s1 + $0xb0] sm:$0xf]
    %v729 = vld [vmem:[%s1 + $0xb4] sm:$0xff]
    %v730 = vld [vmem:[%s1 + $0xbc] sm:$0xff]
    %v731 = vld [vmem:[%s1 + $0xc4] sm:$0xf]
    %v732 = vld [vmem:[%s1 + $0xc8] sm:$0xff]
    %v733 = vld [vmem:[%s1 + $0xd0] sm:$0xff]
    %v734 = vld [vmem:[%s1 + $0xd8] sm:$0xf]
    %v735 = vld [vmem:[%s1 + $0xdc] sm:$0xff]
    %v736 = vld [vmem:[%s1 + $0xe4] sm:$0xff]
    %v737 = vld [vmem:[%s1 + $0xec] sm:$0xf]
    %v738 = vld [vmem:[%s1 + $0xf0] sm:$0xff]
    %v739 = vld [vmem:[%s1 + $0xf8] sm:$0xff]
    %v740 = vld [vmem:[%s1 + $0x100] sm:$0xf]
    %v741 = vld [vmem:[%s1 + $0x104] sm:$0xff]
    %v742 = vld [vmem:[%s1 + $0x10c] sm:$0xff]
    %v743 = vld [vmem:[%s1 + $0x114] sm:$0xf]
    %v744 = vld [vmem:[%s1 + $0x118] sm:$0xff]
    %v745 = vld [vmem:[%s1 + $0x120] sm:$0xff]
    %v746 = vld [vmem:[%s1 + $0x128] sm:$0xf]
    %v747 = vld [vmem:[%s1 + $0x12c] sm:$0xff]
    %v748 = vld [vmem:[%s1 + $0x134] sm:$0xff]
    %v749 = vld [vmem:[%s1 + $0x13c] sm:$0xf]
    %v750 = vld [vmem:[%s1 + $0x140] sm:$0xff]
    %v751 = vld [vmem:[%s1 + $0x148] sm:$0xff]
    %v752 = vld [vmem:[%s1 + $0x150] sm:$0xf]
    %v753 = vld [vmem:[%s1 + $0x154] sm:$0xff]
    %v754 = vld [vmem:[%s1 + $0x15c] sm:$0xff]
    %v755 = vld [vmem:[%s1 + $0x164] sm:$0xf]
    %v756 = vld [vmem:[%s1 + $0x168] sm:$0xff]
    %v757 = vld [vmem:[%s1 + $0x170] sm:$0xff]
    %v758 = vld [vmem:[%s1 + $0x178] sm:$0xf]
    %v759 = vld [vmem:[%s1 + $0x17c] sm:$0xff]
    %v760 = vld [vmem:[%s1 + $0x184] sm:$0xff]
    %v761 = vld [vmem:[%s1 + $0x18c] sm:$0xf]
    %v762 = vld [vmem:[%s1 + $0x190] sm:$0xff]
    %v763 = vld [vmem:[%s1 + $0x198] sm:$0xff]
    %v764 = vld [vmem:[%s1 + $0x1a0] sm:$0xf]
    %v765 = vld [vmem:[%s1 + $0x1a4] sm:$0xff]
    %v766 = vld [vmem:[%s1 + $0x1ac] sm:$0xff]
    %v767 = vld [vmem:[%s1 + $0x1b4] sm:$0xf]
    %v768 = vld [vmem:[%s1 + $0x1b8] sm:$0xff]
    %v769 = vld [vmem:[%s1 + $0x1c0] sm:$0xff]
    %v770 = vld [vmem:[%s1 + $0x1c8] sm:$0xf]
    %v771 = vld [vmem:[%s1 + $0x1cc] sm:$0xff]
    %v772 = vld [vmem:[%s1 + $0x1d4] sm:$0xff]
    %v773 = vld [vmem:[%s1 + $0x1dc] sm:$0xf]
    %v774 = vld [vmem:[%s1 + $0x1e0] sm:$0xff]
    %v775 = vld [vmem:[%s1 + $0x1e8] sm:$0xff]
    %v776 = vld [vmem:[%s1 + $0x1f0] sm:$0xf]
    %v777 = vld [vmem:[%s1 + $0x1f4] sm:$0xff]
    %v778 = vld [vmem:[%s1 + $0x1fc] sm:$0xff]
    %v779 = vld [vmem:[%s1 + $0x204] sm:$0xf]
    %v780 = vld [vmem:[%s1 + $0x208] sm:$0xff]
    %v781 = vld [vmem:[%s1 + $0x210] sm:$0xff]
    %v782 = vld [vmem:[%s1 + $0x218] sm:$0xf]
    %v783 = vld [vmem:[%s1 + $0x21c] sm:$0xff]
    %v784 = vld [vmem:[%s1 + $0x224] sm:$0xff]
    %v785 = vld [vmem:[%s1 + $0x22c] sm:$0xf]
    %v786 = vld [vmem:[%s1 + $0x230] sm:$0xff]
    %v787 = vld [vmem:[%s1 + $0x238] sm:$0xff]
    %v788 = vld [vmem:[%s1 + $0x240] sm:$0xf]
    %v789 = vld [vmem:[%s1 + $0x244] sm:$0xff]
    %v790 = vld [vmem:[%s1 + $0x24c] sm:$0xff]
    %v791 = vld [vmem:[%s1 + $0x254] sm:$0xf]
    %v792 = vld [vmem:[%s1 + $0x258] sm:$0xff]
    %v793 = vld [vmem:[%s1 + $0x260] sm:$0xff]
    %v794 = vld [vmem:[%s1 + $0x268] sm:$0xf]
    %v795 = vld [vmem:[%s1 + $0x26c] sm:$0xff]
    %v796 = vld [vmem:[%s1 + $0x274] sm:$0xff]
    %v797 = vld [vmem:[%s1 + $0x27c] sm:$0xf]
    %v894 = vunpack.c.l.b16 %v702
    %v895 = vunpack.c.h.b16 %v702
    %v896 = vunpack.c.l.b16 %v703
    %v897 = vunpack.c.h.b16 %v703
    %v898 = vunpack.c.l.b16 %v704
    %v899 = vunpack.c.l.b16 %v705
    %v900 = vunpack.c.h.b16 %v705
    %v901 = vunpack.c.l.b16 %v706
    %v902 = vunpack.c.h.b16 %v706
    %v903 = vunpack.c.l.b16 %v707
    %v904 = vunpack.c.l.b16 %v708
    %v905 = vunpack.c.h.b16 %v708
    %v906 = vunpack.c.l.b16 %v709
    %v907 = vunpack.c.h.b16 %v709
    %v908 = vunpack.c.l.b16 %v710
    %v909 = vunpack.c.l.b16 %v711
    %v910 = vunpack.c.h.b16 %v711
    %v911 = vunpack.c.l.b16 %v712
    %v912 = vunpack.c.h.b16 %v712
    %v913 = vunpack.c.l.b16 %v713
    %v914 = vunpack.c.l.b16 %v714
    %v915 = vunpack.c.h.b16 %v714
    %v916 = vunpack.c.l.b16 %v715
    %v917 = vunpack.c.h.b16 %v715
    %v918 = vunpack.c.l.b16 %v716
    %v919 = vunpack.c.l.b16 %v717
    %v920 = vunpack.c.h.b16 %v717
    %v921 = vunpack.c.l.b16 %v718
    %v922 = vunpack.c.h.b16 %v718
    %v923 = vunpack.c.l.b16 %v719
    %v924 = vunpack.c.l.b16 %v720
    %v925 = vunpack.c.h.b16 %v720
    %v926 = vunpack.c.l.b16 %v721
    %v927 = vunpack.c.h.b16 %v721
    %v928 = vunpack.c.l.b16 %v722
    %v929 = vunpack.c.l.b16 %v723
    %v930 = vunpack.c.h.b16 %v723
    %v931 = vunpack.c.l.b16 %v724
    %v932 = vunpack.c.h.b16 %v724
    %v933 = vunpack.c.l.b16 %v725
    %v934 = vunpack.c.l.b16 %v726
    %v935 = vunpack.c.h.b16 %v726
    %v936 = vunpack.c.l.b16 %v727
    %v937 = vunpack.c.h.b16 %v727
    %v938 = vunpack.c.l.b16 %v728
    %v939 = vunpack.c.l.b16 %v729
    %v940 = vunpack.c.h.b16 %v729
    %v941 = vunpack.c.l.b16 %v730
    %v942 = vunpack.c.h.b16 %v730
    %v943 = vunpack.c.l.b16 %v731
    %v944 = vunpack.c.l.b16 %v732
    %v945 = vunpack.c.h.b16 %v732
    %v946 = vunpack.c.l.b16 %v733
    %v947 = vunpack.c.h.b16 %v733
    %v948 = vunpack.c.l.b16 %v734
    %v949 = vunpack.c.l.b16 %v735
    %v950 = vunpack.c.h.b16 %v735
    %v951 = vunpack.c.l.b16 %v736
    %v952 = vunpack.c.h.b16 %v736
    %v953 = vunpack.c.l.b16 %v737
    %v954 = vunpack.c.l.b16 %v738
    %v955 = vunpack.c.h.b16 %v738
    %v956 = vunpack.c.l.b16 %v739
    %v957 = vunpack.c.h.b16 %v739
    %v958 = vunpack.c.l.b16 %v740
    %v959 = vunpack.c.l.b16 %v741
    %v960 = vunpack.c.h.b16 %v741
    %v961 = vunpack.c.l.b16 %v742
    %v962 = vunpack.c.h.b16 %v742
    %v963 = vunpack.c.l.b16 %v743
    %v964 = vunpack.c.l.b16 %v744
    %v965 = vunpack.c.h.b16 %v744
    %v966 = vunpack.c.l.b16 %v745
    %v967 = vunpack.c.h.b16 %v745
    %v968 = vunpack.c.l.b16 %v746
    %v969 = vunpack.c.l.b16 %v747
    %v970 = vunpack.c.h.b16 %v747
    %v971 = vunpack.c.l.b16 %v748
    %v972 = vunpack.c.h.b16 %v748
    %v973 = vunpack.c.l.b16 %v749
    %v974 = vunpack.c.l.b16 %v750
    %v975 = vunpack.c.h.b16 %v750
    %v976 = vunpack.c.l.b16 %v751
    %v977 = vunpack.c.h.b16 %v751
    %v978 = vunpack.c.l.b16 %v752
    %v979 = vunpack.c.l.b16 %v753
    %v980 = vunpack.c.h.b16 %v753
    %v981 = vunpack.c.l.b16 %v754
    %v982 = vunpack.c.h.b16 %v754
    %v983 = vunpack.c.l.b16 %v755
    %v984 = vunpack.c.l.b16 %v756
    %v985 = vunpack.c.h.b16 %v756
    %v986 = vunpack.c.l.b16 %v757
    %v987 = vunpack.c.h.b16 %v757
    %v988 = vunpack.c.l.b16 %v758
    %v989 = vunpack.c.l.b16 %v759
    %v990 = vunpack.c.h.b16 %v759
    %v991 = vunpack.c.l.b16 %v760
    %v992 = vunpack.c.h.b16 %v760
    %v993 = vunpack.c.l.b16 %v761
    %v994 = vunpack.c.l.b16 %v762
    %v995 = vunpack.c.h.b16 %v762
    %v996 = vunpack.c.l.b16 %v763
    %v997 = vunpack.c.h.b16 %v763
    %v998 = vunpack.c.l.b16 %v764
    %v999 = vunpack.c.l.b16 %v765
    %v1000 = vunpack.c.h.b16 %v765
    %v1001 = vunpack.c.l.b16 %v766
    %v1002 = vunpack.c.h.b16 %v766
    %v1003 = vunpack.c.l.b16 %v767
    %v1004 = vunpack.c.l.b16 %v768
    %v1005 = vunpack.c.h.b16 %v768
    %v1006 = vunpack.c.l.b16 %v769
    %v1007 = vunpack.c.h.b16 %v769
    %v1008 = vunpack.c.l.b16 %v770
    %v1009 = vunpack.c.l.b16 %v771
    %v1010 = vunpack.c.h.b16 %v771
    %v1011 = vunpack.c.l.b16 %v772
    %v1012 = vunpack.c.h.b16 %v772
    %v1013 = vunpack.c.l.b16 %v773
    %v1014 = vunpack.c.l.b16 %v774
    %v1015 = vunpack.c.h.b16 %v774
    %v1016 = vunpack.c.l.b16 %v775
    %v1017 = vunpack.c.h.b16 %v775
    %v1018 = vunpack.c.l.b16 %v776
    %v1019 = vunpack.c.l.b16 %v777
    %v1020 = vunpack.c.h.b16 %v777
    %v1021 = vunpack.c.l.b16 %v778
    %v1022 = vunpack.c.h.b16 %v778
    %v1023 = vunpack.c.l.b16 %v779
    %v1024 = vunpack.c.l.b16 %v780
    %v1025 = vunpack.c.h.b16 %v780
    %v1026 = vunpack.c.l.b16 %v781
    %v1027 = vunpack.c.h.b16 %v781
    %v1028 = vunpack.c.l.b16 %v782
    %v1029 = vunpack.c.l.b16 %v783
    %v1030 = vunpack.c.h.b16 %v783
    %v1031 = vunpack.c.l.b16 %v784
    %v1032 = vunpack.c.h.b16 %v784
    %v1033 = vunpack.c.l.b16 %v785
    %v1034 = vunpack.c.l.b16 %v786
    %v1035 = vunpack.c.h.b16 %v786
    %v1036 = vunpack.c.l.b16 %v787
    %v1037 = vunpack.c.h.b16 %v787
    %v1038 = vunpack.c.l.b16 %v788
    %v1039 = vunpack.c.l.b16 %v789
    %v1040 = vunpack.c.h.b16 %v789
    %v1041 = vunpack.c.l.b16 %v790
    %v1042 = vunpack.c.h.b16 %v790
    %v1043 = vunpack.c.l.b16 %v791
    %v1044 = vunpack.c.l.b16 %v792
    %v1045 = vunpack.c.h.b16 %v792
    %v1046 = vunpack.c.l.b16 %v793
    %v1047 = vunpack.c.h.b16 %v793
    %v1048 = vunpack.c.l.b16 %v794
    %v1049 = vunpack.c.l.b16 %v795
    %v1050 = vunpack.c.h.b16 %v795
    %v1051 = vunpack.c.l.b16 %v796
    %v1052 = vunpack.c.h.b16 %v796
    %v1053 = vunpack.c.l.b16 %v797
    %v1054 = vpack.c.b16 %v899, %v894
    %v1055 = vpack.c.b16 %v900, %v895
    %v1056 = vpack.c.b16 %v901, %v896
    %v1057 = vpack.c.b16 %v902, %v897
    %v1058 = vpack.c.b16 %v903, %v898
    %v1059 = vpack.c.b16 %v909, %v904
    %v1060 = vpack.c.b16 %v910, %v905
    %v1061 = vpack.c.b16 %v911, %v906
    %v1062 = vpack.c.b16 %v912, %v907
    %v1063 = vpack.c.b16 %v913, %v908
    %v1064 = vpack.c.b16 %v919, %v914
    %v1065 = vpack.c.b16 %v920, %v915
    %v1066 = vpack.c.b16 %v921, %v916
    %v1067 = vpack.c.b16 %v922, %v917
    %v1068 = vpack.c.b16 %v923, %v918
    %v1069 = vpack.c.b16 %v929, %v924
    %v1070 = vpack.c.b16 %v930, %v925
    %v1071 = vpack.c.b16 %v931, %v926
    %v1072 = vpack.c.b16 %v932, %v927
    %v1073 = vpack.c.b16 %v933, %v928
    %v1074 = vpack.c.b16 %v939, %v934
    %v1075 = vpack.c.b16 %v940, %v935
    %v1076 = vpack.c.b16 %v941, %v936
    %v1077 = vpack.c.b16 %v942, %v937
    %v1078 = vpack.c.b16 %v943, %v938
    %v1079 = vpack.c.b16 %v949, %v944
    %v1080 = vpack.c.b16 %v950, %v945
    %v1081 = vpack.c.b16 %v951, %v946
    %v1082 = vpack.c.b16 %v952, %v947
    %v1083 = vpack.c.b16 %v953, %v948
    %v1084 = vpack.c.b16 %v959, %v954
    %v1085 = vpack.c.b16 %v960, %v955
    %v1086 = vpack.c.b16 %v961, %v956
    %v1087 = vpack.c.b16 %v962, %v957
    %v1088 = vpack.c.b16 %v963, %v958
    %v1089 = vpack.c.b16 %v969, %v964
    %v1090 = vpack.c.b16 %v970, %v965
    %v1091 = vpack.c.b16 %v971, %v966
    %v1092 = vpack.c.b16 %v972, %v967
    %v1093 = vpack.c.b16 %v973, %v968
    %v1094 = vpack.c.b16 %v979, %v974
    %v1095 = vpack.c.b16 %v980, %v975
    %v1096 = vpack.c.b16 %v981, %v976
    %v1097 = vpack.c.b16 %v982, %v977
    %v1098 = vpack.c.b16 %v983, %v978
    %v1099 = vpack.c.b16 %v989, %v984
    %v1100 = vpack.c.b16 %v990, %v985
    %v1101 = vpack.c.b16 %v991, %v986
    %v1102 = vpack.c.b16 %v992, %v987
    %v1103 = vpack.c.b16 %v993, %v988
    %v1104 = vpack.c.b16 %v999, %v994
    %v1105 = vpack.c.b16 %v1000, %v995
    %v1106 = vpack.c.b16 %v1001, %v996
    %v1107 = vpack.c.b16 %v1002, %v997
    %v1108 = vpack.c.b16 %v1003, %v998
    %v1109 = vpack.c.b16 %v1009, %v1004
    %v1110 = vpack.c.b16 %v1010, %v1005
    %v1111 = vpack.c.b16 %v1011, %v1006
    %v1112 = vpack.c.b16 %v1012, %v1007
    %v1113 = vpack.c.b16 %v1013, %v1008
    %v1114 = vpack.c.b16 %v1019, %v1014
    %v1115 = vpack.c.b16 %v1020, %v1015
    %v1116 = vpack.c.b16 %v1021, %v1016
    %v1117 = vpack.c.b16 %v1022, %v1017
    %v1118 = vpack.c.b16 %v1023, %v1018
    %v1119 = vpack.c.b16 %v1029, %v1024
    %v1120 = vpack.c.b16 %v1030, %v1025
    %v1121 = vpack.c.b16 %v1031, %v1026
    %v1122 = vpack.c.b16 %v1032, %v1027
    %v1123 = vpack.c.b16 %v1033, %v1028
    %v1124 = vpack.c.b16 %v1039, %v1034
    %v1125 = vpack.c.b16 %v1040, %v1035
    %v1126 = vpack.c.b16 %v1041, %v1036
    %v1127 = vpack.c.b16 %v1042, %v1037
    %v1128 = vpack.c.b16 %v1043, %v1038
    %v1129 = vpack.c.b16 %v1049, %v1044
    %v1130 = vpack.c.b16 %v1050, %v1045
    %v1131 = vpack.c.b16 %v1051, %v1046
    %v1132 = vpack.c.b16 %v1052, %v1047
    %v1133 = vpack.c.b16 %v1053, %v1048
    %1214 = vmatprep.subr.bf16.mxu0 %v1055
    %1215 = vmatpush1.bf16.msra.mxu0 %v1054
    %1216 = vmatprep.subr.bf16.mxu0 %v1060
    %1217 = vmatpush1.bf16.msra.mxu0 %v1059
    %1218 = vmatprep.subr.bf16.mxu0 %v1065
    %1219 = vmatpush1.bf16.msra.mxu0 %v1064
    %1220 = vmatprep.subr.bf16.mxu0 %v1070
    %1221 = vmatpush1.bf16.msra.mxu0 %v1069
    %1222 = vmatprep.subr.bf16.mxu0 %v1075
    %1223 = vmatpush1.bf16.msra.mxu0 %v1074
    %1224 = vmatprep.subr.bf16.mxu0 %v1080
    %1225 = vmatpush1.bf16.msra.mxu0 %v1079
    %1226 = vmatprep.subr.bf16.mxu0 %v1085
    %1227 = vmatpush1.bf16.msra.mxu0 %v1084
    %1228 = vmatprep.subr.bf16.mxu0 %v1090
    %1229 = vmatpush1.bf16.msra.mxu0 %v1089
    %1230 = vmatprep.subr.bf16.mxu0 %v1095
    %1231 = vmatpush1.bf16.msra.mxu0 %v1094
    %1232 = vmatprep.subr.bf16.mxu0 %v1100
    %1233 = vmatpush1.bf16.msra.mxu0 %v1099
    %1234 = vmatprep.subr.bf16.mxu0 %v1105
    %1235 = vmatpush1.bf16.msra.mxu0 %v1104
    %1236 = vmatprep.subr.bf16.mxu0 %v1110
    %1237 = vmatpush1.bf16.msra.mxu0 %v1109
    %1238 = vmatprep.subr.bf16.mxu0 %v1115
    %1239 = vmatpush1.bf16.msra.mxu0 %v1114
    %1240 = vmatprep.subr.bf16.mxu0 %v1120
    %1241 = vmatpush1.bf16.msra.mxu0 %v1119
    %1242 = vmatprep.subr.bf16.mxu0 %v1125
    %1243 = vmatpush1.bf16.msra.mxu0 %v1124
    %1244 = vmatprep.subr.bf16.mxu0 %v1130
    %1245 = vmatpush1.bf16.msra.mxu0 %v1129
    %1246 = vmatprep.mubr.bf16.mxu0 %v701
    %1247 = vmatmul.mubr.bf16.gmra.mrb[0].mxu0 %v700
    %v1248 = vpop.f32.mrb[0].mxu0
    %v1249 = vadd.f32 0.0, %v1248
    %v1250 = vpop.f32.mrb[0].mxu0
    %v1251 = vadd.f32 0.0, %v1250
    %v1252 = vpop.f32.mrb[0].mxu0
    %v1253 = vpop.f32.mrb[0].mxu0
    %1254 = vdwg.mxu0
    %1255 = vmatprep.subr.bf16.mxu0 %v1057
    %1256 = vmatpush1.bf16.msra.mxu0 %v1056
    %1257 = vmatprep.subr.bf16.mxu0 %v1062
    %1258 = vmatpush1.bf16.msra.mxu0 %v1061
    %1259 = vmatprep.subr.bf16.mxu0 %v1067
    %1260 = vmatpush1.bf16.msra.mxu0 %v1066
    %1261 = vmatprep.subr.bf16.mxu0 %v1072
    %1262 = vmatpush1.bf16.msra.mxu0 %v1071
    %1263 = vmatprep.subr.bf16.mxu0 %v1077
    %1264 = vmatpush1.bf16.msra.mxu0 %v1076
    %1265 = vmatprep.subr.bf16.mxu0 %v1082
    %1266 = vmatpush1.bf16.msra.mxu0 %v1081
    %1267 = vmatprep.subr.bf16.mxu0 %v1087
    %1268 = vmatpush1.bf16.msra.mxu0 %v1086
    %1269 = vmatprep.subr.bf16.mxu0 %v1092
    %1270 = vmatpush1.bf16.msra.mxu0 %v1091
    %1271 = vmatprep.subr.bf16.mxu0 %v1097
    %1272 = vmatpush1.bf16.msra.mxu0 %v1096
    %1273 = vmatprep.subr.bf16.mxu0 %v1102
    %1274 = vmatpush1.bf16.msra.mxu0 %v1101
    %1275 = vmatprep.subr.bf16.mxu0 %v1107
    %1276 = vmatpush1.bf16.msra.mxu0 %v1106
    %1277 = vmatprep.subr.bf16.mxu0 %v1112
    %1278 = vmatpush1.bf16.msra.mxu0 %v1111
    %1279 = vmatprep.subr.bf16.mxu0 %v1117
    %1280 = vmatpush1.bf16.msra.mxu0 %v1116
    %1281 = vmatprep.subr.bf16.mxu0 %v1122
    %1282 = vmatpush1.bf16.msra.mxu0 %v1121
    %1283 = vmatprep.subr.bf16.mxu0 %v1127
    %1284 = vmatpush1.bf16.msra.mxu0 %v1126
    %1285 = vmatprep.subr.bf16.mxu0 %v1132
    %1286 = vmatpush1.bf16.msra.mxu0 %v1131
    %1287 = vmatprep.mubr.bf16.mxu0 %v701
    %1288 = vmatmul.mubr.bf16.gmra.mrb[0].mxu0 %v700
    %v1289 = vpop.f32.mrb[0].mxu0
    %v1290 = vadd.f32 0.0, %v1289
    %v1291 = vpop.f32.mrb[0].mxu0
    %v1292 = vadd.f32 0.0, %v1291
    %v1293 = vpop.f32.mrb[0].mxu0
    %v1294 = vpop.f32.mrb[0].mxu0
    %1295 = vdwg.mxu0
    %1296 = vmatprep.subr.bf16.mxu0 0
    %1297 = vmatpush1.bf16.msra.mxu0 %v1058
    %1298 = vmatprep.subr.bf16.mxu0 0
    %1299 = vmatpush1.bf16.msra.mxu0 %v1063
    %1300 = vmatprep.subr.bf16.mxu0 0
    %1301 = vmatpush1.bf16.msra.mxu0 %v1068
    %1302 = vmatprep.subr.bf16.mxu0 0
    %1303 = vmatpush1.bf16.msra.mxu0 %v1073
    %1304 = vmatprep.subr.bf16.mxu0 0
    %1305 = vmatpush1.bf16.msra.mxu0 %v1078
    %1306 = vmatprep.subr.bf16.mxu0 0
    %1307 = vmatpush1.bf16.msra.mxu0 %v1083
    %1308 = vmatprep.subr.bf16.mxu0 0
    %1309 = vmatpush1.bf16.msra.mxu0 %v1088
    %1310 = vmatprep.subr.bf16.mxu0 0
    %1311 = vmatpush1.bf16.msra.mxu0 %v1093
    %1312 = vmatprep.subr.bf16.mxu0 0
    %1313 = vmatpush1.bf16.msra.mxu0 %v1098
    %1314 = vmatprep.subr.bf16.mxu0 0
    %1315 = vmatpush1.bf16.msra.mxu0 %v1103
    %1316 = vmatprep.subr.bf16.mxu0 0
    %1317 = vmatpush1.bf16.msra.mxu0 %v1108
    %1318 = vmatprep.subr.bf16.mxu0 0
    %1319 = vmatpush1.bf16.msra.mxu0 %v1113
    %1320 = vmatprep.subr.bf16.mxu0 0
    %1321 = vmatpush1.bf16.msra.mxu0 %v1118
    %1322 = vmatprep.subr.bf16.mxu0 0
    %1323 = vmatpush1.bf16.msra.mxu0 %v1123
    %1324 = vmatprep.subr.bf16.mxu0 0
    %1325 = vmatpush1.bf16.msra.mxu0 %v1128
    %1326 = vmatprep.subr.bf16.mxu0 0
    %1327 = vmatpush1.bf16.msra.mxu0 %v1133
    %1328 = vmatprep.mubr.bf16.mxu0 %v701
    %1329 = vmatmul.mubr.bf16.gmra.mrb[0].mxu0 %v700
    %v1330 = vpop.f32.mrb[0].mxu0
    %v1331 = vadd.f32 0.0, %v1330
    %v1332 = vpop.f32.mrb[0].mxu0
    %v1333 = vpop.f32.mrb[0].mxu0
    %v1334 = vpop.f32.mrb[0].mxu0
    %1335 = vdwg.mxu0
    %1337 = vrot.lane.b32.xlu0 %v1249, 64
    %v1338 = vpop.permute.xlu0 %1337
    %vm1340 = vcmask 1043968
    %1341 = vst.msk [vmem:[#allocation2] sm:$0xf] %vm1340, %v1338
    %1342 = vst.msk [vmem:[#allocation2 + $0x4] sm:$0xf] %vm1340, %v1249
    %1344 = vrot.lane.b32.xlu0 %v1251, 64
    %v1345 = vpop.permute.xlu0 %1344
    %1347 = vst.msk [vmem:[#allocation2 + $0x8] sm:$0xf] %vm1340, %v1345
    %1348 = vst.msk [vmem:[#allocation2 + $0xc] sm:$0xf] %vm1340, %v1251
    %1350 = vrot.lane.b32.xlu0 %v1290, 64
    %v1351 = vpop.permute.xlu0 %1350
    %1353 = vst.msk [vmem:[#allocation2 + $0x10] sm:$0xf] %vm1340, %v1351
    %1354 = vst.msk [vmem:[#allocation2 + $0x14] sm:$0xf] %vm1340, %v1290
    %1356 = vrot.lane.b32.xlu0 %v1292, 64
    %v1357 = vpop.permute.xlu0 %1356
    %1359 = vst.msk [vmem:[#allocation2 + $0x18] sm:$0xf] %vm1340, %v1357
    %1360 = vst.msk [vmem:[#allocation2 + $0x1c] sm:$0xf] %vm1340, %v1292
    %1362 = vrot.lane.b32.xlu0 %v1331, 64
    %v1363 = vpop.permute.xlu0 %1362
    %1365 = vst.msk [vmem:[#allocation2 + $0x20] sm:$0xf] %vm1340, %v1363
    %v1366 = vld [vmem:[%s2] sm:$0xff]
    %v1367 = vld [vmem:[#allocation2] sm:$0xff]
    %v1368 = vld [vmem:[#allocation2 + $0x8] sm:$0xff]
    %v1369 = vld [vmem:[#allocation2 + $0x10] sm:$0xff]
    %v1370 = vld [vmem:[#allocation2 + $0x18] sm:$0xff]
    %v1371 = vld [vmem:[#allocation2 + $0x20] sm:$0x1f]
    %vm1372 = vcmask 302080
    %v1374 = vsel %vm1372, %v1366, 0
    %vm1376 = vcmask 1044480
    %v1378 = vsel %vm1376, %v1371, 0
    %1380 = vmatprep.subr.mxu0 0.0
    %1381 = vmatpush1.msra.mxu0 %v1367
    %1382 = vmatprep.subr.mxu0 0.0
    %1383 = vmatpush1.msra.mxu0 %v1368
    %1384 = vmatprep.subr.mxu0 0.0
    %1385 = vmatpush1.msra.mxu0 %v1369
    %1386 = vmatprep.subr.mxu0 0.0
    %1387 = vmatpush1.msra.mxu0 %v1370
    %1388 = vmatprep.subr.mxu0 0.0
    %1389 = vmatpush1.msra.mxu0 %v1378
    %1390 = vmatprep.subr.mxu0 0.0
    %1391 = vmatpush1.msra.mxu0 0.0
    %1392 = vmatprep.subr.mxu0 0.0
    %1393 = vmatpush1.msra.mxu0 0.0
    %1394 = vmatprep.subr.mxu0 0.0
    %1395 = vmatpush1.msra.mxu0 0.0
    %1396 = vmatprep.subr.mxu0 0.0
    %1397 = vmatpush1.msra.mxu0 0.0
    %1398 = vmatprep.subr.mxu0 0.0
    %1399 = vmatpush1.msra.mxu0 0.0
    %1400 = vmatprep.subr.mxu0 0.0
    %1401 = vmatpush1.msra.mxu0 0.0
    %1402 = vmatprep.subr.mxu0 0.0
    %1403 = vmatpush1.msra.mxu0 0.0
    %1404 = vmatprep.subr.mxu0 0.0
    %1405 = vmatpush1.msra.mxu0 0.0
    %1406 = vmatprep.subr.mxu0 0.0
    %1407 = vmatpush1.msra.mxu0 0.0
    %1408 = vmatprep.subr.mxu0 0.0
    %1409 = vmatpush1.msra.mxu0 0.0
    %1410 = vmatprep.subr.mxu0 0.0
    %1411 = vmatpush1.msra.mxu0 0.0
    %1412 = vmatprep.subr.mxu0 0.0
    %1413 = vmatpush1.msra.mxu0 0.0
    %1414 = vmatprep.subr.mxu0 0.0
    %1415 = vmatpush1.msra.mxu0 0.0
    %1416 = vmatprep.subr.mxu0 0.0
    %1417 = vmatpush1.msra.mxu0 0.0
    %1418 = vmatprep.subr.mxu0 0.0
    %1419 = vmatpush1.msra.mxu0 0.0
    %1420 = vmatprep.subr.mxu0 0.0
    %1421 = vmatpush1.msra.mxu0 0.0
    %1422 = vmatprep.subr.mxu0 0.0
    %1423 = vmatpush1.msra.mxu0 0.0
    %1424 = vmatprep.subr.mxu0 0.0
    %1425 = vmatpush1.msra.mxu0 0.0
    %1426 = vmatprep.subr.mxu0 0.0
    %1427 = vmatpush1.msra.mxu0 0.0
    %1428 = vmatprep.subr.mxu0 0.0
    %1429 = vmatpush1.msra.mxu0 0.0
    %1430 = vmatprep.subr.mxu0 0.0
    %1431 = vmatpush1.msra.mxu0 0.0
    %1432 = vmatprep.subr.mxu0 0.0
    %1433 = vmatpush1.msra.mxu0 0.0
    %1434 = vmatprep.subr.mxu0 0.0
    %1435 = vmatpush1.msra.mxu0 0.0
    %1436 = vmatprep.subr.mxu0 0.0
    %1437 = vmatpush1.msra.mxu0 0.0
    %1438 = vmatprep.subr.mxu0 0.0
    %1439 = vmatpush1.msra.mxu0 0.0
    %1440 = vmatprep.subr.mxu0 0.0
    %1441 = vmatpush1.msra.mxu0 0.0
    %1442 = vmatprep.subr.mxu0 0.0
    %1443 = vmatpush1.msra.mxu0 0.0
    %1444 = vmatprep.mubr.f32.mxu0 0.0
    %1445 = vmatmul.mubr.f32.gmra.mrb[0].mxu0 %v1374
    %v1446 = vpop.f32.mrb[0].mxu0
    %v1447 = vadd.f32 0.0, %v1446
    %v1448 = vpop.f32.mrb[0].mxu0
    %1449 = vdwg.mxu0
    %v1450 = vmax.f32 %v1447, 0.0
    %v1451 = vpack.c.bf16 %v1450, %v1450
    %1452 = vst [vmem:[#allocation4] sm:$0xf] %v1451
    %vm1453 = vcmask 253952
    %1454 = vst.msk [vmem:[#allocation3 + $0x48] sm:$0x1] %vm1453, 1.0
    %v1455 = vld [vmem:[#allocation4] sm:$0xf]
    %v1456 = vld [vmem:[%s3] sm:$0xff]
    %v1457 = vld [vmem:[%s3 + $0x8] sm:$0xff]
    %v1458 = vld [vmem:[%s3 + $0x10] sm:$0xff]
    %v1459 = vld [vmem:[%s3 + $0x18] sm:$0xff]
    %v1460 = vld [vmem:[%s3 + $0x20] sm:$0xff]
    %v1461 = vld [vmem:[%s3 + $0x28] sm:$0xff]
    %v1462 = vld [vmem:[%s3 + $0x30] sm:$0xff]
    %v1463 = vld [vmem:[%s3 + $0x38] sm:$0xff]
    %v1472 = vunpack.c.l.b16 %v1456
    %v1473 = vunpack.c.h.b16 %v1456
    %v1474 = vunpack.c.l.b16 %v1457
    %v1475 = vunpack.c.h.b16 %v1457
    %v1476 = vunpack.c.l.b16 %v1458
    %v1477 = vunpack.c.h.b16 %v1458
    %v1478 = vunpack.c.l.b16 %v1459
    %v1479 = vunpack.c.h.b16 %v1459
    %v1480 = vunpack.c.l.b16 %v1460
    %v1481 = vunpack.c.h.b16 %v1460
    %v1482 = vunpack.c.l.b16 %v1461
    %v1483 = vunpack.c.h.b16 %v1461
    %v1484 = vunpack.c.l.b16 %v1462
    %v1485 = vunpack.c.h.b16 %v1462
    %v1486 = vunpack.c.l.b16 %v1463
    %v1487 = vunpack.c.h.b16 %v1463
    %v1488 = vpack.c.b16 %v1474, %v1472
    %v1489 = vpack.c.b16 %v1475, %v1473
    %v1490 = vpack.c.b16 %v1478, %v1476
    %v1491 = vpack.c.b16 %v1479, %v1477
    %v1492 = vpack.c.b16 %v1482, %v1480
    %v1493 = vpack.c.b16 %v1483, %v1481
    %v1494 = vpack.c.b16 %v1486, %v1484
    %v1495 = vpack.c.b16 %v1487, %v1485
    %vm1504 = vcmask 523264
    %v1506 = vsel %vm1504, %v1455, 0
    %1508 = vmatprep.subr.bf16.mxu0 %v1489
    %1509 = vmatpush1.bf16.msra.mxu0 %v1488
    %1510 = vmatprep.subr.bf16.mxu0 %v1491
    %1511 = vmatpush1.bf16.msra.mxu0 %v1490
    %1512 = vmatprep.subr.bf16.mxu0 %v1493
    %1513 = vmatpush1.bf16.msra.mxu0 %v1492
    %1514 = vmatprep.subr.bf16.mxu0 %v1495
    %1515 = vmatpush1.bf16.msra.mxu0 %v1494
    %1516 = vmatprep.subr.bf16.mxu0 0
    %1517 = vmatpush1.bf16.msra.mxu0 0
    %1518 = vmatprep.subr.bf16.mxu0 0
    %1519 = vmatpush1.bf16.msra.mxu0 0
    %1520 = vmatprep.subr.bf16.mxu0 0
    %1521 = vmatpush1.bf16.msra.mxu0 0
    %1522 = vmatprep.subr.bf16.mxu0 0
    %1523 = vmatpush1.bf16.msra.mxu0 0
    %1524 = vmatprep.subr.bf16.mxu0 0
    %1525 = vmatpush1.bf16.msra.mxu0 0
    %1526 = vmatprep.subr.bf16.mxu0 0
    %1527 = vmatpush1.bf16.msra.mxu0 0
    %1528 = vmatprep.subr.bf16.mxu0 0
    %1529 = vmatpush1.bf16.msra.mxu0 0
    %1530 = vmatprep.subr.bf16.mxu0 0
    %1531 = vmatpush1.bf16.msra.mxu0 0
    %1532 = vmatprep.subr.bf16.mxu0 0
    %1533 = vmatpush1.bf16.msra.mxu0 0
    %1534 = vmatprep.subr.bf16.mxu0 0
    %1535 = vmatpush1.bf16.msra.mxu0 0
    %1536 = vmatprep.subr.bf16.mxu0 0
    %1537 = vmatpush1.bf16.msra.mxu0 0
    %1538 = vmatprep.subr.bf16.mxu0 0
    %1539 = vmatpush1.bf16.msra.mxu0 0
    %1540 = vmatprep.mubr.bf16.mxu0 0
    %1541 = vmatmul.mubr.bf16.gmra.mrb[0].mxu0 %v1506
    %v1542 = vpop.f32.mrb[0].mxu0
    %v1543 = vadd.f32 0.0, %v1542
    %v1544 = vpop.f32.mrb[0].mxu0
    %v1545 = vadd.f32 0.0, %v1544
    %v1546 = vpop.f32.mrb[0].mxu0
    %v1547 = vpop.f32.mrb[0].mxu0
    %1548 = vdwg.mxu0
    %vm1549 = vcmask 130048
    %1550 = vst.msk [vmem:[#allocation3] sm:$0xff] %vm1549, %v1543
    %1552 = vrot.lane.b32.xlu0 %v1543, 112
    %v1553 = vpop.permute.xlu0 %1552
    %1555 = vst.msk [vmem:[#allocation3 + $0x8] sm:$0xff] %vm1549, %v1553
    %1556 = vrot.lane.b32.xlu0 %v1543, 96
    %v1557 = vpop.permute.xlu0 %1556
    %1559 = vst.msk [vmem:[#allocation3 + $0x10] sm:$0xff] %vm1549, %v1557
    %1560 = vrot.lane.b32.xlu0 %v1543, 80
    %v1561 = vpop.permute.xlu0 %1560
    %1563 = vst.msk [vmem:[#allocation3 + $0x18] sm:$0xff] %vm1549, %v1561
    %1564 = vrot.lane.b32.xlu0 %v1543, 64
    %v1565 = vpop.permute.xlu0 %1564
    %1567 = vst.msk [vmem:[#allocation3 + $0x20] sm:$0xff] %vm1549, %v1565
    %1568 = vrot.lane.b32.xlu0 %v1543, 48
    %v1569 = vpop.permute.xlu0 %1568
    %1571 = vst.msk [vmem:[#allocation3 + $0x28] sm:$0xff] %vm1549, %v1569
    %1572 = vrot.lane.b32.xlu0 %v1543, 32
    %v1573 = vpop.permute.xlu0 %1572
    %1575 = vst.msk [vmem:[#allocation3 + $0x30] sm:$0xff] %vm1549, %v1573
    %1576 = vrot.lane.b32.xlu0 %v1543, 16
    %v1577 = vpop.permute.xlu0 %1576
    %1579 = vst.msk [vmem:[#allocation3 + $0x38] sm:$0xff] %vm1549, %v1577
    %1580 = vst.msk [vmem:[#allocation3 + $0x40] sm:$0xff] %vm1549, %v1545
    %v1581 = vld [vmem:[#allocation4] sm:$0xf]
    %v1582 = vld [vmem:[%s3] sm:$0xff]
    %v1583 = vld [vmem:[%s3 + $0x8] sm:$0xff]
    %v1584 = vld [vmem:[%s3 + $0x10] sm:$0xff]
    %v1585 = vld [vmem:[%s3 + $0x18] sm:$0xff]
    %v1586 = vld [vmem:[%s3 + $0x20] sm:$0xff]
    %v1587 = vld [vmem:[%s3 + $0x28] sm:$0xff]
    %v1588 = vld [vmem:[%s3 + $0x30] sm:$0xff]
    %v1589 = vld [vmem:[%s3 + $0x38] sm:$0xff]
    %v1591 = vunpack.c.l.b16 %v1581
    %v1592 = vpack.c.b16 %v1591, %v1591
    %1593 = vrot.lane.b32.xlu0 %v1592, 64
    %v1594 = vpop.permute.xlu0 %1593
    %v1603 = vunpack.c.l.b16 %v1582
    %v1604 = vunpack.c.h.b16 %v1582
    %v1605 = vunpack.c.l.b16 %v1583
    %v1606 = vunpack.c.h.b16 %v1583
    %v1607 = vunpack.c.l.b16 %v1584
    %v1608 = vunpack.c.h.b16 %v1584
    %v1609 = vunpack.c.l.b16 %v1585
    %v1610 = vunpack.c.h.b16 %v1585
    %v1611 = vunpack.c.l.b16 %v1586
    %v1612 = vunpack.c.h.b16 %v1586
    %v1613 = vunpack.c.l.b16 %v1587
    %v1614 = vunpack.c.h.b16 %v1587
    %v1615 = vunpack.c.l.b16 %v1588
    %v1616 = vunpack.c.h.b16 %v1588
    %v1617 = vunpack.c.l.b16 %v1589
    %v1618 = vunpack.c.h.b16 %v1589
    %v1619 = vpack.c.b16 %v1605, %v1603
    %v1620 = vpack.c.b16 %v1606, %v1604
    %v1621 = vpack.c.b16 %v1609, %v1607
    %v1622 = vpack.c.b16 %v1610, %v1608
    %v1623 = vpack.c.b16 %v1613, %v1611
    %v1624 = vpack.c.b16 %v1614, %v1612
    %v1625 = vpack.c.b16 %v1617, %v1615
    %v1626 = vpack.c.b16 %v1618, %v1616
    %v1636 = vsel %vm1504, %v1594, 0
    %1638 = vmatprep.subr.bf16.mxu0 %v1620
    %1639 = vmatpush1.bf16.msra.mxu0 %v1619
    %1640 = vmatprep.subr.bf16.mxu0 %v1622
    %1641 = vmatpush1.bf16.msra.mxu0 %v1621
    %1642 = vmatprep.subr.bf16.mxu0 %v1624
    %1643 = vmatpush1.bf16.msra.mxu0 %v1623
    %1644 = vmatprep.subr.bf16.mxu0 %v1626
    %1645 = vmatpush1.bf16.msra.mxu0 %v1625
    %1646 = vmatprep.subr.bf16.mxu0 0
    %1647 = vmatpush1.bf16.msra.mxu0 0
    %1648 = vmatprep.subr.bf16.mxu0 0
    %1649 = vmatpush1.bf16.msra.mxu0 0
    %1650 = vmatprep.subr.bf16.mxu0 0
    %1651 = vmatpush1.bf16.msra.mxu0 0
    %1652 = vmatprep.subr.bf16.mxu0 0
    %1653 = vmatpush1.bf16.msra.mxu0 0
    %1654 = vmatprep.subr.bf16.mxu0 0
    %1655 = vmatpush1.bf16.msra.mxu0 0
    %1656 = vmatprep.subr.bf16.mxu0 0
    %1657 = vmatpush1.bf16.msra.mxu0 0
    %1658 = vmatprep.subr.bf16.mxu0 0
    %1659 = vmatpush1.bf16.msra.mxu0 0
    %1660 = vmatprep.subr.bf16.mxu0 0
    %1661 = vmatpush1.bf16.msra.mxu0 0
    %1662 = vmatprep.subr.bf16.mxu0 0
    %1663 = vmatpush1.bf16.msra.mxu0 0
    %1664 = vmatprep.subr.bf16.mxu0 0
    %1665 = vmatpush1.bf16.msra.mxu0 0
    %1666 = vmatprep.subr.bf16.mxu0 0
    %1667 = vmatpush1.bf16.msra.mxu0 0
    %1668 = vmatprep.subr.bf16.mxu0 0
    %1669 = vmatpush1.bf16.msra.mxu0 0
    %1670 = vmatprep.mubr.bf16.mxu0 0
    %1671 = vmatmul.mubr.bf16.gmra.mrb[0].mxu0 %v1636
    %v1672 = vpop.f32.mrb[0].mxu0
    %v1673 = vadd.f32 0.0, %v1672
    %v1674 = vpop.f32.mrb[0].mxu0
    %v1675 = vadd.f32 0.0, %v1674
    %v1676 = vpop.f32.mrb[0].mxu0
    %v1677 = vpop.f32.mrb[0].mxu0
    %1678 = vdwg.mxu0
    %1680 = vrot.lane.b32.xlu0 %v1673, 16
    %v1681 = vpop.permute.xlu0 %1680
    %vm1683 = vcmask 261248
    %1684 = vst.msk [vmem:[#allocation3] sm:$0xff] %vm1683, %v1681
    %1685 = vst.msk [vmem:[#allocation3 + $0x8] sm:$0xff] %vm1683, %v1673
    %1686 = vrot.lane.b32.xlu0 %v1673, 112
    %v1687 = vpop.permute.xlu0 %1686
    %1689 = vst.msk [vmem:[#allocation3 + $0x10] sm:$0xff] %vm1683, %v1687
    %1690 = vrot.lane.b32.xlu0 %v1673, 96
    %v1691 = vpop.permute.xlu0 %1690
    %1693 = vst.msk [vmem:[#allocation3 + $0x18] sm:$0xff] %vm1683, %v1691
    %1694 = vrot.lane.b32.xlu0 %v1673, 80
    %v1695 = vpop.permute.xlu0 %1694
    %1697 = vst.msk [vmem:[#allocation3 + $0x20] sm:$0xff] %vm1683, %v1695
    %1698 = vrot.lane.b32.xlu0 %v1673, 64
    %v1699 = vpop.permute.xlu0 %1698
    %1701 = vst.msk [vmem:[#allocation3 + $0x28] sm:$0xff] %vm1683, %v1699
    %1702 = vrot.lane.b32.xlu0 %v1673, 48
    %v1703 = vpop.permute.xlu0 %1702
    %1705 = vst.msk [vmem:[#allocation3 + $0x30] sm:$0xff] %vm1683, %v1703
    %1706 = vrot.lane.b32.xlu0 %v1673, 32
    %v1707 = vpop.permute.xlu0 %1706
    %1709 = vst.msk [vmem:[#allocation3 + $0x38] sm:$0xff] %vm1683, %v1707
    %1711 = vrot.lane.b32.xlu0 %v1675, 16
    %v1712 = vpop.permute.xlu0 %1711
    %1714 = vst.msk [vmem:[#allocation3 + $0x40] sm:$0xff] %vm1683, %v1712
    %v1715 = vld [vmem:[%s4] sm:$0xff]
    %v1716 = vld [vmem:[%s4 + $0x8] sm:$0xff]
    %v1717 = vld [vmem:[#allocation3] sm:$0xff]
    %v1718 = vld [vmem:[#allocation3 + $0x8] sm:$0xff]
    %v1719 = vld [vmem:[#allocation3 + $0x10] sm:$0xff]
    %v1720 = vld [vmem:[#allocation3 + $0x18] sm:$0xff]
    %v1721 = vld [vmem:[#allocation3 + $0x20] sm:$0xff]
    %v1722 = vld [vmem:[#allocation3 + $0x28] sm:$0xff]
    %v1723 = vld [vmem:[#allocation3 + $0x30] sm:$0xff]
    %v1724 = vld [vmem:[#allocation3 + $0x38] sm:$0xff]
    %v1725 = vld [vmem:[#allocation3 + $0x40] sm:$0xff]
    %v1726 = vld [vmem:[#allocation3 + $0x48] sm:$0x1]
    %vm1727 = vcmask 596992
    %v1729 = vsel %vm1727, %v1715, 0
    %v1732 = vsel %vm1727, %v1716, 0
    %vm1734 = vcmask 1040384
    %v1736 = vsel %vm1734, %v1726, 0
    %1738 = vmatprep.subr.mxu0 0.0
    %1739 = vmatpush1.msra.mxu0 %v1717
    %1740 = vmatprep.subr.mxu0 0.0
    %1741 = vmatpush1.msra.mxu0 %v1718
    %1742 = vmatprep.subr.mxu0 0.0
    %1743 = vmatpush1.msra.mxu0 %v1719
    %1744 = vmatprep.subr.mxu0 0.0
    %1745 = vmatpush1.msra.mxu0 %v1720
    %1746 = vmatprep.subr.mxu0 0.0
    %1747 = vmatpush1.msra.mxu0 %v1721
    %1748 = vmatprep.subr.mxu0 0.0
    %1749 = vmatpush1.msra.mxu0 %v1722
    %1750 = vmatprep.subr.mxu0 0.0
    %1751 = vmatpush1.msra.mxu0 %v1723
    %1752 = vmatprep.subr.mxu0 0.0
    %1753 = vmatpush1.msra.mxu0 %v1724
    %1754 = vmatprep.subr.mxu0 0.0
    %1755 = vmatpush1.msra.mxu0 %v1725
    %1756 = vmatprep.subr.mxu0 0.0
    %1757 = vmatpush1.msra.mxu0 %v1736
    %1758 = vmatprep.subr.mxu0 0.0
    %1759 = vmatpush1.msra.mxu0 0.0
    %1760 = vmatprep.subr.mxu0 0.0
    %1761 = vmatpush1.msra.mxu0 0.0
    %1762 = vmatprep.subr.mxu0 0.0
    %1763 = vmatpush1.msra.mxu0 0.0
    %1764 = vmatprep.subr.mxu0 0.0
    %1765 = vmatpush1.msra.mxu0 0.0
    %1766 = vmatprep.subr.mxu0 0.0
    %1767 = vmatpush1.msra.mxu0 0.0
    %1768 = vmatprep.subr.mxu0 0.0
    %1769 = vmatpush1.msra.mxu0 0.0
    %1770 = vmatprep.subr.mxu0 0.0
    %1771 = vmatpush1.msra.mxu0 0.0
    %1772 = vmatprep.subr.mxu0 0.0
    %1773 = vmatpush1.msra.mxu0 0.0
    %1774 = vmatprep.subr.mxu0 0.0
    %1775 = vmatpush1.msra.mxu0 0.0
    %1776 = vmatprep.subr.mxu0 0.0
    %1777 = vmatpush1.msra.mxu0 0.0
    %1778 = vmatprep.subr.mxu0 0.0
    %1779 = vmatpush1.msra.mxu0 0.0
    %1780 = vmatprep.subr.mxu0 0.0
    %1781 = vmatpush1.msra.mxu0 0.0
    %1782 = vmatprep.subr.mxu0 0.0
    %1783 = vmatpush1.msra.mxu0 0.0
    %1784 = vmatprep.subr.mxu0 0.0
    %1785 = vmatpush1.msra.mxu0 0.0
    %1786 = vmatprep.subr.mxu0 0.0
    %1787 = vmatpush1.msra.mxu0 0.0
    %1788 = vmatprep.subr.mxu0 0.0
    %1789 = vmatpush1.msra.mxu0 0.0
    %1790 = vmatprep.subr.mxu0 0.0
    %1791 = vmatpush1.msra.mxu0 0.0
    %1792 = vmatprep.subr.mxu0 0.0
    %1793 = vmatpush1.msra.mxu0 0.0
    %1794 = vmatprep.subr.mxu0 0.0
    %1795 = vmatpush1.msra.mxu0 0.0
    %1796 = vmatprep.subr.mxu0 0.0
    %1797 = vmatpush1.msra.mxu0 0.0
    %1798 = vmatprep.subr.mxu0 0.0
    %1799 = vmatpush1.msra.mxu0 0.0
    %1800 = vmatprep.subr.mxu0 0.0
    %1801 = vmatpush1.msra.mxu0 0.0
    %1802 = vmatprep.mubr.f32.mxu0 0.0
    %1803 = vmatmul.mubr.f32.gmra.mrb[0].mxu0 %v1729
    %v1804 = vpop.f32.mrb[0].mxu0
    %v1805 = vadd.f32 0.0, %v1804
    %v1806 = vpop.f32.mrb[0].mxu0
    %1807 = vmatprep.mubr.f32.mxu0 0.0
    %1808 = vmatmul.mubr.f32.gmra.mrb[0].mxu0 %v1732
    %v1809 = vpop.f32.mrb[0].mxu0
    %v1810 = vadd.f32 0.0, %v1809
    %v1811 = vpop.f32.mrb[0].mxu0
    %1812 = vdwg.mxu0
    %v1813 = vmax.f32 %v1805, 0.0
    %v1814 = vmax.f32 %v1810, 0.0
    %vm1815 = vcmask 261120
    %1816 = vst.msk [vmem:[#allocation5] sm:$0xff] %vm1815, %v1813
    %1817 = vst.msk [vmem:[#allocation5 + $0x8] sm:$0xff] %vm1815, %v1814
    %1818 = vst.msk [vmem:[#allocation5 + $0x10] sm:$0x1] %vm1453, 1.0
    %v1819 = vld [vmem:[%s5] sm:$0x3]
    %v1820 = vld [vmem:[#allocation5] sm:$0xff]
    %v1821 = vld [vmem:[#allocation5 + $0x8] sm:$0xff]
    %v1822 = vld [vmem:[#allocation5 + $0x10] sm:$0x1]
    %vm1823 = vcmask 138240
    %v1825 = vsel %vm1823, %v1819, 0
    %v1828 = vsel %vm1734, %v1822, 0
    %1830 = vmatprep.subr.mxu0 0.0
    %1831 = vmatpush1.msra.mxu0 %v1820
    %1832 = vmatprep.subr.mxu0 0.0
    %1833 = vmatpush1.msra.mxu0 %v1821
    %1834 = vmatprep.subr.mxu0 0.0
    %1835 = vmatpush1.msra.mxu0 %v1828
    %1836 = vmatprep.subr.mxu0 0.0
    %1837 = vmatpush1.msra.mxu0 0.0
    %1838 = vmatprep.subr.mxu0 0.0
    %1839 = vmatpush1.msra.mxu0 0.0
    %1840 = vmatprep.subr.mxu0 0.0
    %1841 = vmatpush1.msra.mxu0 0.0
    %1842 = vmatprep.subr.mxu0 0.0
    %1843 = vmatpush1.msra.mxu0 0.0
    %1844 = vmatprep.subr.mxu0 0.0
    %1845 = vmatpush1.msra.mxu0 0.0
    %1846 = vmatprep.subr.mxu0 0.0
    %1847 = vmatpush1.msra.mxu0 0.0
    %1848 = vmatprep.subr.mxu0 0.0
    %1849 = vmatpush1.msra.mxu0 0.0
    %1850 = vmatprep.subr.mxu0 0.0
    %1851 = vmatpush1.msra.mxu0 0.0
    %1852 = vmatprep.subr.mxu0 0.0
    %1853 = vmatpush1.msra.mxu0 0.0
    %1854 = vmatprep.subr.mxu0 0.0
    %1855 = vmatpush1.msra.mxu0 0.0
    %1856 = vmatprep.subr.mxu0 0.0
    %1857 = vmatpush1.msra.mxu0 0.0
    %1858 = vmatprep.subr.mxu0 0.0
    %1859 = vmatpush1.msra.mxu0 0.0
    %1860 = vmatprep.subr.mxu0 0.0
    %1861 = vmatpush1.msra.mxu0 0.0
    %1862 = vmatprep.subr.mxu0 0.0
    %1863 = vmatpush1.msra.mxu0 0.0
    %1864 = vmatprep.subr.mxu0 0.0
    %1865 = vmatpush1.msra.mxu0 0.0
    %1866 = vmatprep.subr.mxu0 0.0
    %1867 = vmatpush1.msra.mxu0 0.0
    %1868 = vmatprep.subr.mxu0 0.0
    %1869 = vmatpush1.msra.mxu0 0.0
    %1870 = vmatprep.subr.mxu0 0.0
    %1871 = vmatpush1.msra.mxu0 0.0
    %1872 = vmatprep.subr.mxu0 0.0
    %1873 = vmatpush1.msra.mxu0 0.0
    %1874 = vmatprep.subr.mxu0 0.0
    %1875 = vmatpush1.msra.mxu0 0.0
    %1876 = vmatprep.subr.mxu0 0.0
    %1877 = vmatpush1.msra.mxu0 0.0
    %1878 = vmatprep.subr.mxu0 0.0
    %1879 = vmatpush1.msra.mxu0 0.0
    %1880 = vmatprep.subr.mxu0 0.0
    %1881 = vmatpush1.msra.mxu0 0.0
    %1882 = vmatprep.subr.mxu0 0.0
    %1883 = vmatpush1.msra.mxu0 0.0
    %1884 = vmatprep.subr.mxu0 0.0
    %1885 = vmatpush1.msra.mxu0 0.0
    %1886 = vmatprep.subr.mxu0 0.0
    %1887 = vmatpush1.msra.mxu0 0.0
    %1888 = vmatprep.subr.mxu0 0.0
    %1889 = vmatpush1.msra.mxu0 0.0
    %1890 = vmatprep.subr.mxu0 0.0
    %1891 = vmatpush1.msra.mxu0 0.0
    %1892 = vmatprep.subr.mxu0 0.0
    %1893 = vmatpush1.msra.mxu0 0.0
    %1894 = vmatprep.mubr.f32.mxu0 0.0
    %1895 = vmatmul.mubr.f32.gmra.mrb[0].mxu0 %v1825
    %v1896 = vpop.f32.mrb[0].mxu0
    %v1897 = vadd.f32 0.0, %v1896
    %v1898 = vpop.f32.mrb[0].mxu0
    %1899 = vdwg.mxu0
    %v1900 = vld [vmem:[%s6] sm:$0xff]
    %v1901 = vld [vmem:[%s6 + $0x8] sm:$0xff]
    %v1902 = vld [vmem:[%s6 + $0x10] sm:$0xff]
    %v1903 = vld [vmem:[%s6 + $0x18] sm:$0xff]
    %v1905 = vsel %vm1549, %v1897, 0
    %1907 = vmatprep.subr.mxu0 %v1901
    %1908 = vmatpush1.msra.mxu0 %v1900
    %1909 = vmatprep.subr.mxu0 %v1903
    %1910 = vmatpush1.msra.mxu0 %v1902
    %1911 = vmatprep.subr.mxu0 0.0
    %1912 = vmatpush1.msra.mxu0 0.0
    %1913 = vmatprep.subr.mxu0 0.0
    %1914 = vmatpush1.msra.mxu0 0.0
    %1915 = vmatprep.subr.mxu0 0.0
    %1916 = vmatpush1.msra.mxu0 0.0
    %1917 = vmatprep.subr.mxu0 0.0
    %1918 = vmatpush1.msra.mxu0 0.0
    %1919 = vmatprep.subr.mxu0 0.0
    %1920 = vmatpush1.msra.mxu0 0.0
    %1921 = vmatprep.subr.mxu0 0.0
    %1922 = vmatpush1.msra.mxu0 0.0
    %1923 = vmatprep.subr.mxu0 0.0
    %1924 = vmatpush1.msra.mxu0 0.0
    %1925 = vmatprep.subr.mxu0 0.0
    %1926 = vmatpush1.msra.mxu0 0.0
    %1927 = vmatprep.subr.mxu0 0.0
    %1928 = vmatpush1.msra.mxu0 0.0
    %1929 = vmatprep.subr.mxu0 0.0
    %1930 = vmatpush1.msra.mxu0 0.0
    %1931 = vmatprep.subr.mxu0 0.0
    %1932 = vmatpush1.msra.mxu0 0.0
    %1933 = vmatprep.subr.mxu0 0.0
    %1934 = vmatpush1.msra.mxu0 0.0
    %1935 = vmatprep.subr.mxu0 0.0
    %1936 = vmatpush1.msra.mxu0 0.0
    %1937 = vmatprep.subr.mxu0 0.0
    %1938 = vmatpush1.msra.mxu0 0.0
    %1939 = vmatprep.subr.mxu0 0.0
    %1940 = vmatpush1.msra.mxu0 0.0
    %1941 = vmatprep.subr.mxu0 0.0
    %1942 = vmatpush1.msra.mxu0 0.0
    %1943 = vmatprep.subr.mxu0 0.0
    %1944 = vmatpush1.msra.mxu0 0.0
    %1945 = vmatprep.subr.mxu0 0.0
    %1946 = vmatpush1.msra.mxu0 0.0
    %1947 = vmatprep.subr.mxu0 0.0
    %1948 = vmatpush1.msra.mxu0 0.0
    %1949 = vmatprep.subr.mxu0 0.0
    %1950 = vmatpush1.msra.mxu0 0.0
    %1951 = vmatprep.subr.mxu0 0.0
    %1952 = vmatpush1.msra.mxu0 0.0
    %1953 = vmatprep.subr.mxu0 0.0
    %1954 = vmatpush1.msra.mxu0 0.0
    %1955 = vmatprep.subr.mxu0 0.0
    %1956 = vmatpush1.msra.mxu0 0.0
    %1957 = vmatprep.subr.mxu0 0.0
    %1958 = vmatpush1.msra.mxu0 0.0
    %1959 = vmatprep.subr.mxu0 0.0
    %1960 = vmatpush1.msra.mxu0 0.0
    %1961 = vmatprep.subr.mxu0 0.0
    %1962 = vmatpush1.msra.mxu0 0.0
    %1963 = vmatprep.subr.mxu0 0.0
    %1964 = vmatpush1.msra.mxu0 0.0
    %1965 = vmatprep.subr.mxu0 0.0
    %1966 = vmatpush1.msra.mxu0 0.0
    %1967 = vmatprep.subr.mxu0 0.0
    %1968 = vmatpush1.msra.mxu0 0.0
    %1969 = vmatprep.subr.mxu0 0.0
    %1970 = vmatpush1.msra.mxu0 0.0
    %1971 = vmatprep.mubr.f32.mxu0 0.0
    %1972 = vmatmul.mubr.f32.gmra.mrb[0].mxu0 %v1905
    %v1973 = vpop.f32.mrb[0].mxu0
    %v1974 = vadd.f32 0.0, %v1973
    %v1975 = vpop.f32.mrb[0].mxu0
    %v1976 = vadd.f32 0.0, %v1975
    %1977 = vdwg.mxu0
    %v1980 = vcombine.low %v1974, %v1976
    %v1982 = vunpack.c.l.s4 1983009808
    %v1983 = vunpack.c.0.s8 %v1982
    %v1984 = vlaneseq
    %v1985 = vshrl.u32 %v1984, 7
    %v1986 = vsub.s32 %v1983, %v1985
    %v1987 = vrot.slane %v1980, %v1986
    %1989 = vst [vmem:[#allocation6] sm:$0xf] %v1987
    %v1990 = vld [vmem:[%s5] sm:$0x3]
    %v1991 = vld [vmem:[#allocation5] sm:$0xff]
    %v1992 = vld [vmem:[#allocation5 + $0x8] sm:$0xff]
    %v1993 = vld [vmem:[#allocation5 + $0x10] sm:$0x1]
    %1997 = vrot.lane.b32.xlu0 %v1991, 112
    %v1998 = vpop.permute.xlu0 %1997
    %1999 = vrot.lane.b32.xlu0 %v1992, 112
    %v2000 = vpop.permute.xlu0 %1999
    %2001 = vrot.lane.b32.xlu0 %v1993, 112
    %v2002 = vpop.permute.xlu0 %2001
    %v2006 = vsel %vm1823, %v1990, 0
    %v2008 = vsel %vm1734, %v2002, 0
    %2010 = vmatprep.subr.mxu0 0.0
    %2011 = vmatpush1.msra.mxu0 %v1998
    %2012 = vmatprep.subr.mxu0 0.0
    %2013 = vmatpush1.msra.mxu0 %v2000
    %2014 = vmatprep.subr.mxu0 0.0
    %2015 = vmatpush1.msra.mxu0 %v2008
    %2016 = vmatprep.subr.mxu0 0.0
    %2017 = vmatpush1.msra.mxu0 0.0
    %2018 = vmatprep.subr.mxu0 0.0
    %2019 = vmatpush1.msra.mxu0 0.0
    %2020 = vmatprep.subr.mxu0 0.0
    %2021 = vmatpush1.msra.mxu0 0.0
    %2022 = vmatprep.subr.mxu0 0.0
    %2023 = vmatpush1.msra.mxu0 0.0
    %2024 = vmatprep.subr.mxu0 0.0
    %2025 = vmatpush1.msra.mxu0 0.0
    %2026 = vmatprep.subr.mxu0 0.0
    %2027 = vmatpush1.msra.mxu0 0.0
    %2028 = vmatprep.subr.mxu0 0.0
    %2029 = vmatpush1.msra.mxu0 0.0
    %2030 = vmatprep.subr.mxu0 0.0
    %2031 = vmatpush1.msra.mxu0 0.0
    %2032 = vmatprep.subr.mxu0 0.0
    %2033 = vmatpush1.msra.mxu0 0.0
    %2034 = vmatprep.subr.mxu0 0.0
    %2035 = vmatpush1.msra.mxu0 0.0
    %2036 = vmatprep.subr.mxu0 0.0
    %2037 = vmatpush1.msra.mxu0 0.0
    %2038 = vmatprep.subr.mxu0 0.0
    %2039 = vmatpush1.msra.mxu0 0.0
    %2040 = vmatprep.subr.mxu0 0.0
    %2041 = vmatpush1.msra.mxu0 0.0
    %2042 = vmatprep.subr.mxu0 0.0
    %2043 = vmatpush1.msra.mxu0 0.0
    %2044 = vmatprep.subr.mxu0 0.0
    %2045 = vmatpush1.msra.mxu0 0.0
    %2046 = vmatprep.subr.mxu0 0.0
    %2047 = vmatpush1.msra.mxu0 0.0
    %2048 = vmatprep.subr.mxu0 0.0
    %2049 = vmatpush1.msra.mxu0 0.0
    %2050 = vmatprep.subr.mxu0 0.0
    %2051 = vmatpush1.msra.mxu0 0.0
    %2052 = vmatprep.subr.mxu0 0.0
    %2053 = vmatpush1.msra.mxu0 0.0
    %2054 = vmatprep.subr.mxu0 0.0
    %2055 = vmatpush1.msra.mxu0 0.0
    %2056 = vmatprep.subr.mxu0 0.0
    %2057 = vmatpush1.msra.mxu0 0.0
    %2058 = vmatprep.subr.mxu0 0.0
    %2059 = vmatpush1.msra.mxu0 0.0
    %2060 = vmatprep.subr.mxu0 0.0
    %2061 = vmatpush1.msra.mxu0 0.0
    %2062 = vmatprep.subr.mxu0 0.0
    %2063 = vmatpush1.msra.mxu0 0.0
    %2064 = vmatprep.subr.mxu0 0.0
    %2065 = vmatpush1.msra.mxu0 0.0
    %2066 = vmatprep.subr.mxu0 0.0
    %2067 = vmatpush1.msra.mxu0 0.0
    %2068 = vmatprep.subr.mxu0 0.0
    %2069 = vmatpush1.msra.mxu0 0.0
    %2070 = vmatprep.subr.mxu0 0.0
    %2071 = vmatpush1.msra.mxu0 0.0
    %2072 = vmatprep.subr.mxu0 0.0
    %2073 = vmatpush1.msra.mxu0 0.0
    %2074 = vmatprep.mubr.f32.mxu0 0.0
    %2075 = vmatmul.mubr.f32.gmra.mrb[0].mxu0 %v2006
    %v2076 = vpop.f32.mrb[0].mxu0
    %v2077 = vadd.f32 0.0, %v2076
    %v2078 = vpop.f32.mrb[0].mxu0
    %2079 = vdwg.mxu0
    %v2080 = vld [vmem:[%s6] sm:$0xff]
    %v2081 = vld [vmem:[%s6 + $0x8] sm:$0xff]
    %v2082 = vld [vmem:[%s6 + $0x10] sm:$0xff]
    %v2083 = vld [vmem:[%s6 + $0x18] sm:$0xff]
    %v2085 = vsel %vm1549, %v2077, 0
    %2087 = vmatprep.subr.mxu0 %v2081
    %2088 = vmatpush1.msra.mxu0 %v2080
    %2089 = vmatprep.subr.mxu0 %v2083
    %2090 = vmatpush1.msra.mxu0 %v2082
    %2091 = vmatprep.subr.mxu0 0.0
    %2092 = vmatpush1.msra.mxu0 0.0
    %2093 = vmatprep.subr.mxu0 0.0
    %2094 = vmatpush1.msra.mxu0 0.0
    %2095 = vmatprep.subr.mxu0 0.0
    %2096 = vmatpush1.msra.mxu0 0.0
    %2097 = vmatprep.subr.mxu0 0.0
    %2098 = vmatpush1.msra.mxu0 0.0
    %2099 = vmatprep.subr.mxu0 0.0
    %2100 = vmatpush1.msra.mxu0 0.0
    %2101 = vmatprep.subr.mxu0 0.0
    %2102 = vmatpush1.msra.mxu0 0.0
    %2103 = vmatprep.subr.mxu0 0.0
    %2104 = vmatpush1.msra.mxu0 0.0
    %2105 = vmatprep.subr.mxu0 0.0
    %2106 = vmatpush1.msra.mxu0 0.0
    %2107 = vmatprep.subr.mxu0 0.0
    %2108 = vmatpush1.msra.mxu0 0.0
    %2109 = vmatprep.subr.mxu0 0.0
    %2110 = vmatpush1.msra.mxu0 0.0
    %2111 = vmatprep.subr.mxu0 0.0
    %2112 = vmatpush1.msra.mxu0 0.0
    %2113 = vmatprep.subr.mxu0 0.0
    %2114 = vmatpush1.msra.mxu0 0.0
    %2115 = vmatprep.subr.mxu0 0.0
    %2116 = vmatpush1.msra.mxu0 0.0
    %2117 = vmatprep.subr.mxu0 0.0
    %2118 = vmatpush1.msra.mxu0 0.0
    %2119 = vmatprep.subr.mxu0 0.0
    %2120 = vmatpush1.msra.mxu0 0.0
    %2121 = vmatprep.subr.mxu0 0.0
    %2122 = vmatpush1.msra.mxu0 0.0
    %2123 = vmatprep.subr.mxu0 0.0
    %2124 = vmatpush1.msra.mxu0 0.0
    %2125 = vmatprep.subr.mxu0 0.0
    %2126 = vmatpush1.msra.mxu0 0.0
    %2127 = vmatprep.subr.mxu0 0.0
    %2128 = vmatpush1.msra.mxu0 0.0
    %2129 = vmatprep.subr.mxu0 0.0
    %2130 = vmatpush1.msra.mxu0 0.0
    %2131 = vmatprep.subr.mxu0 0.0
    %2132 = vmatpush1.msra.mxu0 0.0
    %2133 = vmatprep.subr.mxu0 0.0
    %2134 = vmatpush1.msra.mxu0 0.0
    %2135 = vmatprep.subr.mxu0 0.0
    %2136 = vmatpush1.msra.mxu0 0.0
    %2137 = vmatprep.subr.mxu0 0.0
    %2138 = vmatpush1.msra.mxu0 0.0
    %2139 = vmatprep.subr.mxu0 0.0
    %2140 = vmatpush1.msra.mxu0 0.0
    %2141 = vmatprep.subr.mxu0 0.0
    %2142 = vmatpush1.msra.mxu0 0.0
    %2143 = vmatprep.subr.mxu0 0.0
    %2144 = vmatpush1.msra.mxu0 0.0
    %2145 = vmatprep.subr.mxu0 0.0
    %2146 = vmatpush1.msra.mxu0 0.0
    %2147 = vmatprep.subr.mxu0 0.0
    %2148 = vmatpush1.msra.mxu0 0.0
    %2149 = vmatprep.subr.mxu0 0.0
    %2150 = vmatpush1.msra.mxu0 0.0
    %2151 = vmatprep.mubr.f32.mxu0 0.0
    %2152 = vmatmul.mubr.f32.gmra.mrb[0].mxu0 %v2085
    %v2153 = vpop.f32.mrb[0].mxu0
    %v2154 = vadd.f32 0.0, %v2153
    %v2155 = vpop.f32.mrb[0].mxu0
    %v2156 = vadd.f32 0.0, %v2155
    %2157 = vdwg.mxu0
    %v2160 = vcombine.low %v2154, %v2156
    %v2162 = vunpack.c.l.s4 1983009808
    %v2163 = vunpack.c.0.s8 %v2162
    %v2164 = vlaneseq
    %v2165 = vshrl.u32 %v2164, 7
    %v2166 = vsub.s32 %v2163, %v2165
    %v2167 = vrot.slane %v2160, %v2166
    %s2169 = scalar_lea.vmem [#allocation6], 4
    %2170 = vst [vmem:[%s2169] sm:$0xf] %v2167
    // Predicated region
    $region30: #{tpu_custom_call.1} parent=1 // pred_check
      _
    $region31: #{tpu_custom_call.1} parent=1 // pred_check_branch
      %2172 = sbr.rel (0) target = $region33
    $region32: #{tpu_custom_call.1} parent=1 // pred_region
      %s2174 = ssub.s32 128, 128
      %2175 = vsyncadd [#allocation7], %s2174
      %s2176 = sshll.u32 [#allocation6], 4
      %s2177 = int_to_ptr.vmem [resolvable:$true] %s2176
      %2182 = dma.vmem_to_hbm [thread:$0]  %s2177, 128, %s7, [#allocation7], 64, 64, 4
    $region33: #{tpu_custom_call.1} parent=1 // pred_fallthru
      _
    // Predicated region
    $region34: #{tpu_custom_call.1} parent=1 // pred_check
      _
    $region35: #{tpu_custom_call.1} parent=1 // pred_check_branch
      %2184 = sbr.rel (0) target = $region37
    $region36: #{tpu_custom_call.1} parent=1 // pred_region
      %2185 = dma.done [#allocation7], 128
    $region37: #{tpu_custom_call.1} parent=1 // pred_fallthru
      _
    %2186 = vsyncpa [#allocation7], 1

// kernel: tpu_custom_call.1
$region0: #{tpu_custom_call.1}
  #allocation0 [shape = 'u32[]', space=smem, size = 0x4, offset = 0x4, fixed_abs, tag = 'smem constant byte address 0x4 - core index']
  #allocation1 [shape = 'u32[144,128]{1,0:T(1,128)}', space=vmem, size = 0x12000, scoped, tag = 'internal scratch']
  #allocation2 [shape = 'f32[37,128]{1,0:T(8,128)}', space=vmem, size = 0x5000, scoped, tag = 'scratch operand']
  #allocation3 [shape = 'f32[73,32]{1,0:T(8,128)}', space=vmem, size = 0xa000, scoped, tag = 'scratch operand']
  #allocation4 [shape = 'bf16[8,128]{1,0:T(8,128)(2,1)}', space=vmem, size = 0x800, scoped, tag = 'scratch operand']
  #allocation5 [shape = 'f32[17,32]{1,0:T(8,128)}', space=vmem, size = 0x3000, scoped, tag = 'scratch operand']
  %s0 = inlined_call_operand.vmem [shape: f32[2,4,256], index: 0, kind: input, shape index: {}]
  %s1 = inlined_call_operand.vmem [shape: bf16[256,576], index: 1, kind: input, shape index: {}]
  %s2 = inlined_call_operand.vmem [shape: f32[8,37], index: 2, kind: input, shape index: {}]
  %s3 = inlined_call_operand.vmem [shape: bf16[64,144], index: 3, kind: input, shape index: {}]
  %s4 = inlined_call_operand.vmem [shape: f32[16,73], index: 4, kind: input, shape index: {}]
  %s5 = inlined_call_operand.vmem [shape: f32[2,17], index: 5, kind: input, shape index: {}]
  %s6 = inlined_call_operand.vmem [shape: f32[16,256], index: 6, kind: input, shape index: {}]
  %s7 = inlined_call_operand.hbm [shape: f32[2,2,256], index: 7, kind: output, shape index: {}]
  %s8 = sld [smem:[#allocation0]]
  $region38: #{tpu_custom_call.1} parent=0
    _
  %s10 = ssub.s32 1, %s8
  %s11 = scalar_select 0, %s10, %s8
  $region1: #{tpu_custom_call.1} parent=0
    #allocation6 [shape = 'u8[4096]{0}', space=vmem, size = 0x1000, scoped, tag = 'output window, operand 0, single buffered']
    #allocation7 [shape = 's32[1]{0}', space=sflag, size = 0x4, scoped, tag = 'scoped memory for tpu_custom_call.1']
    %12 = vsyncpa [#allocation7], 0
    // Predicated region
    $region2: #{tpu_custom_call.1} parent=1 // pred_check
      _
    $region3: #{tpu_custom_call.1} parent=1 // pred_check_branch
      %14 = sbr.rel (0) target = $region5
    $region4: #{tpu_custom_call.1} parent=1 // pred_region
      _
    $region5: #{tpu_custom_call.1} parent=1 // pred_fallthru
      _
    // Predicated region
    $region6: #{tpu_custom_call.1} parent=1 // pred_check
      _
    $region7: #{tpu_custom_call.1} parent=1 // pred_check_branch
      %16 = sbr.rel (0) target = $region9
    $region8: #{tpu_custom_call.1} parent=1 // pred_region
      _
    $region9: #{tpu_custom_call.1} parent=1 // pred_fallthru
      _
    // Predicated region
    $region10: #{tpu_custom_call.1} parent=1 // pred_check
      _
    $region11: #{tpu_custom_call.1} parent=1 // pred_check_branch
      %18 = sbr.rel (0) target = $region13
    $region12: #{tpu_custom_call.1} parent=1 // pred_region
      _
    $region13: #{tpu_custom_call.1} parent=1 // pred_fallthru
      _
    // Predicated region
    $region14: #{tpu_custom_call.1} parent=1 // pred_check
      _
    $region15: #{tpu_custom_call.1} parent=1 // pred_check_branch
      %20 = sbr.rel (0) target = $region17
    $region16: #{tpu_custom_call.1} parent=1 // pred_region
      _
    $region17: #{tpu_custom_call.1} parent=1 // pred_fallthru
      _
    // Predicated region
    $region18: #{tpu_custom_call.1} parent=1 // pred_check
      _
    $region19: #{tpu_custom_call.1} parent=1 // pred_check_branch
      %22 = sbr.rel (0) target = $region21
    $region20: #{tpu_custom_call.1} parent=1 // pred_region
      _
    $region21: #{tpu_custom_call.1} parent=1 // pred_fallthru
      _
    // Predicated region
    $region22: #{tpu_custom_call.1} parent=1 // pred_check
      _
    $region23: #{tpu_custom_call.1} parent=1 // pred_check_branch
      %24 = sbr.rel (0) target = $region25
    $region24: #{tpu_custom_call.1} parent=1 // pred_region
      _
    $region25: #{tpu_custom_call.1} parent=1 // pred_fallthru
      _
    // Predicated region
    $region26: #{tpu_custom_call.1} parent=1 // pred_check
      _
    $region27: #{tpu_custom_call.1} parent=1 // pred_check_branch
      %26 = sbr.rel (0) target = $region29
    $region28: #{tpu_custom_call.1} parent=1 // pred_region
      _
    $region29: #{tpu_custom_call.1} parent=1 // pred_fallthru
      _
    %28 = vst [vmem:[#allocation2 + $0x24] sm:$0x1] 1.0
    %v29 = vld [vmem:[%s0] sm:$0xff]
    %v31 = vcombine.high %v29, %v29
    %v33 = vpack.c.bf16 %v29, %v29
    %v34 = vpack.c.bf16 %v31, %v31
    %v35 = vld [vmem:[%s1] sm:$0xff]
    %v36 = vld [vmem:[%s1 + $0x8] sm:$0xff]
    %v37 = vld [vmem:[%s1 + $0x10] sm:$0xf]
    %v38 = vld [vmem:[%s1 + $0x14] sm:$0xff]
    %v39 = vld [vmem:[%s1 + $0x1c] sm:$0xff]
    %v40 = vld [vmem:[%s1 + $0x24] sm:$0xf]
    %v41 = vld [vmem:[%s1 + $0x28] sm:$0xff]
    %v42 = vld [vmem:[%s1 + $0x30] sm:$0xff]
    %v43 = vld [vmem:[%s1 + $0x38] sm:$0xf]
    %v44 = vld [vmem:[%s1 + $0x3c] sm:$0xff]
    %v45 = vld [vmem:[%s1 + $0x44] sm:$0xff]
    %v46 = vld [vmem:[%s1 + $0x4c] sm:$0xf]
    %v47 = vld [vmem:[%s1 + $0x50] sm:$0xff]
    %v48 = vld [vmem:[%s1 + $0x58] sm:$0xff]
    %v49 = vld [vmem:[%s1 + $0x60] sm:$0xf]
    %v50 = vld [vmem:[%s1 + $0x64] sm:$0xff]
    %v51 = vld [vmem:[%s1 + $0x6c] sm:$0xff]
    %v52 = vld [vmem:[%s1 + $0x74] sm:$0xf]
    %v53 = vld [vmem:[%s1 + $0x78] sm:$0xff]
    %v54 = vld [vmem:[%s1 + $0x80] sm:$0xff]
    %v55 = vld [vmem:[%s1 + $0x88] sm:$0xf]
    %v56 = vld [vmem:[%s1 + $0x8c] sm:$0xff]
    %v57 = vld [vmem:[%s1 + $0x94] sm:$0xff]
    %v58 = vld [vmem:[%s1 + $0x9c] sm:$0xf]
    %v59 = vld [vmem:[%s1 + $0xa0] sm:$0xff]
    %v60 = vld [vmem:[%s1 + $0xa8] sm:$0xff]
    %v61 = vld [vmem:[%s1 + $0xb0] sm:$0xf]
    %v62 = vld [vmem:[%s1 + $0xb4] sm:$0xff]
    %v63 = vld [vmem:[%s1 + $0xbc] sm:$0xff]
    %v64 = vld [vmem:[%s1 + $0xc4] sm:$0xf]
    %v65 = vld [vmem:[%s1 + $0xc8] sm:$0xff]
    %v66 = vld [vmem:[%s1 + $0xd0] sm:$0xff]
    %v67 = vld [vmem:[%s1 + $0xd8] sm:$0xf]
    %v68 = vld [vmem:[%s1 + $0xdc] sm:$0xff]
    %v69 = vld [vmem:[%s1 + $0xe4] sm:$0xff]
    %v70 = vld [vmem:[%s1 + $0xec] sm:$0xf]
    %v71 = vld [vmem:[%s1 + $0xf0] sm:$0xff]
    %v72 = vld [vmem:[%s1 + $0xf8] sm:$0xff]
    %v73 = vld [vmem:[%s1 + $0x100] sm:$0xf]
    %v74 = vld [vmem:[%s1 + $0x104] sm:$0xff]
    %v75 = vld [vmem:[%s1 + $0x10c] sm:$0xff]
    %v76 = vld [vmem:[%s1 + $0x114] sm:$0xf]
    %v77 = vld [vmem:[%s1 + $0x118] sm:$0xff]
    %v78 = vld [vmem:[%s1 + $0x120] sm:$0xff]
    %v79 = vld [vmem:[%s1 + $0x128] sm:$0xf]
    %v80 = vld [vmem:[%s1 + $0x12c] sm:$0xff]
    %v81 = vld [vmem:[%s1 + $0x134] sm:$0xff]
    %v82 = vld [vmem:[%s1 + $0x13c] sm:$0xf]
    %v83 = vld [vmem:[%s1 + $0x140] sm:$0xff]
    %v84 = vld [vmem:[%s1 + $0x148] sm:$0xff]
    %v85 = vld [vmem:[%s1 + $0x150] sm:$0xf]
    %v86 = vld [vmem:[%s1 + $0x154] sm:$0xff]
    %v87 = vld [vmem:[%s1 + $0x15c] sm:$0xff]
    %v88 = vld [vmem:[%s1 + $0x164] sm:$0xf]
    %v89 = vld [vmem:[%s1 + $0x168] sm:$0xff]
    %v90 = vld [vmem:[%s1 + $0x170] sm:$0xff]
    %v91 = vld [vmem:[%s1 + $0x178] sm:$0xf]
    %v92 = vld [vmem:[%s1 + $0x17c] sm:$0xff]
    %v93 = vld [vmem:[%s1 + $0x184] sm:$0xff]
    %v94 = vld [vmem:[%s1 + $0x18c] sm:$0xf]
    %v95 = vld [vmem:[%s1 + $0x190] sm:$0xff]
    %v96 = vld [vmem:[%s1 + $0x198] sm:$0xff]
    %v97 = vld [vmem:[%s1 + $0x1a0] sm:$0xf]
    %v98 = vld [vmem:[%s1 + $0x1a4] sm:$0xff]
    %v99 = vld [vmem:[%s1 + $0x1ac] sm:$0xff]
    %v100 = vld [vmem:[%s1 + $0x1b4] sm:$0xf]
    %v101 = vld [vmem:[%s1 + $0x1b8] sm:$0xff]
    %v102 = vld [vmem:[%s1 + $0x1c0] sm:$0xff]
    %v103 = vld [vmem:[%s1 + $0x1c8] sm:$0xf]
    %v104 = vld [vmem:[%s1 + $0x1cc] sm:$0xff]
    %v105 = vld [vmem:[%s1 + $0x1d4] sm:$0xff]
    %v106 = vld [vmem:[%s1 + $0x1dc] sm:$0xf]
    %v107 = vld [vmem:[%s1 + $0x1e0] sm:$0xff]
    %v108 = vld [vmem:[%s1 + $0x1e8] sm:$0xff]
    %v109 = vld [vmem:[%s1 + $0x1f0] sm:$0xf]
    %v110 = vld [vmem:[%s1 + $0x1f4] sm:$0xff]
    %v111 = vld [vmem:[%s1 + $0x1fc] sm:$0xff]
    %v112 = vld [vmem:[%s1 + $0x204] sm:$0xf]
    %v113 = vld [vmem:[%s1 + $0x208] sm:$0xff]
    %v114 = vld [vmem:[%s1 + $0x210] sm:$0xff]
    %v115 = vld [vmem:[%s1 + $0x218] sm:$0xf]
    %v116 = vld [vmem:[%s1 + $0x21c] sm:$0xff]
    %v117 = vld [vmem:[%s1 + $0x224] sm:$0xff]
    %v118 = vld [vmem:[%s1 + $0x22c] sm:$0xf]
    %v119 = vld [vmem:[%s1 + $0x230] sm:$0xff]
    %v120 = vld [vmem:[%s1 + $0x238] sm:$0xff]
    %v121 = vld [vmem:[%s1 + $0x240] sm:$0xf]
    %v122 = vld [vmem:[%s1 + $0x244] sm:$0xff]
    %v123 = vld [vmem:[%s1 + $0x24c] sm:$0xff]
    %v124 = vld [vmem:[%s1 + $0x254] sm:$0xf]
    %v125 = vld [vmem:[%s1 + $0x258] sm:$0xff]
    %v126 = vld [vmem:[%s1 + $0x260] sm:$0xff]
    %v127 = vld [vmem:[%s1 + $0x268] sm:$0xf]
    %v128 = vld [vmem:[%s1 + $0x26c] sm:$0xff]
    %v129 = vld [vmem:[%s1 + $0x274] sm:$0xff]
    %v130 = vld [vmem:[%s1 + $0x27c] sm:$0xf]
    %v227 = vunpack.c.l.b16 %v35
    %v228 = vunpack.c.h.b16 %v35
    %v229 = vunpack.c.l.b16 %v36
    %v230 = vunpack.c.h.b16 %v36
    %v231 = vunpack.c.l.b16 %v37
    %v232 = vunpack.c.l.b16 %v38
    %v233 = vunpack.c.h.b16 %v38
    %v234 = vunpack.c.l.b16 %v39
    %v235 = vunpack.c.h.b16 %v39
    %v236 = vunpack.c.l.b16 %v40
    %v237 = vunpack.c.l.b16 %v41
    %v238 = vunpack.c.h.b16 %v41
    %v239 = vunpack.c.l.b16 %v42
    %v240 = vunpack.c.h.b16 %v42
    %v241 = vunpack.c.l.b16 %v43
    %v242 = vunpack.c.l.b16 %v44
    %v243 = vunpack.c.h.b16 %v44
    %v244 = vunpack.c.l.b16 %v45
    %v245 = vunpack.c.h.b16 %v45
    %v246 = vunpack.c.l.b16 %v46
    %v247 = vunpack.c.l.b16 %v47
    %v248 = vunpack.c.h.b16 %v47
    %v249 = vunpack.c.l.b16 %v48
    %v250 = vunpack.c.h.b16 %v48
    %v251 = vunpack.c.l.b16 %v49
    %v252 = vunpack.c.l.b16 %v50
    %v253 = vunpack.c.h.b16 %v50
    %v254 = vunpack.c.l.b16 %v51
    %v255 = vunpack.c.h.b16 %v51
    %v256 = vunpack.c.l.b16 %v52
    %v257 = vunpack.c.l.b16 %v53
    %v258 = vunpack.c.h.b16 %v53
    %v259 = vunpack.c.l.b16 %v54
    %v260 = vunpack.c.h.b16 %v54
    %v261 = vunpack.c.l.b16 %v55
    %v262 = vunpack.c.l.b16 %v56
    %v263 = vunpack.c.h.b16 %v56
    %v264 = vunpack.c.l.b16 %v57
    %v265 = vunpack.c.h.b16 %v57
    %v266 = vunpack.c.l.b16 %v58
    %v267 = vunpack.c.l.b16 %v59
    %v268 = vunpack.c.h.b16 %v59
    %v269 = vunpack.c.l.b16 %v60
    %v270 = vunpack.c.h.b16 %v60
    %v271 = vunpack.c.l.b16 %v61
    %v272 = vunpack.c.l.b16 %v62
    %v273 = vunpack.c.h.b16 %v62
    %v274 = vunpack.c.l.b16 %v63
    %v275 = vunpack.c.h.b16 %v63
    %v276 = vunpack.c.l.b16 %v64
    %v277 = vunpack.c.l.b16 %v65
    %v278 = vunpack.c.h.b16 %v65
    %v279 = vunpack.c.l.b16 %v66
    %v280 = vunpack.c.h.b16 %v66
    %v281 = vunpack.c.l.b16 %v67
    %v282 = vunpack.c.l.b16 %v68
    %v283 = vunpack.c.h.b16 %v68
    %v284 = vunpack.c.l.b16 %v69
    %v285 = vunpack.c.h.b16 %v69
    %v286 = vunpack.c.l.b16 %v70
    %v287 = vunpack.c.l.b16 %v71
    %v288 = vunpack.c.h.b16 %v71
    %v289 = vunpack.c.l.b16 %v72
    %v290 = vunpack.c.h.b16 %v72
    %v291 = vunpack.c.l.b16 %v73
    %v292 = vunpack.c.l.b16 %v74
    %v293 = vunpack.c.h.b16 %v74
    %v294 = vunpack.c.l.b16 %v75
    %v295 = vunpack.c.h.b16 %v75
    %v296 = vunpack.c.l.b16 %v76
    %v297 = vunpack.c.l.b16 %v77
    %v298 = vunpack.c.h.b16 %v77
    %v299 = vunpack.c.l.b16 %v78
    %v300 = vunpack.c.h.b16 %v78
    %v301 = vunpack.c.l.b16 %v79
    %v302 = vunpack.c.l.b16 %v80
    %v303 = vunpack.c.h.b16 %v80
    %v304 = vunpack.c.l.b16 %v81
    %v305 = vunpack.c.h.b16 %v81
    %v306 = vunpack.c.l.b16 %v82
    %v307 = vunpack.c.l.b16 %v83
    %v308 = vunpack.c.h.b16 %v83
    %v309 = vunpack.c.l.b16 %v84
    %v310 = vunpack.c.h.b16 %v84
    %v311 = vunpack.c.l.b16 %v85
    %v312 = vunpack.c.l.b16 %v86
    %v313 = vunpack.c.h.b16 %v86
    %v314 = vunpack.c.l.b16 %v87
    %v315 = vunpack.c.h.b16 %v87
    %v316 = vunpack.c.l.b16 %v88
    %v317 = vunpack.c.l.b16 %v89
    %v318 = vunpack.c.h.b16 %v89
    %v319 = vunpack.c.l.b16 %v90
    %v320 = vunpack.c.h.b16 %v90
    %v321 = vunpack.c.l.b16 %v91
    %v322 = vunpack.c.l.b16 %v92
    %v323 = vunpack.c.h.b16 %v92
    %v324 = vunpack.c.l.b16 %v93
    %v325 = vunpack.c.h.b16 %v93
    %v326 = vunpack.c.l.b16 %v94
    %v327 = vunpack.c.l.b16 %v95
    %v328 = vunpack.c.h.b16 %v95
    %v329 = vunpack.c.l.b16 %v96
    %v330 = vunpack.c.h.b16 %v96
    %v331 = vunpack.c.l.b16 %v97
    %v332 = vunpack.c.l.b16 %v98
    %v333 = vunpack.c.h.b16 %v98
    %v334 = vunpack.c.l.b16 %v99
    %v335 = vunpack.c.h.b16 %v99
    %v336 = vunpack.c.l.b16 %v100
    %v337 = vunpack.c.l.b16 %v101
    %v338 = vunpack.c.h.b16 %v101
    %v339 = vunpack.c.l.b16 %v102
    %v340 = vunpack.c.h.b16 %v102
    %v341 = vunpack.c.l.b16 %v103
    %v342 = vunpack.c.l.b16 %v104
    %v343 = vunpack.c.h.b16 %v104
    %v344 = vunpack.c.l.b16 %v105
    %v345 = vunpack.c.h.b16 %v105
    %v346 = vunpack.c.l.b16 %v106
    %v347 = vunpack.c.l.b16 %v107
    %v348 = vunpack.c.h.b16 %v107
    %v349 = vunpack.c.l.b16 %v108
    %v350 = vunpack.c.h.b16 %v108
    %v351 = vunpack.c.l.b16 %v109
    %v352 = vunpack.c.l.b16 %v110
    %v353 = vunpack.c.h.b16 %v110
    %v354 = vunpack.c.l.b16 %v111
    %v355 = vunpack.c.h.b16 %v111
    %v356 = vunpack.c.l.b16 %v112
    %v357 = vunpack.c.l.b16 %v113
    %v358 = vunpack.c.h.b16 %v113
    %v359 = vunpack.c.l.b16 %v114
    %v360 = vunpack.c.h.b16 %v114
    %v361 = vunpack.c.l.b16 %v115
    %v362 = vunpack.c.l.b16 %v116
    %v363 = vunpack.c.h.b16 %v116
    %v364 = vunpack.c.l.b16 %v117
    %v365 = vunpack.c.h.b16 %v117
    %v366 = vunpack.c.l.b16 %v118
    %v367 = vunpack.c.l.b16 %v119
    %v368 = vunpack.c.h.b16 %v119
    %v369 = vunpack.c.l.b16 %v120
    %v370 = vunpack.c.h.b16 %v120
    %v371 = vunpack.c.l.b16 %v121
    %v372 = vunpack.c.l.b16 %v122
    %v373 = vunpack.c.h.b16 %v122
    %v374 = vunpack.c.l.b16 %v123
    %v375 = vunpack.c.h.b16 %v123
    %v376 = vunpack.c.l.b16 %v124
    %v377 = vunpack.c.l.b16 %v125
    %v378 = vunpack.c.h.b16 %v125
    %v379 = vunpack.c.l.b16 %v126
    %v380 = vunpack.c.h.b16 %v126
    %v381 = vunpack.c.l.b16 %v127
    %v382 = vunpack.c.l.b16 %v128
    %v383 = vunpack.c.h.b16 %v128
    %v384 = vunpack.c.l.b16 %v129
    %v385 = vunpack.c.h.b16 %v129
    %v386 = vunpack.c.l.b16 %v130
    %v387 = vpack.c.b16 %v232, %v227
    %v388 = vpack.c.b16 %v233, %v228
    %v389 = vpack.c.b16 %v234, %v229
    %v390 = vpack.c.b16 %v235, %v230
    %v391 = vpack.c.b16 %v236, %v231
    %v392 = vpack.c.b16 %v242, %v237
    %v393 = vpack.c.b16 %v243, %v238
    %v394 = vpack.c.b16 %v244, %v239
    %v395 = vpack.c.b16 %v245, %v240
    %v396 = vpack.c.b16 %v246, %v241
    %v397 = vpack.c.b16 %v252, %v247
    %v398 = vpack.c.b16 %v253, %v248
    %v399 = vpack.c.b16 %v254, %v249
    %v400 = vpack.c.b16 %v255, %v250
    %v401 = vpack.c.b16 %v256, %v251
    %v402 = vpack.c.b16 %v262, %v257
    %v403 = vpack.c.b16 %v263, %v258
    %v404 = vpack.c.b16 %v264, %v259
    %v405 = vpack.c.b16 %v265, %v260
    %v406 = vpack.c.b16 %v266, %v261
    %v407 = vpack.c.b16 %v272, %v267
    %v408 = vpack.c.b16 %v273, %v268
    %v409 = vpack.c.b16 %v274, %v269
    %v410 = vpack.c.b16 %v275, %v270
    %v411 = vpack.c.b16 %v276, %v271
    %v412 = vpack.c.b16 %v282, %v277
    %v413 = vpack.c.b16 %v283, %v278
    %v414 = vpack.c.b16 %v284, %v279
    %v415 = vpack.c.b16 %v285, %v280
    %v416 = vpack.c.b16 %v286, %v281
    %v417 = vpack.c.b16 %v292, %v287
    %v418 = vpack.c.b16 %v293, %v288
    %v419 = vpack.c.b16 %v294, %v289
    %v420 = vpack.c.b16 %v295, %v290
    %v421 = vpack.c.b16 %v296, %v291
    %v422 = vpack.c.b16 %v302, %v297
    %v423 = vpack.c.b16 %v303, %v298
    %v424 = vpack.c.b16 %v304, %v299
    %v425 = vpack.c.b16 %v305, %v300
    %v426 = vpack.c.b16 %v306, %v301
    %v427 = vpack.c.b16 %v312, %v307
    %v428 = vpack.c.b16 %v313, %v308
    %v429 = vpack.c.b16 %v314, %v309
    %v430 = vpack.c.b16 %v315, %v310
    %v431 = vpack.c.b16 %v316, %v311
    %v432 = vpack.c.b16 %v322, %v317
    %v433 = vpack.c.b16 %v323, %v318
    %v434 = vpack.c.b16 %v324, %v319
    %v435 = vpack.c.b16 %v325, %v320
    %v436 = vpack.c.b16 %v326, %v321
    %v437 = vpack.c.b16 %v332, %v327
    %v438 = vpack.c.b16 %v333, %v328
    %v439 = vpack.c.b16 %v334, %v329
    %v440 = vpack.c.b16 %v335, %v330
    %v441 = vpack.c.b16 %v336, %v331
    %v442 = vpack.c.b16 %v342, %v337
    %v443 = vpack.c.b16 %v343, %v338
    %v444 = vpack.c.b16 %v344, %v339
    %v445 = vpack.c.b16 %v345, %v340
    %v446 = vpack.c.b16 %v346, %v341
    %v447 = vpack.c.b16 %v352, %v347
    %v448 = vpack.c.b16 %v353, %v348
    %v449 = vpack.c.b16 %v354, %v349
    %v450 = vpack.c.b16 %v355, %v350
    %v451 = vpack.c.b16 %v356, %v351
    %v452 = vpack.c.b16 %v362, %v357
    %v453 = vpack.c.b16 %v363, %v358
    %v454 = vpack.c.b16 %v364, %v359
    %v455 = vpack.c.b16 %v365, %v360
    %v456 = vpack.c.b16 %v366, %v361
    %v457 = vpack.c.b16 %v372, %v367
    %v458 = vpack.c.b16 %v373, %v368
    %v459 = vpack.c.b16 %v374, %v369
    %v460 = vpack.c.b16 %v375, %v370
    %v461 = vpack.c.b16 %v376, %v371
    %v462 = vpack.c.b16 %v382, %v377
    %v463 = vpack.c.b16 %v383, %v378
    %v464 = vpack.c.b16 %v384, %v379
    %v465 = vpack.c.b16 %v385, %v380
    %v466 = vpack.c.b16 %v386, %v381
    %547 = vmatprep.subr.bf16.mxu0 %v388
    %548 = vmatpush1.bf16.msra.mxu0 %v387
    %549 = vmatprep.subr.bf16.mxu0 %v393
    %550 = vmatpush1.bf16.msra.mxu0 %v392
    %551 = vmatprep.subr.bf16.mxu0 %v398
    %552 = vmatpush1.bf16.msra.mxu0 %v397
    %553 = vmatprep.subr.bf16.mxu0 %v403
    %554 = vmatpush1.bf16.msra.mxu0 %v402
    %555 = vmatprep.subr.bf16.mxu0 %v408
    %556 = vmatpush1.bf16.msra.mxu0 %v407
    %557 = vmatprep.subr.bf16.mxu0 %v413
    %558 = vmatpush1.bf16.msra.mxu0 %v412
    %559 = vmatprep.subr.bf16.mxu0 %v418
    %560 = vmatpush1.bf16.msra.mxu0 %v417
    %561 = vmatprep.subr.bf16.mxu0 %v423
    %562 = vmatpush1.bf16.msra.mxu0 %v422
    %563 = vmatprep.subr.bf16.mxu0 %v428
    %564 = vmatpush1.bf16.msra.mxu0 %v427
    %565 = vmatprep.subr.bf16.mxu0 %v433
    %566 = vmatpush1.bf16.msra.mxu0 %v432
    %567 = vmatprep.subr.bf16.mxu0 %v438
    %568 = vmatpush1.bf16.msra.mxu0 %v437
    %569 = vmatprep.subr.bf16.mxu0 %v443
    %570 = vmatpush1.bf16.msra.mxu0 %v442
    %571 = vmatprep.subr.bf16.mxu0 %v448
    %572 = vmatpush1.bf16.msra.mxu0 %v447
    %573 = vmatprep.subr.bf16.mxu0 %v453
    %574 = vmatpush1.bf16.msra.mxu0 %v452
    %575 = vmatprep.subr.bf16.mxu0 %v458
    %576 = vmatpush1.bf16.msra.mxu0 %v457
    %577 = vmatprep.subr.bf16.mxu0 %v463
    %578 = vmatpush1.bf16.msra.mxu0 %v462
    %579 = vmatprep.mubr.bf16.mxu0 %v34
    %580 = vmatmul.mubr.bf16.gmra.mrb[0].mxu0 %v33
    %v581 = vpop.f32.mrb[0].mxu0
    %v582 = vadd.f32 0.0, %v581
    %v583 = vpop.f32.mrb[0].mxu0
    %v584 = vadd.f32 0.0, %v583
    %v585 = vpop.f32.mrb[0].mxu0
    %v586 = vpop.f32.mrb[0].mxu0
    %587 = vdwg.mxu0
    %588 = vmatprep.subr.bf16.mxu0 %v390
    %589 = vmatpush1.bf16.msra.mxu0 %v389
    %590 = vmatprep.subr.bf16.mxu0 %v395
    %591 = vmatpush1.bf16.msra.mxu0 %v394
    %592 = vmatprep.subr.bf16.mxu0 %v400
    %593 = vmatpush1.bf16.msra.mxu0 %v399
    %594 = vmatprep.subr.bf16.mxu0 %v405
    %595 = vmatpush1.bf16.msra.mxu0 %v404
    %596 = vmatprep.subr.bf16.mxu0 %v410
    %597 = vmatpush1.bf16.msra.mxu0 %v409
    %598 = vmatprep.subr.bf16.mxu0 %v415
    %599 = vmatpush1.bf16.msra.mxu0 %v414
    %600 = vmatprep.subr.bf16.mxu0 %v420
    %601 = vmatpush1.bf16.msra.mxu0 %v419
    %602 = vmatprep.subr.bf16.mxu0 %v425
    %603 = vmatpush1.bf16.msra.mxu0 %v424
    %604 = vmatprep.subr.bf16.mxu0 %v430
    %605 = vmatpush1.bf16.msra.mxu0 %v429
    %606 = vmatprep.subr.bf16.mxu0 %v435
    %607 = vmatpush1.bf16.msra.mxu0 %v434
    %608 = vmatprep.subr.bf16.mxu0 %v440
    %609 = vmatpush1.bf16.msra.mxu0 %v439
    %610 = vmatprep.subr.bf16.mxu0 %v445
    %611 = vmatpush1.bf16.msra.mxu0 %v444
    %612 = vmatprep.subr.bf16.mxu0 %v450
    %613 = vmatpush1.bf16.msra.mxu0 %v449
    %614 = vmatprep.subr.bf16.mxu0 %v455
    %615 = vmatpush1.bf16.msra.mxu0 %v454
    %616 = vmatprep.subr.bf16.mxu0 %v460
    %617 = vmatpush1.bf16.msra.mxu0 %v459
    %618 = vmatprep.subr.bf16.mxu0 %v465
    %619 = vmatpush1.bf16.msra.mxu0 %v464
    %620 = vmatprep.mubr.bf16.mxu0 %v34
    %621 = vmatmul.mubr.bf16.gmra.mrb[0].mxu0 %v33
    %v622 = vpop.f32.mrb[0].mxu0
    %v623 = vadd.f32 0.0, %v622
    %v624 = vpop.f32.mrb[0].mxu0
    %v625 = vadd.f32 0.0, %v624
    %v626 = vpop.f32.mrb[0].mxu0
    %v627 = vpop.f32.mrb[0].mxu0
    %628 = vdwg.mxu0
    %629 = vmatprep.subr.bf16.mxu0 0
    %630 = vmatpush1.bf16.msra.mxu0 %v391
    %631 = vmatprep.subr.bf16.mxu0 0
    %632 = vmatpush1.bf16.msra.mxu0 %v396
    %633 = vmatprep.subr.bf16.mxu0 0
    %634 = vmatpush1.bf16.msra.mxu0 %v401
    %635 = vmatprep.subr.bf16.mxu0 0
    %636 = vmatpush1.bf16.msra.mxu0 %v406
    %637 = vmatprep.subr.bf16.mxu0 0
    %638 = vmatpush1.bf16.msra.mxu0 %v411
    %639 = vmatprep.subr.bf16.mxu0 0
    %640 = vmatpush1.bf16.msra.mxu0 %v416
    %641 = vmatprep.subr.bf16.mxu0 0
    %642 = vmatpush1.bf16.msra.mxu0 %v421
    %643 = vmatprep.subr.bf16.mxu0 0
    %644 = vmatpush1.bf16.msra.mxu0 %v426
    %645 = vmatprep.subr.bf16.mxu0 0
    %646 = vmatpush1.bf16.msra.mxu0 %v431
    %647 = vmatprep.subr.bf16.mxu0 0
    %648 = vmatpush1.bf16.msra.mxu0 %v436
    %649 = vmatprep.subr.bf16.mxu0 0
    %650 = vmatpush1.bf16.msra.mxu0 %v441
    %651 = vmatprep.subr.bf16.mxu0 0
    %652 = vmatpush1.bf16.msra.mxu0 %v446
    %653 = vmatprep.subr.bf16.mxu0 0
    %654 = vmatpush1.bf16.msra.mxu0 %v451
    %655 = vmatprep.subr.bf16.mxu0 0
    %656 = vmatpush1.bf16.msra.mxu0 %v456
    %657 = vmatprep.subr.bf16.mxu0 0
    %658 = vmatpush1.bf16.msra.mxu0 %v461
    %659 = vmatprep.subr.bf16.mxu0 0
    %660 = vmatpush1.bf16.msra.mxu0 %v466
    %661 = vmatprep.mubr.bf16.mxu0 %v34
    %662 = vmatmul.mubr.bf16.gmra.mrb[0].mxu0 %v33
    %v663 = vpop.f32.mrb[0].mxu0
    %v664 = vadd.f32 0.0, %v663
    %v665 = vpop.f32.mrb[0].mxu0
    %v666 = vpop.f32.mrb[0].mxu0
    %v667 = vpop.f32.mrb[0].mxu0
    %668 = vdwg.mxu0
    %vm669 = vcmask 519168
    %670 = vst.msk [vmem:[#allocation2] sm:$0xf] %vm669, %v582
    %672 = vrot.lane.b32.xlu0 %v582, 64
    %v673 = vpop.permute.xlu0 %672
    %675 = vst.msk [vmem:[#allocation2 + $0x4] sm:$0xf] %vm669, %v673
    %676 = vst.msk [vmem:[#allocation2 + $0x8] sm:$0xf] %vm669, %v584
    %678 = vrot.lane.b32.xlu0 %v584, 64
    %v679 = vpop.permute.xlu0 %678
    %681 = vst.msk [vmem:[#allocation2 + $0xc] sm:$0xf] %vm669, %v679
    %682 = vst.msk [vmem:[#allocation2 + $0x10] sm:$0xf] %vm669, %v623
    %684 = vrot.lane.b32.xlu0 %v623, 64
    %v685 = vpop.permute.xlu0 %684
    %687 = vst.msk [vmem:[#allocation2 + $0x14] sm:$0xf] %vm669, %v685
    %688 = vst.msk [vmem:[#allocation2 + $0x18] sm:$0xf] %vm669, %v625
    %690 = vrot.lane.b32.xlu0 %v625, 64
    %v691 = vpop.permute.xlu0 %690
    %693 = vst.msk [vmem:[#allocation2 + $0x1c] sm:$0xf] %vm669, %v691
    %694 = vst.msk [vmem:[#allocation2 + $0x20] sm:$0xf] %vm669, %v664
    %s695 = scalar_lea.vmem %s0, 8
    %v696 = vld [vmem:[%s695] sm:$0xff]
    %v698 = vcombine.high %v696, %v696
    %v700 = vpack.c.bf16 %v696, %v696
    %v701 = vpack.c.bf16 %v698, %v698
    %v702 = vld [vmem:[%s1] sm:$0xff]
    %v703 = vld [vmem:[%s1 + $0x8] sm:$0xff]
    %v704 = vld [vmem:[%s1 + $0x10] sm:$0xf]
    %v705 = vld [vmem:[%s1 + $0x14] sm:$0xff]
    %v706 = vld [vmem:[%s1 + $0x1c] sm:$0xff]
    %v707 = vld [vmem:[%s1 + $0x24] sm:$0xf]
    %v708 = vld [vmem:[%s1 + $0x28] sm:$0xff]
    %v709 = vld [vmem:[%s1 + $0x30] sm:$0xff]
    %v710 = vld [vmem:[%s1 + $0x38] sm:$0xf]
    %v711 = vld [vmem:[%s1 + $0x3c] sm:$0xff]
    %v712 = vld [vmem:[%s1 + $0x44] sm:$0xff]
    %v713 = vld [vmem:[%s1 + $0x4c] sm:$0xf]
    %v714 = vld [vmem:[%s1 + $0x50] sm:$0xff]
    %v715 = vld [vmem:[%s1 + $0x58] sm:$0xff]
    %v716 = vld [vmem:[%s1 + $0x60] sm:$0xf]
    %v717 = vld [vmem:[%s1 + $0x64] sm:$0xff]
    %v718 = vld [vmem:[%s1 + $0x6c] sm:$0xff]
    %v719 = vld [vmem:[%s1 + $0x74] sm:$0xf]
    %v720 = vld [vmem:[%s1 + $0x78] sm:$0xff]
    %v721 = vld [vmem:[%s1 + $0x80] sm:$0xff]
    %v722 = vld [vmem:[%s1 + $0x88] sm:$0xf]
    %v723 = vld [vmem:[%s1 + $0x8c] sm:$0xff]
    %v724 = vld [vmem:[%s1 + $0x94] sm:$0xff]
    %v725 = vld [vmem:[%s1 + $0x9c] sm:$0xf]
    %v726 = vld [vmem:[%s1 + $0xa0] sm:$0xff]
    %v727 = vld [vmem:[%s1 + $0xa8] sm:$0xff]
    %v728 = vld [vmem:[%s1 + $0xb0] sm:$0xf]
    %v729 = vld [vmem:[%s1 + $0xb4] sm:$0xff]
    %v730 = vld [vmem:[%s1 + $0xbc] sm:$0xff]
    %v731 = vld [vmem:[%s1 + $0xc4] sm:$0xf]
    %v732 = vld [vmem:[%s1 + $0xc8] sm:$0xff]
    %v733 = vld [vmem:[%s1 + $0xd0] sm:$0xff]
    %v734 = vld [vmem:[%s1 + $0xd8] sm:$0xf]
    %v735 = vld [vmem:[%s1 + $0xdc] sm:$0xff]
    %v736 = vld [vmem:[%s1 + $0xe4] sm:$0xff]
    %v737 = vld [vmem:[%s1 + $0xec] sm:$0xf]
    %v738 = vld [vmem:[%s1 + $0xf0] sm:$0xff]
    %v739 = vld [vmem:[%s1 + $0xf8] sm:$0xff]
    %v740 = vld [vmem:[%s1 + $0x100] sm:$0xf]
    %v741 = vld [vmem:[%s1 + $0x104] sm:$0xff]
    %v742 = vld [vmem:[%s1 + $0x10c] sm:$0xff]
    %v743 = vld [vmem:[%s1 + $0x114] sm:$0xf]
    %v744 = vld [vmem:[%s1 + $0x118] sm:$0xff]
    %v745 = vld [vmem:[%s1 + $0x120] sm:$0xff]
    %v746 = vld [vmem:[%s1 + $0x128] sm:$0xf]
    %v747 = vld [vmem:[%s1 + $0x12c] sm:$0xff]
    %v748 = vld [vmem:[%s1 + $0x134] sm:$0xff]
    %v749 = vld [vmem:[%s1 + $0x13c] sm:$0xf]
    %v750 = vld [vmem:[%s1 + $0x140] sm:$0xff]
    %v751 = vld [vmem:[%s1 + $0x148] sm:$0xff]
    %v752 = vld [vmem:[%s1 + $0x150] sm:$0xf]
    %v753 = vld [vmem:[%s1 + $0x154] sm:$0xff]
    %v754 = vld [vmem:[%s1 + $0x15c] sm:$0xff]
    %v755 = vld [vmem:[%s1 + $0x164] sm:$0xf]
    %v756 = vld [vmem:[%s1 + $0x168] sm:$0xff]
    %v757 = vld [vmem:[%s1 + $0x170] sm:$0xff]
    %v758 = vld [vmem:[%s1 + $0x178] sm:$0xf]
    %v759 = vld [vmem:[%s1 + $0x17c] sm:$0xff]
    %v760 = vld [vmem:[%s1 + $0x184] sm:$0xff]
    %v761 = vld [vmem:[%s1 + $0x18c] sm:$0xf]
    %v762 = vld [vmem:[%s1 + $0x190] sm:$0xff]
    %v763 = vld [vmem:[%s1 + $0x198] sm:$0xff]
    %v764 = vld [vmem:[%s1 + $0x1a0] sm:$0xf]
    %v765 = vld [vmem:[%s1 + $0x1a4] sm:$0xff]
    %v766 = vld [vmem:[%s1 + $0x1ac] sm:$0xff]
    %v767 = vld [vmem:[%s1 + $0x1b4] sm:$0xf]
    %v768 = vld [vmem:[%s1 + $0x1b8] sm:$0xff]
    %v769 = vld [vmem:[%s1 + $0x1c0] sm:$0xff]
    %v770 = vld [vmem:[%s1 + $0x1c8] sm:$0xf]
    %v771 = vld [vmem:[%s1 + $0x1cc] sm:$0xff]
    %v772 = vld [vmem:[%s1 + $0x1d4] sm:$0xff]
    %v773 = vld [vmem:[%s1 + $0x1dc] sm:$0xf]
    %v774 = vld [vmem:[%s1 + $0x1e0] sm:$0xff]
    %v775 = vld [vmem:[%s1 + $0x1e8] sm:$0xff]
    %v776 = vld [vmem:[%s1 + $0x1f0] sm:$0xf]
    %v777 = vld [vmem:[%s1 + $0x1f4] sm:$0xff]
    %v778 = vld [vmem:[%s1 + $0x1fc] sm:$0xff]
    %v779 = vld [vmem:[%s1 + $0x204] sm:$0xf]
    %v780 = vld [vmem:[%s1 + $0x208] sm:$0xff]
    %v781 = vld [vmem:[%s1 + $0x210] sm:$0xff]
    %v782 = vld [vmem:[%s1 + $0x218] sm:$0xf]
    %v783 = vld [vmem:[%s1 + $0x21c] sm:$0xff]
    %v784 = vld [vmem:[%s1 + $0x224] sm:$0xff]
    %v785 = vld [vmem:[%s1 + $0x22c] sm:$0xf]
    %v786 = vld [vmem:[%s1 + $0x230] sm:$0xff]
    %v787 = vld [vmem:[%s1 + $0x238] sm:$0xff]
    %v788 = vld [vmem:[%s1 + $0x240] sm:$0xf]
    %v789 = vld [vmem:[%s1 + $0x244] sm:$0xff]
    %v790 = vld [vmem:[%s1 + $0x24c] sm:$0xff]
    %v791 = vld [vmem:[%s1 + $0x254] sm:$0xf]
    %v792 = vld [vmem:[%s1 + $0x258] sm:$0xff]
    %v793 = vld [vmem:[%s1 + $0x260] sm:$0xff]
    %v794 = vld [vmem:[%s1 + $0x268] sm:$0xf]
    %v795 = vld [vmem:[%s1 + $0x26c] sm:$0xff]
    %v796 = vld [vmem:[%s1 + $0x274] sm:$0xff]
    %v797 = vld [vmem:[%s1 + $0x27c] sm:$0xf]
    %v894 = vunpack.c.l.b16 %v702
    %v895 = vunpack.c.h.b16 %v702
    %v896 = vunpack.c.l.b16 %v703
    %v897 = vunpack.c.h.b16 %v703
    %v898 = vunpack.c.l.b16 %v704
    %v899 = vunpack.c.l.b16 %v705
    %v900 = vunpack.c.h.b16 %v705
    %v901 = vunpack.c.l.b16 %v706
    %v902 = vunpack.c.h.b16 %v706
    %v903 = vunpack.c.l.b16 %v707
    %v904 = vunpack.c.l.b16 %v708
    %v905 = vunpack.c.h.b16 %v708
    %v906 = vunpack.c.l.b16 %v709
    %v907 = vunpack.c.h.b16 %v709
    %v908 = vunpack.c.l.b16 %v710
    %v909 = vunpack.c.l.b16 %v711
    %v910 = vunpack.c.h.b16 %v711
    %v911 = vunpack.c.l.b16 %v712
    %v912 = vunpack.c.h.b16 %v712
    %v913 = vunpack.c.l.b16 %v713
    %v914 = vunpack.c.l.b16 %v714
    %v915 = vunpack.c.h.b16 %v714
    %v916 = vunpack.c.l.b16 %v715
    %v917 = vunpack.c.h.b16 %v715
    %v918 = vunpack.c.l.b16 %v716
    %v919 = vunpack.c.l.b16 %v717
    %v920 = vunpack.c.h.b16 %v717
    %v921 = vunpack.c.l.b16 %v718
    %v922 = vunpack.c.h.b16 %v718
    %v923 = vunpack.c.l.b16 %v719
    %v924 = vunpack.c.l.b16 %v720
    %v925 = vunpack.c.h.b16 %v720
    %v926 = vunpack.c.l.b16 %v721
    %v927 = vunpack.c.h.b16 %v721
    %v928 = vunpack.c.l.b16 %v722
    %v929 = vunpack.c.l.b16 %v723
    %v930 = vunpack.c.h.b16 %v723
    %v931 = vunpack.c.l.b16 %v724
    %v932 = vunpack.c.h.b16 %v724
    %v933 = vunpack.c.l.b16 %v725
    %v934 = vunpack.c.l.b16 %v726
    %v935 = vunpack.c.h.b16 %v726
    %v936 = vunpack.c.l.b16 %v727
    %v937 = vunpack.c.h.b16 %v727
    %v938 = vunpack.c.l.b16 %v728
    %v939 = vunpack.c.l.b16 %v729
    %v940 = vunpack.c.h.b16 %v729
    %v941 = vunpack.c.l.b16 %v730
    %v942 = vunpack.c.h.b16 %v730
    %v943 = vunpack.c.l.b16 %v731
    %v944 = vunpack.c.l.b16 %v732
    %v945 = vunpack.c.h.b16 %v732
    %v946 = vunpack.c.l.b16 %v733
    %v947 = vunpack.c.h.b16 %v733
    %v948 = vunpack.c.l.b16 %v734
    %v949 = vunpack.c.l.b16 %v735
    %v950 = vunpack.c.h.b16 %v735
    %v951 = vunpack.c.l.b16 %v736
    %v952 = vunpack.c.h.b16 %v736
    %v953 = vunpack.c.l.b16 %v737
    %v954 = vunpack.c.l.b16 %v738
    %v955 = vunpack.c.h.b16 %v738
    %v956 = vunpack.c.l.b16 %v739
    %v957 = vunpack.c.h.b16 %v739
    %v958 = vunpack.c.l.b16 %v740
    %v959 = vunpack.c.l.b16 %v741
    %v960 = vunpack.c.h.b16 %v741
    %v961 = vunpack.c.l.b16 %v742
    %v962 = vunpack.c.h.b16 %v742
    %v963 = vunpack.c.l.b16 %v743
    %v964 = vunpack.c.l.b16 %v744
    %v965 = vunpack.c.h.b16 %v744
    %v966 = vunpack.c.l.b16 %v745
    %v967 = vunpack.c.h.b16 %v745
    %v968 = vunpack.c.l.b16 %v746
    %v969 = vunpack.c.l.b16 %v747
    %v970 = vunpack.c.h.b16 %v747
    %v971 = vunpack.c.l.b16 %v748
    %v972 = vunpack.c.h.b16 %v748
    %v973 = vunpack.c.l.b16 %v749
    %v974 = vunpack.c.l.b16 %v750
    %v975 = vunpack.c.h.b16 %v750
    %v976 = vunpack.c.l.b16 %v751
    %v977 = vunpack.c.h.b16 %v751
    %v978 = vunpack.c.l.b16 %v752
    %v979 = vunpack.c.l.b16 %v753
    %v980 = vunpack.c.h.b16 %v753
    %v981 = vunpack.c.l.b16 %v754
    %v982 = vunpack.c.h.b16 %v754
    %v983 = vunpack.c.l.b16 %v755
    %v984 = vunpack.c.l.b16 %v756
    %v985 = vunpack.c.h.b16 %v756
    %v986 = vunpack.c.l.b16 %v757
    %v987 = vunpack.c.h.b16 %v757
    %v988 = vunpack.c.l.b16 %v758
    %v989 = vunpack.c.l.b16 %v759
    %v990 = vunpack.c.h.b16 %v759
    %v991 = vunpack.c.l.b16 %v760
    %v992 = vunpack.c.h.b16 %v760
    %v993 = vunpack.c.l.b16 %v761
    %v994 = vunpack.c.l.b16 %v762
    %v995 = vunpack.c.h.b16 %v762
    %v996 = vunpack.c.l.b16 %v763
    %v997 = vunpack.c.h.b16 %v763
    %v998 = vunpack.c.l.b16 %v764
    %v999 = vunpack.c.l.b16 %v765
    %v1000 = vunpack.c.h.b16 %v765
    %v1001 = vunpack.c.l.b16 %v766
    %v1002 = vunpack.c.h.b16 %v766
    %v1003 = vunpack.c.l.b16 %v767
    %v1004 = vunpack.c.l.b16 %v768
    %v1005 = vunpack.c.h.b16 %v768
    %v1006 = vunpack.c.l.b16 %v769
    %v1007 = vunpack.c.h.b16 %v769
    %v1008 = vunpack.c.l.b16 %v770
    %v1009 = vunpack.c.l.b16 %v771
    %v1010 = vunpack.c.h.b16 %v771
    %v1011 = vunpack.c.l.b16 %v772
    %v1012 = vunpack.c.h.b16 %v772
    %v1013 = vunpack.c.l.b16 %v773
    %v1014 = vunpack.c.l.b16 %v774
    %v1015 = vunpack.c.h.b16 %v774
    %v1016 = vunpack.c.l.b16 %v775
    %v1017 = vunpack.c.h.b16 %v775
    %v1018 = vunpack.c.l.b16 %v776
    %v1019 = vunpack.c.l.b16 %v777
    %v1020 = vunpack.c.h.b16 %v777
    %v1021 = vunpack.c.l.b16 %v778
    %v1022 = vunpack.c.h.b16 %v778
    %v1023 = vunpack.c.l.b16 %v779
    %v1024 = vunpack.c.l.b16 %v780
    %v1025 = vunpack.c.h.b16 %v780
    %v1026 = vunpack.c.l.b16 %v781
    %v1027 = vunpack.c.h.b16 %v781
    %v1028 = vunpack.c.l.b16 %v782
    %v1029 = vunpack.c.l.b16 %v783
    %v1030 = vunpack.c.h.b16 %v783
    %v1031 = vunpack.c.l.b16 %v784
    %v1032 = vunpack.c.h.b16 %v784
    %v1033 = vunpack.c.l.b16 %v785
    %v1034 = vunpack.c.l.b16 %v786
    %v1035 = vunpack.c.h.b16 %v786
    %v1036 = vunpack.c.l.b16 %v787
    %v1037 = vunpack.c.h.b16 %v787
    %v1038 = vunpack.c.l.b16 %v788
    %v1039 = vunpack.c.l.b16 %v789
    %v1040 = vunpack.c.h.b16 %v789
    %v1041 = vunpack.c.l.b16 %v790
    %v1042 = vunpack.c.h.b16 %v790
    %v1043 = vunpack.c.l.b16 %v791
    %v1044 = vunpack.c.l.b16 %v792
    %v1045 = vunpack.c.h.b16 %v792
    %v1046 = vunpack.c.l.b16 %v793
    %v1047 = vunpack.c.h.b16 %v793
    %v1048 = vunpack.c.l.b16 %v794
    %v1049 = vunpack.c.l.b16 %v795
    %v1050 = vunpack.c.h.b16 %v795
    %v1051 = vunpack.c.l.b16 %v796
    %v1052 = vunpack.c.h.b16 %v796
    %v1053 = vunpack.c.l.b16 %v797
    %v1054 = vpack.c.b16 %v899, %v894
    %v1055 = vpack.c.b16 %v900, %v895
    %v1056 = vpack.c.b16 %v901, %v896
    %v1057 = vpack.c.b16 %v902, %v897
    %v1058 = vpack.c.b16 %v903, %v898
    %v1059 = vpack.c.b16 %v909, %v904
    %v1060 = vpack.c.b16 %v910, %v905
    %v1061 = vpack.c.b16 %v911, %v906
    %v1062 = vpack.c.b16 %v912, %v907
    %v1063 = vpack.c.b16 %v913, %v908
    %v1064 = vpack.c.b16 %v919, %v914
    %v1065 = vpack.c.b16 %v920, %v915
    %v1066 = vpack.c.b16 %v921, %v916
    %v1067 = vpack.c.b16 %v922, %v917
    %v1068 = vpack.c.b16 %v923, %v918
    %v1069 = vpack.c.b16 %v929, %v924
    %v1070 = vpack.c.b16 %v930, %v925
    %v1071 = vpack.c.b16 %v931, %v926
    %v1072 = vpack.c.b16 %v932, %v927
    %v1073 = vpack.c.b16 %v933, %v928
    %v1074 = vpack.c.b16 %v939, %v934
    %v1075 = vpack.c.b16 %v940, %v935
    %v1076 = vpack.c.b16 %v941, %v936
    %v1077 = vpack.c.b16 %v942, %v937
    %v1078 = vpack.c.b16 %v943, %v938
    %v1079 = vpack.c.b16 %v949, %v944
    %v1080 = vpack.c.b16 %v950, %v945
    %v1081 = vpack.c.b16 %v951, %v946
    %v1082 = vpack.c.b16 %v952, %v947
    %v1083 = vpack.c.b16 %v953, %v948
    %v1084 = vpack.c.b16 %v959, %v954
    %v1085 = vpack.c.b16 %v960, %v955
    %v1086 = vpack.c.b16 %v961, %v956
    %v1087 = vpack.c.b16 %v962, %v957
    %v1088 = vpack.c.b16 %v963, %v958
    %v1089 = vpack.c.b16 %v969, %v964
    %v1090 = vpack.c.b16 %v970, %v965
    %v1091 = vpack.c.b16 %v971, %v966
    %v1092 = vpack.c.b16 %v972, %v967
    %v1093 = vpack.c.b16 %v973, %v968
    %v1094 = vpack.c.b16 %v979, %v974
    %v1095 = vpack.c.b16 %v980, %v975
    %v1096 = vpack.c.b16 %v981, %v976
    %v1097 = vpack.c.b16 %v982, %v977
    %v1098 = vpack.c.b16 %v983, %v978
    %v1099 = vpack.c.b16 %v989, %v984
    %v1100 = vpack.c.b16 %v990, %v985
    %v1101 = vpack.c.b16 %v991, %v986
    %v1102 = vpack.c.b16 %v992, %v987
    %v1103 = vpack.c.b16 %v993, %v988
    %v1104 = vpack.c.b16 %v999, %v994
    %v1105 = vpack.c.b16 %v1000, %v995
    %v1106 = vpack.c.b16 %v1001, %v996
    %v1107 = vpack.c.b16 %v1002, %v997
    %v1108 = vpack.c.b16 %v1003, %v998
    %v1109 = vpack.c.b16 %v1009, %v1004
    %v1110 = vpack.c.b16 %v1010, %v1005
    %v1111 = vpack.c.b16 %v1011, %v1006
    %v1112 = vpack.c.b16 %v1012, %v1007
    %v1113 = vpack.c.b16 %v1013, %v1008
    %v1114 = vpack.c.b16 %v1019, %v1014
    %v1115 = vpack.c.b16 %v1020, %v1015
    %v1116 = vpack.c.b16 %v1021, %v1016
    %v1117 = vpack.c.b16 %v1022, %v1017
    %v1118 = vpack.c.b16 %v1023, %v1018
    %v1119 = vpack.c.b16 %v1029, %v1024
    %v1120 = vpack.c.b16 %v1030, %v1025
    %v1121 = vpack.c.b16 %v1031, %v1026
    %v1122 = vpack.c.b16 %v1032, %v1027
    %v1123 = vpack.c.b16 %v1033, %v1028
    %v1124 = vpack.c.b16 %v1039, %v1034
    %v1125 = vpack.c.b16 %v1040, %v1035
    %v1126 = vpack.c.b16 %v1041, %v1036
    %v1127 = vpack.c.b16 %v1042, %v1037
    %v1128 = vpack.c.b16 %v1043, %v1038
    %v1129 = vpack.c.b16 %v1049, %v1044
    %v1130 = vpack.c.b16 %v1050, %v1045
    %v1131 = vpack.c.b16 %v1051, %v1046
    %v1132 = vpack.c.b16 %v1052, %v1047
    %v1133 = vpack.c.b16 %v1053, %v1048
    %1214 = vmatprep.subr.bf16.mxu0 %v1055
    %1215 = vmatpush1.bf16.msra.mxu0 %v1054
    %1216 = vmatprep.subr.bf16.mxu0 %v1060
    %1217 = vmatpush1.bf16.msra.mxu0 %v1059
    %1218 = vmatprep.subr.bf16.mxu0 %v1065
    %1219 = vmatpush1.bf16.msra.mxu0 %v1064
    %1220 = vmatprep.subr.bf16.mxu0 %v1070
    %1221 = vmatpush1.bf16.msra.mxu0 %v1069
    %1222 = vmatprep.subr.bf16.mxu0 %v1075
    %1223 = vmatpush1.bf16.msra.mxu0 %v1074
    %1224 = vmatprep.subr.bf16.mxu0 %v1080
    %1225 = vmatpush1.bf16.msra.mxu0 %v1079
    %1226 = vmatprep.subr.bf16.mxu0 %v1085
    %1227 = vmatpush1.bf16.msra.mxu0 %v1084
    %1228 = vmatprep.subr.bf16.mxu0 %v1090
    %1229 = vmatpush1.bf16.msra.mxu0 %v1089
    %1230 = vmatprep.subr.bf16.mxu0 %v1095
    %1231 = vmatpush1.bf16.msra.mxu0 %v1094
    %1232 = vmatprep.subr.bf16.mxu0 %v1100
    %1233 = vmatpush1.bf16.msra.mxu0 %v1099
    %1234 = vmatprep.subr.bf16.mxu0 %v1105
    %1235 = vmatpush1.bf16.msra.mxu0 %v1104
    %1236 = vmatprep.subr.bf16.mxu0 %v1110
    %1237 = vmatpush1.bf16.msra.mxu0 %v1109
    %1238 = vmatprep.subr.bf16.mxu0 %v1115
    %1239 = vmatpush1.bf16.msra.mxu0 %v1114
    %1240 = vmatprep.subr.bf16.mxu0 %v1120
    %1241 = vmatpush1.bf16.msra.mxu0 %v1119
    %1242 = vmatprep.subr.bf16.mxu0 %v1125
    %1243 = vmatpush1.bf16.msra.mxu0 %v1124
    %1244 = vmatprep.subr.bf16.mxu0 %v1130
    %1245 = vmatpush1.bf16.msra.mxu0 %v1129
    %1246 = vmatprep.mubr.bf16.mxu0 %v701
    %1247 = vmatmul.mubr.bf16.gmra.mrb[0].mxu0 %v700
    %v1248 = vpop.f32.mrb[0].mxu0
    %v1249 = vadd.f32 0.0, %v1248
    %v1250 = vpop.f32.mrb[0].mxu0
    %v1251 = vadd.f32 0.0, %v1250
    %v1252 = vpop.f32.mrb[0].mxu0
    %v1253 = vpop.f32.mrb[0].mxu0
    %1254 = vdwg.mxu0
    %1255 = vmatprep.subr.bf16.mxu0 %v1057
    %1256 = vmatpush1.bf16.msra.mxu0 %v1056
    %1257 = vmatprep.subr.bf16.mxu0 %v1062
    %1258 = vmatpush1.bf16.msra.mxu0 %v1061
    %1259 = vmatprep.subr.bf16.mxu0 %v1067
    %1260 = vmatpush1.bf16.msra.mxu0 %v1066
    %1261 = vmatprep.subr.bf16.mxu0 %v1072
    %1262 = vmatpush1.bf16.msra.mxu0 %v1071
    %1263 = vmatprep.subr.bf16.mxu0 %v1077
    %1264 = vmatpush1.bf16.msra.mxu0 %v1076
    %1265 = vmatprep.subr.bf16.mxu0 %v1082
    %1266 = vmatpush1.bf16.msra.mxu0 %v1081
    %1267 = vmatprep.subr.bf16.mxu0 %v1087
    %1268 = vmatpush1.bf16.msra.mxu0 %v1086
    %1269 = vmatprep.subr.bf16.mxu0 %v1092
    %1270 = vmatpush1.bf16.msra.mxu0 %v1091
    %1271 = vmatprep.subr.bf16.mxu0 %v1097
    %1272 = vmatpush1.bf16.msra.mxu0 %v1096
    %1273 = vmatprep.subr.bf16.mxu0 %v1102
    %1274 = vmatpush1.bf16.msra.mxu0 %v1101
    %1275 = vmatprep.subr.bf16.mxu0 %v1107
    %1276 = vmatpush1.bf16.msra.mxu0 %v1106
    %1277 = vmatprep.subr.bf16.mxu0 %v1112
    %1278 = vmatpush1.bf16.msra.mxu0 %v1111
    %1279 = vmatprep.subr.bf16.mxu0 %v1117
    %1280 = vmatpush1.bf16.msra.mxu0 %v1116
    %1281 = vmatprep.subr.bf16.mxu0 %v1122
    %1282 = vmatpush1.bf16.msra.mxu0 %v1121
    %1283 = vmatprep.subr.bf16.mxu0 %v1127
    %1284 = vmatpush1.bf16.msra.mxu0 %v1126
    %1285 = vmatprep.subr.bf16.mxu0 %v1132
    %1286 = vmatpush1.bf16.msra.mxu0 %v1131
    %1287 = vmatprep.mubr.bf16.mxu0 %v701
    %1288 = vmatmul.mubr.bf16.gmra.mrb[0].mxu0 %v700
    %v1289 = vpop.f32.mrb[0].mxu0
    %v1290 = vadd.f32 0.0, %v1289
    %v1291 = vpop.f32.mrb[0].mxu0
    %v1292 = vadd.f32 0.0, %v1291
    %v1293 = vpop.f32.mrb[0].mxu0
    %v1294 = vpop.f32.mrb[0].mxu0
    %1295 = vdwg.mxu0
    %1296 = vmatprep.subr.bf16.mxu0 0
    %1297 = vmatpush1.bf16.msra.mxu0 %v1058
    %1298 = vmatprep.subr.bf16.mxu0 0
    %1299 = vmatpush1.bf16.msra.mxu0 %v1063
    %1300 = vmatprep.subr.bf16.mxu0 0
    %1301 = vmatpush1.bf16.msra.mxu0 %v1068
    %1302 = vmatprep.subr.bf16.mxu0 0
    %1303 = vmatpush1.bf16.msra.mxu0 %v1073
    %1304 = vmatprep.subr.bf16.mxu0 0
    %1305 = vmatpush1.bf16.msra.mxu0 %v1078
    %1306 = vmatprep.subr.bf16.mxu0 0
    %1307 = vmatpush1.bf16.msra.mxu0 %v1083
    %1308 = vmatprep.subr.bf16.mxu0 0
    %1309 = vmatpush1.bf16.msra.mxu0 %v1088
    %1310 = vmatprep.subr.bf16.mxu0 0
    %1311 = vmatpush1.bf16.msra.mxu0 %v1093
    %1312 = vmatprep.subr.bf16.mxu0 0
    %1313 = vmatpush1.bf16.msra.mxu0 %v1098
    %1314 = vmatprep.subr.bf16.mxu0 0
    %1315 = vmatpush1.bf16.msra.mxu0 %v1103
    %1316 = vmatprep.subr.bf16.mxu0 0
    %1317 = vmatpush1.bf16.msra.mxu0 %v1108
    %1318 = vmatprep.subr.bf16.mxu0 0
    %1319 = vmatpush1.bf16.msra.mxu0 %v1113
    %1320 = vmatprep.subr.bf16.mxu0 0
    %1321 = vmatpush1.bf16.msra.mxu0 %v1118
    %1322 = vmatprep.subr.bf16.mxu0 0
    %1323 = vmatpush1.bf16.msra.mxu0 %v1123
    %1324 = vmatprep.subr.bf16.mxu0 0
    %1325 = vmatpush1.bf16.msra.mxu0 %v1128
    %1326 = vmatprep.subr.bf16.mxu0 0
    %1327 = vmatpush1.bf16.msra.mxu0 %v1133
    %1328 = vmatprep.mubr.bf16.mxu0 %v701
    %1329 = vmatmul.mubr.bf16.gmra.mrb[0].mxu0 %v700
    %v1330 = vpop.f32.mrb[0].mxu0
    %v1331 = vadd.f32 0.0, %v1330
    %v1332 = vpop.f32.mrb[0].mxu0
    %v1333 = vpop.f32.mrb[0].mxu0
    %v1334 = vpop.f32.mrb[0].mxu0
    %1335 = vdwg.mxu0
    %1337 = vrot.lane.b32.xlu0 %v1249, 64
    %v1338 = vpop.permute.xlu0 %1337
    %vm1340 = vcmask 1043968
    %1341 = vst.msk [vmem:[#allocation2] sm:$0xf] %vm1340, %v1338
    %1342 = vst.msk [vmem:[#allocation2 + $0x4] sm:$0xf] %vm1340, %v1249
    %1344 = vrot.lane.b32.xlu0 %v1251, 64
    %v1345 = vpop.permute.xlu0 %1344
    %1347 = vst.msk [vmem:[#allocation2 + $0x8] sm:$0xf] %vm1340, %v1345
    %1348 = vst.msk [vmem:[#allocation2 + $0xc] sm:$0xf] %vm1340, %v1251
    %1350 = vrot.lane.b32.xlu0 %v1290, 64
    %v1351 = vpop.permute.xlu0 %1350
    %1353 = vst.msk [vmem:[#allocation2 + $0x10] sm:$0xf] %vm1340, %v1351
    %1354 = vst.msk [vmem:[#allocation2 + $0x14] sm:$0xf] %vm1340, %v1290
    %1356 = vrot.lane.b32.xlu0 %v1292, 64
    %v1357 = vpop.permute.xlu0 %1356
    %1359 = vst.msk [vmem:[#allocation2 + $0x18] sm:$0xf] %vm1340, %v1357
    %1360 = vst.msk [vmem:[#allocation2 + $0x1c] sm:$0xf] %vm1340, %v1292
    %1362 = vrot.lane.b32.xlu0 %v1331, 64
    %v1363 = vpop.permute.xlu0 %1362
    %1365 = vst.msk [vmem:[#allocation2 + $0x20] sm:$0xf] %vm1340, %v1363
    %v1366 = vld [vmem:[%s2] sm:$0xff]
    %v1367 = vld [vmem:[#allocation2] sm:$0xff]
    %v1368 = vld [vmem:[#allocation2 + $0x8] sm:$0xff]
    %v1369 = vld [vmem:[#allocation2 + $0x10] sm:$0xff]
    %v1370 = vld [vmem:[#allocation2 + $0x18] sm:$0xff]
    %v1371 = vld [vmem:[#allocation2 + $0x20] sm:$0x1f]
    %vm1372 = vcmask 302080
    %v1374 = vsel %vm1372, %v1366, 0
    %vm1376 = vcmask 1044480
    %v1378 = vsel %vm1376, %v1371, 0
    %1380 = vmatprep.subr.mxu0 0.0
    %1381 = vmatpush1.msra.mxu0 %v1367
    %1382 = vmatprep.subr.mxu0 0.0
    %1383 = vmatpush1.msra.mxu0 %v1368
    %1384 = vmatprep.subr.mxu0 0.0
    %1385 = vmatpush1.msra.mxu0 %v1369
    %1386 = vmatprep.subr.mxu0 0.0
    %1387 = vmatpush1.msra.mxu0 %v1370
    %1388 = vmatprep.subr.mxu0 0.0
    %1389 = vmatpush1.msra.mxu0 %v1378
    %1390 = vmatprep.subr.mxu0 0.0
    %1391 = vmatpush1.msra.mxu0 0.0
    %1392 = vmatprep.subr.mxu0 0.0
    %1393 = vmatpush1.msra.mxu0 0.0
    %1394 = vmatprep.subr.mxu0 0.0
    %1395 = vmatpush1.msra.mxu0 0.0
    %1396 = vmatprep.subr.mxu0 0.0
    %1397 = vmatpush1.msra.mxu0 0.0
    %1398 = vmatprep.subr.mxu0 0.0
    %1399 = vmatpush1.msra.mxu0 0.0
    %1400 = vmatprep.subr.mxu0 0.0
    %1401 = vmatpush1.msra.mxu0 0.0
    %1402 = vmatprep.subr.mxu0 0.0
    %1403 = vmatpush1.msra.mxu0 0.0
    %1404 = vmatprep.subr.mxu0 0.0
    %1405 = vmatpush1.msra.mxu0 0.0
    %1406 = vmatprep.subr.mxu0 0.0
    %1407 = vmatpush1.msra.mxu0 0.0
    %1408 = vmatprep.subr.mxu0 0.0
    %1409 = vmatpush1.msra.mxu0 0.0
    %1410 = vmatprep.subr.mxu0 0.0
    %1411 = vmatpush1.msra.mxu0 0.0
    %1412 = vmatprep.subr.mxu0 0.0
    %1413 = vmatpush1.msra.mxu0 0.0
    %1414 = vmatprep.subr.mxu0 0.0
    %1415 = vmatpush1.msra.mxu0 0.0
    %1416 = vmatprep.subr.mxu0 0.0
    %1417 = vmatpush1.msra.mxu0 0.0
    %1418 = vmatprep.subr.mxu0 0.0
    %1419 = vmatpush1.msra.mxu0 0.0
    %1420 = vmatprep.subr.mxu0 0.0
    %1421 = vmatpush1.msra.mxu0 0.0
    %1422 = vmatprep.subr.mxu0 0.0
    %1423 = vmatpush1.msra.mxu0 0.0
    %1424 = vmatprep.subr.mxu0 0.0
    %1425 = vmatpush1.msra.mxu0 0.0
    %1426 = vmatprep.subr.mxu0 0.0
    %1427 = vmatpush1.msra.mxu0 0.0
    %1428 = vmatprep.subr.mxu0 0.0
    %1429 = vmatpush1.msra.mxu0 0.0
    %1430 = vmatprep.subr.mxu0 0.0
    %1431 = vmatpush1.msra.mxu0 0.0
    %1432 = vmatprep.subr.mxu0 0.0
    %1433 = vmatpush1.msra.mxu0 0.0
    %1434 = vmatprep.subr.mxu0 0.0
    %1435 = vmatpush1.msra.mxu0 0.0
    %1436 = vmatprep.subr.mxu0 0.0
    %1437 = vmatpush1.msra.mxu0 0.0
    %1438 = vmatprep.subr.mxu0 0.0
    %1439 = vmatpush1.msra.mxu0 0.0
    %1440 = vmatprep.subr.mxu0 0.0
    %1441 = vmatpush1.msra.mxu0 0.0
    %1442 = vmatprep.subr.mxu0 0.0
    %1443 = vmatpush1.msra.mxu0 0.0
    %1444 = vmatprep.mubr.f32.mxu0 0.0
    %1445 = vmatmul.mubr.f32.gmra.mrb[0].mxu0 %v1374
    %v1446 = vpop.f32.mrb[0].mxu0
    %v1447 = vadd.f32 0.0, %v1446
    %v1448 = vpop.f32.mrb[0].mxu0
    %1449 = vdwg.mxu0
    %v1450 = vmax.f32 %v1447, 0.0
    %v1451 = vpack.c.bf16 %v1450, %v1450
    %1452 = vst [vmem:[#allocation4] sm:$0xf] %v1451
    %vm1453 = vcmask 253952
    %1454 = vst.msk [vmem:[#allocation3 + $0x48] sm:$0x1] %vm1453, 1.0
    %v1455 = vld [vmem:[#allocation4] sm:$0xf]
    %v1456 = vld [vmem:[%s3] sm:$0xff]
    %v1457 = vld [vmem:[%s3 + $0x8] sm:$0xff]
    %v1458 = vld [vmem:[%s3 + $0x10] sm:$0xff]
    %v1459 = vld [vmem:[%s3 + $0x18] sm:$0xff]
    %v1460 = vld [vmem:[%s3 + $0x20] sm:$0xff]
    %v1461 = vld [vmem:[%s3 + $0x28] sm:$0xff]
    %v1462 = vld [vmem:[%s3 + $0x30] sm:$0xff]
    %v1463 = vld [vmem:[%s3 + $0x38] sm:$0xff]
    %v1472 = vunpack.c.l.b16 %v1456
    %v1473 = vunpack.c.h.b16 %v1456
    %v1474 = vunpack.c.l.b16 %v1457
    %v1475 = vunpack.c.h.b16 %v1457
    %v1476 = vunpack.c.l.b16 %v1458
    %v1477 = vunpack.c.h.b16 %v1458
    %v1478 = vunpack.c.l.b16 %v1459
    %v1479 = vunpack.c.h.b16 %v1459
    %v1480 = vunpack.c.l.b16 %v1460
    %v1481 = vunpack.c.h.b16 %v1460
    %v1482 = vunpack.c.l.b16 %v1461
    %v1483 = vunpack.c.h.b16 %v1461
    %v1484 = vunpack.c.l.b16 %v1462
    %v1485 = vunpack.c.h.b16 %v1462
    %v1486 = vunpack.c.l.b16 %v1463
    %v1487 = vunpack.c.h.b16 %v1463
    %v1488 = vpack.c.b16 %v1474, %v1472
    %v1489 = vpack.c.b16 %v1475, %v1473
    %v1490 = vpack.c.b16 %v1478, %v1476
    %v1491 = vpack.c.b16 %v1479, %v1477
    %v1492 = vpack.c.b16 %v1482, %v1480
    %v1493 = vpack.c.b16 %v1483, %v1481
    %v1494 = vpack.c.b16 %v1486, %v1484
    %v1495 = vpack.c.b16 %v1487, %v1485
    %vm1504 = vcmask 523264
    %v1506 = vsel %vm1504, %v1455, 0
    %1508 = vmatprep.subr.bf16.mxu0 %v1489
    %1509 = vmatpush1.bf16.msra.mxu0 %v1488
    %1510 = vmatprep.subr.bf16.mxu0 %v1491
    %1511 = vmatpush1.bf16.msra.mxu0 %v1490
    %1512 = vmatprep.subr.bf16.mxu0 %v1493
    %1513 = vmatpush1.bf16.msra.mxu0 %v1492
    %1514 = vmatprep.subr.bf16.mxu0 %v1495
    %1515 = vmatpush1.bf16.msra.mxu0 %v1494
    %1516 = vmatprep.subr.bf16.mxu0 0
    %1517 = vmatpush1.bf16.msra.mxu0 0
    %1518 = vmatprep.subr.bf16.mxu0 0
    %1519 = vmatpush1.bf16.msra.mxu0 0
    %1520 = vmatprep.subr.bf16.mxu0 0
    %1521 = vmatpush1.bf16.msra.mxu0 0
    %1522 = vmatprep.subr.bf16.mxu0 0
    %1523 = vmatpush1.bf16.msra.mxu0 0
    %1524 = vmatprep.subr.bf16.mxu0 0
    %1525 = vmatpush1.bf16.msra.mxu0 0
    %1526 = vmatprep.subr.bf16.mxu0 0
    %1527 = vmatpush1.bf16.msra.mxu0 0
    %1528 = vmatprep.subr.bf16.mxu0 0
    %1529 = vmatpush1.bf16.msra.mxu0 0
    %1530 = vmatprep.subr.bf16.mxu0 0
    %1531 = vmatpush1.bf16.msra.mxu0 0
    %1532 = vmatprep.subr.bf16.mxu0 0
    %1533 = vmatpush1.bf16.msra.mxu0 0
    %1534 = vmatprep.subr.bf16.mxu0 0
    %1535 = vmatpush1.bf16.msra.mxu0 0
    %1536 = vmatprep.subr.bf16.mxu0 0
    %1537 = vmatpush1.bf16.msra.mxu0 0
    %1538 = vmatprep.subr.bf16.mxu0 0
    %1539 = vmatpush1.bf16.msra.mxu0 0
    %1540 = vmatprep.mubr.bf16.mxu0 0
    %1541 = vmatmul.mubr.bf16.gmra.mrb[0].mxu0 %v1506
    %v1542 = vpop.f32.mrb[0].mxu0
    %v1543 = vadd.f32 0.0, %v1542
    %v1544 = vpop.f32.mrb[0].mxu0
    %v1545 = vadd.f32 0.0, %v1544
    %v1546 = vpop.f32.mrb[0].mxu0
    %v1547 = vpop.f32.mrb[0].mxu0
    %1548 = vdwg.mxu0
    %vm1549 = vcmask 130048
    %1550 = vst.msk [vmem:[#allocation3] sm:$0xff] %vm1549, %v1543
    %1552 = vrot.lane.b32.xlu0 %v1543, 112
    %v1553 = vpop.permute.xlu0 %1552
    %1555 = vst.msk [vmem:[#allocation3 + $0x8] sm:$0xff] %vm1549, %v1553
    %1556 = vrot.lane.b32.xlu0 %v1543, 96
    %v1557 = vpop.permute.xlu0 %1556
    %1559 = vst.msk [vmem:[#allocation3 + $0x10] sm:$0xff] %vm1549, %v1557
    %1560 = vrot.lane.b32.xlu0 %v1543, 80
    %v1561 = vpop.permute.xlu0 %1560
    %1563 = vst.msk [vmem:[#allocation3 + $0x18] sm:$0xff] %vm1549, %v1561
    %1564 = vrot.lane.b32.xlu0 %v1543, 64
    %v1565 = vpop.permute.xlu0 %1564
    %1567 = vst.msk [vmem:[#allocation3 + $0x20] sm:$0xff] %vm1549, %v1565
    %1568 = vrot.lane.b32.xlu0 %v1543, 48
    %v1569 = vpop.permute.xlu0 %1568
    %1571 = vst.msk [vmem:[#allocation3 + $0x28] sm:$0xff] %vm1549, %v1569
    %1572 = vrot.lane.b32.xlu0 %v1543, 32
    %v1573 = vpop.permute.xlu0 %1572
    %1575 = vst.msk [vmem:[#allocation3 + $0x30] sm:$0xff] %vm1549, %v1573
    %1576 = vrot.lane.b32.xlu0 %v1543, 16
    %v1577 = vpop.permute.xlu0 %1576
    %1579 = vst.msk [vmem:[#allocation3 + $0x38] sm:$0xff] %vm1549, %v1577
    %1580 = vst.msk [vmem:[#allocation3 + $0x40] sm:$0xff] %vm1549, %v1545
    %v1581 = vld [vmem:[#allocation4] sm:$0xf]
    %v1582 = vld [vmem:[%s3] sm:$0xff]
    %v1583 = vld [vmem:[%s3 + $0x8] sm:$0xff]
    %v1584 = vld [vmem:[%s3 + $0x10] sm:$0xff]
    %v1585 = vld [vmem:[%s3 + $0x18] sm:$0xff]
    %v1586 = vld [vmem:[%s3 + $0x20] sm:$0xff]
    %v1587 = vld [vmem:[%s3 + $0x28] sm:$0xff]
    %v1588 = vld [vmem:[%s3 + $0x30] sm:$0xff]
    %v1589 = vld [vmem:[%s3 + $0x38] sm:$0xff]
    %v1591 = vunpack.c.l.b16 %v1581
    %v1592 = vpack.c.b16 %v1591, %v1591
    %1593 = vrot.lane.b32.xlu0 %v1592, 64
    %v1594 = vpop.permute.xlu0 %1593
    %v1603 = vunpack.c.l.b16 %v1582
    %v1604 = vunpack.c.h.b16 %v1582
    %v1605 = vunpack.c.l.b16 %v1583
    %v1606 = vunpack.c.h.b16 %v1583
    %v1607 = vunpack.c.l.b16 %v1584
    %v1608 = vunpack.c.h.b16 %v1584
    %v1609 = vunpack.c.l.b16 %v1585
    %v1610 = vunpack.c.h.b16 %v1585
    %v1611 = vunpack.c.l.b16 %v1586
    %v1612 = vunpack.c.h.b16 %v1586
    %v1613 = vunpack.c.l.b16 %v1587
    %v1614 = vunpack.c.h.b16 %v1587
    %v1615 = vunpack.c.l.b16 %v1588
    %v1616 = vunpack.c.h.b16 %v1588
    %v1617 = vunpack.c.l.b16 %v1589
    %v1618 = vunpack.c.h.b16 %v1589
    %v1619 = vpack.c.b16 %v1605, %v1603
    %v1620 = vpack.c.b16 %v1606, %v1604
    %v1621 = vpack.c.b16 %v1609, %v1607
    %v1622 = vpack.c.b16 %v1610, %v1608
    %v1623 = vpack.c.b16 %v1613, %v1611
    %v1624 = vpack.c.b16 %v1614, %v1612
    %v1625 = vpack.c.b16 %v1617, %v1615
    %v1626 = vpack.c.b16 %v1618, %v1616
    %v1636 = vsel %vm1504, %v1594, 0
    %1638 = vmatprep.subr.bf16.mxu0 %v1620
    %1639 = vmatpush1.bf16.msra.mxu0 %v1619
    %1640 = vmatprep.subr.bf16.mxu0 %v1622
    %1641 = vmatpush1.bf16.msra.mxu0 %v1621
    %1642 = vmatprep.subr.bf16.mxu0 %v1624
    %1643 = vmatpush1.bf16.msra.mxu0 %v1623
    %1644 = vmatprep.subr.bf16.mxu0 %v1626
    %1645 = vmatpush1.bf16.msra.mxu0 %v1625
    %1646 = vmatprep.subr.bf16.mxu0 0
    %1647 = vmatpush1.bf16.msra.mxu0 0
    %1648 = vmatprep.subr.bf16.mxu0 0
    %1649 = vmatpush1.bf16.msra.mxu0 0
    %1650 = vmatprep.subr.bf16.mxu0 0
    %1651 = vmatpush1.bf16.msra.mxu0 0
    %1652 = vmatprep.subr.bf16.mxu0 0
    %1653 = vmatpush1.bf16.msra.mxu0 0
    %1654 = vmatprep.subr.bf16.mxu0 0
    %1655 = vmatpush1.bf16.msra.mxu0 0
    %1656 = vmatprep.subr.bf16.mxu0 0
    %1657 = vmatpush1.bf16.msra.mxu0 0
    %1658 = vmatprep.subr.bf16.mxu0 0
    %1659 = vmatpush1.bf16.msra.mxu0 0
    %1660 = vmatprep.subr.bf16.mxu0 0
    %1661 = vmatpush1.bf16.msra.mxu0 0
    %1662 = vmatprep.subr.bf16.mxu0 0
    %1663 = vmatpush1.bf16.msra.mxu0 0
    %1664 = vmatprep.subr.bf16.mxu0 0
    %1665 = vmatpush1.bf16.msra.mxu0 0
    %1666 = vmatprep.subr.bf16.mxu0 0
    %1667 = vmatpush1.bf16.msra.mxu0 0
    %1668 = vmatprep.subr.bf16.mxu0 0
    %1669 = vmatpush1.bf16.msra.mxu0 0
    %1670 = vmatprep.mubr.bf16.mxu0 0
    %1671 = vmatmul.mubr.bf16.gmra.mrb[0].mxu0 %v1636
    %v1672 = vpop.f32.mrb[0].mxu0
    %v1673 = vadd.f32 0.0, %v1672
    %v1674 = vpop.f32.mrb[0].mxu0
    %v1675 = vadd.f32 0.0, %v1674
    %v1676 = vpop.f32.mrb[0].mxu0
    %v1677 = vpop.f32.mrb[0].mxu0
    %1678 = vdwg.mxu0
    %1680 = vrot.lane.b32.xlu0 %v1673, 16
    %v1681 = vpop.permute.xlu0 %1680
    %vm1683 = vcmask 261248
    %1684 = vst.msk [vmem:[#allocation3] sm:$0xff] %vm1683, %v1681
    %1685 = vst.msk [vmem:[#allocation3 + $0x8] sm:$0xff] %vm1683, %v1673
    %1686 = vrot.lane.b32.xlu0 %v1673, 112
    %v1687 = vpop.permute.xlu0 %1686
    %1689 = vst.msk [vmem:[#allocation3 + $0x10] sm:$0xff] %vm1683, %v1687
    %1690 = vrot.lane.b32.xlu0 %v1673, 96
    %v1691 = vpop.permute.xlu0 %1690
    %1693 = vst.msk [vmem:[#allocation3 + $0x18] sm:$0xff] %vm1683, %v1691
    %1694 = vrot.lane.b32.xlu0 %v1673, 80
    %v1695 = vpop.permute.xlu0 %1694
    %1697 = vst.msk [vmem:[#allocation3 + $0x20] sm:$0xff] %vm1683, %v1695
    %1698 = vrot.lane.b32.xlu0 %v1673, 64
    %v1699 = vpop.permute.xlu0 %1698
    %1701 = vst.msk [vmem:[#allocation3 + $0x28] sm:$0xff] %vm1683, %v1699
    %1702 = vrot.lane.b32.xlu0 %v1673, 48
    %v1703 = vpop.permute.xlu0 %1702
    %1705 = vst.msk [vmem:[#allocation3 + $0x30] sm:$0xff] %vm1683, %v1703
    %1706 = vrot.lane.b32.xlu0 %v1673, 32
    %v1707 = vpop.permute.xlu0 %1706
    %1709 = vst.msk [vmem:[#allocation3 + $0x38] sm:$0xff] %vm1683, %v1707
    %1711 = vrot.lane.b32.xlu0 %v1675, 16
    %v1712 = vpop.permute.xlu0 %1711
    %1714 = vst.msk [vmem:[#allocation3 + $0x40] sm:$0xff] %vm1683, %v1712
    %v1715 = vld [vmem:[%s4] sm:$0xff]
    %v1716 = vld [vmem:[%s4 + $0x8] sm:$0xff]
    %v1717 = vld [vmem:[#allocation3] sm:$0xff]
    %v1718 = vld [vmem:[#allocation3 + $0x8] sm:$0xff]
    %v1719 = vld [vmem:[#allocation3 + $0x10] sm:$0xff]
    %v1720 = vld [vmem:[#allocation3 + $0x18] sm:$0xff]
    %v1721 = vld [vmem:[#allocation3 + $0x20] sm:$0xff]
    %v1722 = vld [vmem:[#allocation3 + $0x28] sm:$0xff]
    %v1723 = vld [vmem:[#allocation3 + $0x30] sm:$0xff]
    %v1724 = vld [vmem:[#allocation3 + $0x38] sm:$0xff]
    %v1725 = vld [vmem:[#allocation3 + $0x40] sm:$0xff]
    %v1726 = vld [vmem:[#allocation3 + $0x48] sm:$0x1]
    %vm1727 = vcmask 596992
    %v1729 = vsel %vm1727, %v1715, 0
    %v1732 = vsel %vm1727, %v1716, 0
    %vm1734 = vcmask 1040384
    %v1736 = vsel %vm1734, %v1726, 0
    %1738 = vmatprep.subr.mxu0 0.0
    %1739 = vmatpush1.msra.mxu0 %v1717
    %1740 = vmatprep.subr.mxu0 0.0
    %1741 = vmatpush1.msra.mxu0 %v1718
    %1742 = vmatprep.subr.mxu0 0.0
    %1743 = vmatpush1.msra.mxu0 %v1719
    %1744 = vmatprep.subr.mxu0 0.0
    %1745 = vmatpush1.msra.mxu0 %v1720
    %1746 = vmatprep.subr.mxu0 0.0
    %1747 = vmatpush1.msra.mxu0 %v1721
    %1748 = vmatprep.subr.mxu0 0.0
    %1749 = vmatpush1.msra.mxu0 %v1722
    %1750 = vmatprep.subr.mxu0 0.0
    %1751 = vmatpush1.msra.mxu0 %v1723
    %1752 = vmatprep.subr.mxu0 0.0
    %1753 = vmatpush1.msra.mxu0 %v1724
    %1754 = vmatprep.subr.mxu0 0.0
    %1755 = vmatpush1.msra.mxu0 %v1725
    %1756 = vmatprep.subr.mxu0 0.0
    %1757 = vmatpush1.msra.mxu0 %v1736
    %1758 = vmatprep.subr.mxu0 0.0
    %1759 = vmatpush1.msra.mxu0 0.0
    %1760 = vmatprep.subr.mxu0 0.0
    %1761 = vmatpush1.msra.mxu0 0.0
    %1762 = vmatprep.subr.mxu0 0.0
    %1763 = vmatpush1.msra.mxu0 0.0
    %1764 = vmatprep.subr.mxu0 0.0
    %1765 = vmatpush1.msra.mxu0 0.0
    %1766 = vmatprep.subr.mxu0 0.0
    %1767 = vmatpush1.msra.mxu0 0.0
    %1768 = vmatprep.subr.mxu0 0.0
    %1769 = vmatpush1.msra.mxu0 0.0
    %1770 = vmatprep.subr.mxu0 0.0
    %1771 = vmatpush1.msra.mxu0 0.0
    %1772 = vmatprep.subr.mxu0 0.0
    %1773 = vmatpush1.msra.mxu0 0.0
    %1774 = vmatprep.subr.mxu0 0.0
    %1775 = vmatpush1.msra.mxu0 0.0
    %1776 = vmatprep.subr.mxu0 0.0
    %1777 = vmatpush1.msra.mxu0 0.0
    %1778 = vmatprep.subr.mxu0 0.0
    %1779 = vmatpush1.msra.mxu0 0.0
    %1780 = vmatprep.subr.mxu0 0.0
    %1781 = vmatpush1.msra.mxu0 0.0
    %1782 = vmatprep.subr.mxu0 0.0
    %1783 = vmatpush1.msra.mxu0 0.0
    %1784 = vmatprep.subr.mxu0 0.0
    %1785 = vmatpush1.msra.mxu0 0.0
    %1786 = vmatprep.subr.mxu0 0.0
    %1787 = vmatpush1.msra.mxu0 0.0
    %1788 = vmatprep.subr.mxu0 0.0
    %1789 = vmatpush1.msra.mxu0 0.0
    %1790 = vmatprep.subr.mxu0 0.0
    %1791 = vmatpush1.msra.mxu0 0.0
    %1792 = vmatprep.subr.mxu0 0.0
    %1793 = vmatpush1.msra.mxu0 0.0
    %1794 = vmatprep.subr.mxu0 0.0
    %1795 = vmatpush1.msra.mxu0 0.0
    %1796 = vmatprep.subr.mxu0 0.0
    %1797 = vmatpush1.msra.mxu0 0.0
    %1798 = vmatprep.subr.mxu0 0.0
    %1799 = vmatpush1.msra.mxu0 0.0
    %1800 = vmatprep.subr.mxu0 0.0
    %1801 = vmatpush1.msra.mxu0 0.0
    %1802 = vmatprep.mubr.f32.mxu0 0.0
    %1803 = vmatmul.mubr.f32.gmra.mrb[0].mxu0 %v1729
    %v1804 = vpop.f32.mrb[0].mxu0
    %v1805 = vadd.f32 0.0, %v1804
    %v1806 = vpop.f32.mrb[0].mxu0
    %1807 = vmatprep.mubr.f32.mxu0 0.0
    %1808 = vmatmul.mubr.f32.gmra.mrb[0].mxu0 %v1732
    %v1809 = vpop.f32.mrb[0].mxu0
    %v1810 = vadd.f32 0.0, %v1809
    %v1811 = vpop.f32.mrb[0].mxu0
    %1812 = vdwg.mxu0
    %v1813 = vmax.f32 %v1805, 0.0
    %v1814 = vmax.f32 %v1810, 0.0
    %vm1815 = vcmask 261120
    %1816 = vst.msk [vmem:[#allocation5] sm:$0xff] %vm1815, %v1813
    %1817 = vst.msk [vmem:[#allocation5 + $0x8] sm:$0xff] %vm1815, %v1814
    %1818 = vst.msk [vmem:[#allocation5 + $0x10] sm:$0x1] %vm1453, 1.0
    %v1819 = vld [vmem:[%s5] sm:$0x3]
    %v1820 = vld [vmem:[#allocation5] sm:$0xff]
    %v1821 = vld [vmem:[#allocation5 + $0x8] sm:$0xff]
    %v1822 = vld [vmem:[#allocation5 + $0x10] sm:$0x1]
    %vm1823 = vcmask 138240
    %v1825 = vsel %vm1823, %v1819, 0
    %v1828 = vsel %vm1734, %v1822, 0
    %1830 = vmatprep.subr.mxu0 0.0
    %1831 = vmatpush1.msra.mxu0 %v1820
    %1832 = vmatprep.subr.mxu0 0.0
    %1833 = vmatpush1.msra.mxu0 %v1821
    %1834 = vmatprep.subr.mxu0 0.0
    %1835 = vmatpush1.msra.mxu0 %v1828
    %1836 = vmatprep.subr.mxu0 0.0
    %1837 = vmatpush1.msra.mxu0 0.0
    %1838 = vmatprep.subr.mxu0 0.0
    %1839 = vmatpush1.msra.mxu0 0.0
    %1840 = vmatprep.subr.mxu0 0.0
    %1841 = vmatpush1.msra.mxu0 0.0
    %1842 = vmatprep.subr.mxu0 0.0
    %1843 = vmatpush1.msra.mxu0 0.0
    %1844 = vmatprep.subr.mxu0 0.0
    %1845 = vmatpush1.msra.mxu0 0.0
    %1846 = vmatprep.subr.mxu0 0.0
    %1847 = vmatpush1.msra.mxu0 0.0
    %1848 = vmatprep.subr.mxu0 0.0
    %1849 = vmatpush1.msra.mxu0 0.0
    %1850 = vmatprep.subr.mxu0 0.0
    %1851 = vmatpush1.msra.mxu0 0.0
    %1852 = vmatprep.subr.mxu0 0.0
    %1853 = vmatpush1.msra.mxu0 0.0
    %1854 = vmatprep.subr.mxu0 0.0
    %1855 = vmatpush1.msra.mxu0 0.0
    %1856 = vmatprep.subr.mxu0 0.0
    %1857 = vmatpush1.msra.mxu0 0.0
    %1858 = vmatprep.subr.mxu0 0.0
    %1859 = vmatpush1.msra.mxu0 0.0
    %1860 = vmatprep.subr.mxu0 0.0
    %1861 = vmatpush1.msra.mxu0 0.0
    %1862 = vmatprep.subr.mxu0 0.0
    %1863 = vmatpush1.msra.mxu0 0.0
    %1864 = vmatprep.subr.mxu0 0.0
    %1865 = vmatpush1.msra.mxu0 0.0
    %1866 = vmatprep.subr.mxu0 0.0
    %1867 = vmatpush1.msra.mxu0 0.0
    %1868 = vmatprep.subr.mxu0 0.0
    %1869 = vmatpush1.msra.mxu0 0.0
    %1870 = vmatprep.subr.mxu0 0.0
    %1871 = vmatpush1.msra.mxu0 0.0
    %1872 = vmatprep.subr.mxu0 0.0
    %1873 = vmatpush1.msra.mxu0 0.0
    %1874 = vmatprep.subr.mxu0 0.0
    %1875 = vmatpush1.msra.mxu0 0.0
    %1876 = vmatprep.subr.mxu0 0.0
    %1877 = vmatpush1.msra.mxu0 0.0
    %1878 = vmatprep.subr.mxu0 0.0
    %1879 = vmatpush1.msra.mxu0 0.0
    %1880 = vmatprep.subr.mxu0 0.0
    %1881 = vmatpush1.msra.mxu0 0.0
    %1882 = vmatprep.subr.mxu0 0.0
    %1883 = vmatpush1.msra.mxu0 0.0
    %1884 = vmatprep.subr.mxu0 0.0
    %1885 = vmatpush1.msra.mxu0 0.0
    %1886 = vmatprep.subr.mxu0 0.0
    %1887 = vmatpush1.msra.mxu0 0.0
    %1888 = vmatprep.subr.mxu0 0.0
    %1889 = vmatpush1.msra.mxu0 0.0
    %1890 = vmatprep.subr.mxu0 0.0
    %1891 = vmatpush1.msra.mxu0 0.0
    %1892 = vmatprep.subr.mxu0 0.0
    %1893 = vmatpush1.msra.mxu0 0.0
    %1894 = vmatprep.mubr.f32.mxu0 0.0
    %1895 = vmatmul.mubr.f32.gmra.mrb[0].mxu0 %v1825
    %v1896 = vpop.f32.mrb[0].mxu0
    %v1897 = vadd.f32 0.0, %v1896
    %v1898 = vpop.f32.mrb[0].mxu0
    %1899 = vdwg.mxu0
    %v1900 = vld [vmem:[%s6] sm:$0xff]
    %v1901 = vld [vmem:[%s6 + $0x8] sm:$0xff]
    %v1902 = vld [vmem:[%s6 + $0x10] sm:$0xff]
    %v1903 = vld [vmem:[%s6 + $0x18] sm:$0xff]
    %v1905 = vsel %vm1549, %v1897, 0
    %1907 = vmatprep.subr.mxu0 %v1901
    %1908 = vmatpush1.msra.mxu0 %v1900
    %1909 = vmatprep.subr.mxu0 %v1903
    %1910 = vmatpush1.msra.mxu0 %v1902
    %1911 = vmatprep.subr.mxu0 0.0
    %1912 = vmatpush1.msra.mxu0 0.0
    %1913 = vmatprep.subr.mxu0 0.0
    %1914 = vmatpush1.msra.mxu0 0.0
    %1915 = vmatprep.subr.mxu0 0.0
    %1916 = vmatpush1.msra.mxu0 0.0
    %1917 = vmatprep.subr.mxu0 0.0
    %1918 = vmatpush1.msra.mxu0 0.0
    %1919 = vmatprep.subr.mxu0 0.0
    %1920 = vmatpush1.msra.mxu0 0.0
    %1921 = vmatprep.subr.mxu0 0.0
    %1922 = vmatpush1.msra.mxu0 0.0
    %1923 = vmatprep.subr.mxu0 0.0
    %1924 = vmatpush1.msra.mxu0 0.0
    %1925 = vmatprep.subr.mxu0 0.0
    %1926 = vmatpush1.msra.mxu0 0.0
    %1927 = vmatprep.subr.mxu0 0.0
    %1928 = vmatpush1.msra.mxu0 0.0
    %1929 = vmatprep.subr.mxu0 0.0
    %1930 = vmatpush1.msra.mxu0 0.0
    %1931 = vmatprep.subr.mxu0 0.0
    %1932 = vmatpush1.msra.mxu0 0.0
    %1933 = vmatprep.subr.mxu0 0.0
    %1934 = vmatpush1.msra.mxu0 0.0
    %1935 = vmatprep.subr.mxu0 0.0
    %1936 = vmatpush1.msra.mxu0 0.0
    %1937 = vmatprep.subr.mxu0 0.0
    %1938 = vmatpush1.msra.mxu0 0.0
    %1939 = vmatprep.subr.mxu0 0.0
    %1940 = vmatpush1.msra.mxu0 0.0
    %1941 = vmatprep.subr.mxu0 0.0
    %1942 = vmatpush1.msra.mxu0 0.0
    %1943 = vmatprep.subr.mxu0 0.0
    %1944 = vmatpush1.msra.mxu0 0.0
    %1945 = vmatprep.subr.mxu0 0.0
    %1946 = vmatpush1.msra.mxu0 0.0
    %1947 = vmatprep.subr.mxu0 0.0
    %1948 = vmatpush1.msra.mxu0 0.0
    %1949 = vmatprep.subr.mxu0 0.0
    %1950 = vmatpush1.msra.mxu0 0.0
    %1951 = vmatprep.subr.mxu0 0.0
    %1952 = vmatpush1.msra.mxu0 0.0
    %1953 = vmatprep.subr.mxu0 0.0
    %1954 = vmatpush1.msra.mxu0 0.0
    %1955 = vmatprep.subr.mxu0 0.0
    %1956 = vmatpush1.msra.mxu0 0.0
    %1957 = vmatprep.subr.mxu0 0.0
    %1958 = vmatpush1.msra.mxu0 0.0
    %1959 = vmatprep.subr.mxu0 0.0
    %1960 = vmatpush1.msra.mxu0 0.0
    %1961 = vmatprep.subr.mxu0 0.0
    %1962 = vmatpush1.msra.mxu0 0.0
    %1963 = vmatprep.subr.mxu0 0.0
    %1964 = vmatpush1.msra.mxu0 0.0
    %1965 = vmatprep.subr.mxu0 0.0
    %1966 = vmatpush1.msra.mxu0 0.0
    %1967 = vmatprep.subr.mxu0 0.0
    %1968 = vmatpush1.msra.mxu0 0.0
    %1969 = vmatprep.subr.mxu0 0.0
    %1970 = vmatpush1.msra.mxu0 0.0
    %1971 = vmatprep.mubr.f32.mxu0 0.0
    %1972 = vmatmul.mubr.f32.gmra.mrb[0].mxu0 %v1905
    %v1973 = vpop.f32.mrb[0].mxu0
    %v1974 = vadd.f32 0.0, %v1973
    %v1975 = vpop.f32.mrb[0].mxu0
    %v1976 = vadd.f32 0.0, %v1975
    %1977 = vdwg.mxu0
    %v1980 = vcombine.low %v1974, %v1976
    %v1982 = vunpack.c.l.s4 1983009808
    %v1983 = vunpack.c.0.s8 %v1982
    %v1984 = vlaneseq
    %v1985 = vshrl.u32 %v1984, 7
    %v1986 = vsub.s32 %v1983, %v1985
    %v1987 = vrot.slane %v1980, %v1986
    %1989 = vst [vmem:[#allocation6] sm:$0xf] %v1987
    %v1990 = vld [vmem:[%s5] sm:$0x3]
    %v1991 = vld [vmem:[#allocation5] sm:$0xff]
    %v1992 = vld [vmem:[#allocation5 + $0x8] sm:$0xff]
    %v1993 = vld [vmem:[#allocation5 + $0x10] sm:$0x1]
    %1997 = vrot.lane.b32.xlu0 %v1991, 112
    %v1998 = vpop.permute.xlu0 %1997
    %1999 = vrot.lane.b32.xlu0 %v1992, 112
    %v2000 = vpop.permute.xlu0 %1999
    %2001 = vrot.lane.b32.xlu0 %v1993, 112
    %v2002 = vpop.permute.xlu0 %2001
    %v2006 = vsel %vm1823, %v1990, 0
    %v2008 = vsel %vm1734, %v2002, 0
    %2010 = vmatprep.subr.mxu0 0.0
    %2011 = vmatpush1.msra.mxu0 %v1998
    %2012 = vmatprep.subr.mxu0 0.0
    %2013 = vmatpush1.msra.mxu0 %v2000
    %2014 = vmatprep.subr.mxu0 0.0
    %2015 = vmatpush1.msra.mxu0 %v2008
    %2016 = vmatprep.subr.mxu0 0.0
    %2017 = vmatpush1.msra.mxu0 0.0
    %2018 = vmatprep.subr.mxu0 0.0
    %2019 = vmatpush1.msra.mxu0 0.0
    %2020 = vmatprep.subr.mxu0 0.0
    %2021 = vmatpush1.msra.mxu0 0.0
    %2022 = vmatprep.subr.mxu0 0.0
    %2023 = vmatpush1.msra.mxu0 0.0
    %2024 = vmatprep.subr.mxu0 0.0
    %2025 = vmatpush1.msra.mxu0 0.0
    %2026 = vmatprep.subr.mxu0 0.0
    %2027 = vmatpush1.msra.mxu0 0.0
    %2028 = vmatprep.subr.mxu0 0.0
    %2029 = vmatpush1.msra.mxu0 0.0
    %2030 = vmatprep.subr.mxu0 0.0
    %2031 = vmatpush1.msra.mxu0 0.0
    %2032 = vmatprep.subr.mxu0 0.0
    %2033 = vmatpush1.msra.mxu0 0.0
    %2034 = vmatprep.subr.mxu0 0.0
    %2035 = vmatpush1.msra.mxu0 0.0
    %2036 = vmatprep.subr.mxu0 0.0
    %2037 = vmatpush1.msra.mxu0 0.0
    %2038 = vmatprep.subr.mxu0 0.0
    %2039 = vmatpush1.msra.mxu0 0.0
    %2040 = vmatprep.subr.mxu0 0.0
    %2041 = vmatpush1.msra.mxu0 0.0
    %2042 = vmatprep.subr.mxu0 0.0
    %2043 = vmatpush1.msra.mxu0 0.0
    %2044 = vmatprep.subr.mxu0 0.0
    %2045 = vmatpush1.msra.mxu0 0.0
    %2046 = vmatprep.subr.mxu0 0.0
    %2047 = vmatpush1.msra.mxu0 0.0
    %2048 = vmatprep.subr.mxu0 0.0
    %2049 = vmatpush1.msra.mxu0 0.0
    %2050 = vmatprep.subr.mxu0 0.0
    %2051 = vmatpush1.msra.mxu0 0.0
    %2052 = vmatprep.subr.mxu0 0.0
    %2053 = vmatpush1.msra.mxu0 0.0
    %2054 = vmatprep.subr.mxu0 0.0
    %2055 = vmatpush1.msra.mxu0 0.0
    %2056 = vmatprep.subr.mxu0 0.0
    %2057 = vmatpush1.msra.mxu0 0.0
    %2058 = vmatprep.subr.mxu0 0.0
    %2059 = vmatpush1.msra.mxu0 0.0
    %2060 = vmatprep.subr.mxu0 0.0
    %2061 = vmatpush1.msra.mxu0 0.0
    %2062 = vmatprep.subr.mxu0 0.0
    %2063 = vmatpush1.msra.mxu0 0.0
    %2064 = vmatprep.subr.mxu0 0.0
    %2065 = vmatpush1.msra.mxu0 0.0
    %2066 = vmatprep.subr.mxu0 0.0
    %2067 = vmatpush1.msra.mxu0 0.0
    %2068 = vmatprep.subr.mxu0 0.0
    %2069 = vmatpush1.msra.mxu0 0.0
    %2070 = vmatprep.subr.mxu0 0.0
    %2071 = vmatpush1.msra.mxu0 0.0
    %2072 = vmatprep.subr.mxu0 0.0
    %2073 = vmatpush1.msra.mxu0 0.0
    %2074 = vmatprep.mubr.f32.mxu0 0.0
    %2075 = vmatmul.mubr.f32.gmra.mrb[0].mxu0 %v2006
    %v2076 = vpop.f32.mrb[0].mxu0
    %v2077 = vadd.f32 0.0, %v2076
    %v2078 = vpop.f32.mrb[0].mxu0
    %2079 = vdwg.mxu0
    %v2080 = vld [vmem:[%s6] sm:$0xff]
    %v2081 = vld [vmem:[%s6 + $0x8] sm:$0xff]
    %v2082 = vld [vmem:[%s6 + $0x10] sm:$0xff]
    %v2083 = vld [vmem:[%s6 + $0x18] sm:$0xff]
    %v2085 = vsel %vm1549, %v2077, 0
    %2087 = vmatprep.subr.mxu0 %v2081
    %2088 = vmatpush1.msra.mxu0 %v2080
    %2089 = vmatprep.subr.mxu0 %v2083
    %2090 = vmatpush1.msra.mxu0 %v2082
    %2091 = vmatprep.subr.mxu0 0.0
    %2092 = vmatpush1.msra.mxu0 0.0
    %2093 = vmatprep.subr.mxu0 0.0
    %2094 = vmatpush1.msra.mxu0 0.0
    %2095 = vmatprep.subr.mxu0 0.0
    %2096 = vmatpush1.msra.mxu0 0.0
    %2097 = vmatprep.subr.mxu0 0.0
    %2098 = vmatpush1.msra.mxu0 0.0
    %2099 = vmatprep.subr.mxu0 0.0
    %2100 = vmatpush1.msra.mxu0 0.0
    %2101 = vmatprep.subr.mxu0 0.0
    %2102 = vmatpush1.msra.mxu0 0.0
    %2103 = vmatprep.subr.mxu0 0.0
    %2104 = vmatpush1.msra.mxu0 0.0
    %2105 = vmatprep.subr.mxu0 0.0
    %2106 = vmatpush1.msra.mxu0 0.0
    %2107 = vmatprep.subr.mxu0 0.0
    %2108 = vmatpush1.msra.mxu0 0.0
    %2109 = vmatprep.subr.mxu0 0.0
    %2110 = vmatpush1.msra.mxu0 0.0
    %2111 = vmatprep.subr.mxu0 0.0
    %2112 = vmatpush1.msra.mxu0 0.0
    %2113 = vmatprep.subr.mxu0 0.0
    %2114 = vmatpush1.msra.mxu0 0.0
    %2115 = vmatprep.subr.mxu0 0.0
    %2116 = vmatpush1.msra.mxu0 0.0
    %2117 = vmatprep.subr.mxu0 0.0
    %2118 = vmatpush1.msra.mxu0 0.0
    %2119 = vmatprep.subr.mxu0 0.0
    %2120 = vmatpush1.msra.mxu0 0.0
    %2121 = vmatprep.subr.mxu0 0.0
    %2122 = vmatpush1.msra.mxu0 0.0
    %2123 = vmatprep.subr.mxu0 0.0
    %2124 = vmatpush1.msra.mxu0 0.0
    %2125 = vmatprep.subr.mxu0 0.0
    %2126 = vmatpush1.msra.mxu0 0.0
    %2127 = vmatprep.subr.mxu0 0.0
    %2128 = vmatpush1.msra.mxu0 0.0
    %2129 = vmatprep.subr.mxu0 0.0
    %2130 = vmatpush1.msra.mxu0 0.0
    %2131 = vmatprep.subr.mxu0 0.0
    %2132 = vmatpush1.msra.mxu0 0.0
    %2133 = vmatprep.subr.mxu0 0.0
    %2134 = vmatpush1.msra.mxu0 0.0
    %2135 = vmatprep.subr.mxu0 0.0
    %2136 = vmatpush1.msra.mxu0 0.0
    %2137 = vmatprep.subr.mxu0 0.0
    %2138 = vmatpush1.msra.mxu0 0.0
    %2139 = vmatprep.subr.mxu0 0.0
    %2140 = vmatpush1.msra.mxu0 0.0
    %2141 = vmatprep.subr.mxu0 0.0
    %2142 = vmatpush1.msra.mxu0 0.0
    %2143 = vmatprep.subr.mxu0 0.0
    %2144 = vmatpush1.msra.mxu0 0.0
    %2145 = vmatprep.subr.mxu0 0.0
    %2146 = vmatpush1.msra.mxu0 0.0
    %2147 = vmatprep.subr.mxu0 0.0
    %2148 = vmatpush1.msra.mxu0 0.0
    %2149 = vmatprep.subr.mxu0 0.0
    %2150 = vmatpush1.msra.mxu0 0.0
    %2151 = vmatprep.mubr.f32.mxu0 0.0
    %2152 = vmatmul.mubr.f32.gmra.mrb[0].mxu0 %v2085
    %v2153 = vpop.f32.mrb[0].mxu0
    %v2154 = vadd.f32 0.0, %v2153
    %v2155 = vpop.f32.mrb[0].mxu0
    %v2156 = vadd.f32 0.0, %v2155
    %2157 = vdwg.mxu0
    %v2160 = vcombine.low %v2154, %v2156
    %v2162 = vunpack.c.l.s4 1983009808
    %v2163 = vunpack.c.0.s8 %v2162
    %v2164 = vlaneseq
    %v2165 = vshrl.u32 %v2164, 7
    %v2166 = vsub.s32 %v2163, %v2165
    %v2167 = vrot.slane %v2160, %v2166
    %s2169 = scalar_lea.vmem [#allocation6], 4
    %2170 = vst [vmem:[%s2169] sm:$0xf] %v2167
    // Predicated region
    $region30: #{tpu_custom_call.1} parent=1 // pred_check
      _
    $region31: #{tpu_custom_call.1} parent=1 // pred_check_branch
      %2172 = sbr.rel (0) target = $region33
    $region32: #{tpu_custom_call.1} parent=1 // pred_region
      %s2174 = ssub.s32 128, 128
      %2175 = vsyncadd [#allocation7], %s2174
      %s2176 = sshll.u32 [#allocation6], 4
      %s2177 = int_to_ptr.vmem [resolvable:$true] %s2176
      %2182 = dma.vmem_to_hbm [thread:$0]  %s2177, 128, %s7, [#allocation7], 64, 64, 4
    $region33: #{tpu_custom_call.1} parent=1 // pred_fallthru
      _
    // Predicated region
    $region34: #{tpu_custom_call.1} parent=1 // pred_check
      _
    $region35: #{tpu_custom_call.1} parent=1 // pred_check_branch
      %2184 = sbr.rel (0) target = $region37
    $region36: #{tpu_custom_call.1} parent=1 // pred_region
      %2185 = dma.done [#allocation7], 128
    $region37: #{tpu_custom_call.1} parent=1 // pred_fallthru
      _
    %2186 = vsyncpa [#allocation7], 1

</llo_original>
